<compile_context>
chip_gen: v7x
topology: tpu7x:2x2x1
jax: 0.10.0
libtpu: 0.0.40
codegen_flags: <defaults>
</compile_context>

<pallas_src>
import jax
import jax.numpy as jnp
from jax.experimental import pallas as pl
from jax.experimental.pallas import tpu as pltpu


# ---------------------------------------------------------------------------
# Kernel 1: PointNetfeat — per-point MLP (1x1 convs + BN folded) + max over points
# ---------------------------------------------------------------------------
def _pointnet_kernel(x_ref, w1_ref, b1_ref, w2_ref, b2_ref, w3_ref, b3_ref,
                     out_ref, acc_ref):
    # x_ref: (1, TN, 8) bf16 ; weights bf16 with eval-mode BN folded, biases f32.
    x = x_ref[0]                                                     # (TN, 8)
    h = jnp.dot(x, w1_ref[...], preferred_element_type=jnp.float32) + b1_ref[...]
    h = jnp.maximum(h, 0.0).astype(jnp.bfloat16)                     # (TN, 64)
    h = jnp.dot(h, w2_ref[...], preferred_element_type=jnp.float32) + b2_ref[...]
    h = jnp.maximum(h, 0.0).astype(jnp.bfloat16)                     # (TN, 128)
    h = jnp.dot(h, w3_ref[...], preferred_element_type=jnp.float32) + b3_ref[...]
    # bn3 has no ReLU (matches PointNetfeat).                        # (TN, 1024) f32

    # Two-stage max: VPU fold over sublane groups into an (8, 1024) accumulator;
    # the single 8->1 cross-sublane (XLU) reduce only runs on the last step.
    part = jnp.max(h.reshape(-1, 8, 1024), axis=0)                   # (8, 1024)

    @pl.when(pl.program_id(1) == 0)
    def _():
        acc_ref[...] = jnp.full_like(acc_ref[...], -jnp.inf)

    acc_ref[...] = jnp.maximum(acc_ref[...], part)

    @pl.when(pl.program_id(1) == pl.num_programs(1) - 1)
    def _():
        out_ref[0] = jnp.max(acc_ref[...], axis=0, keepdims=True)    # (1, 1024)


def pointnet_features(x_bnc, w1, b1, w2, b2, w3, b3, *, tile_n=1024):
    B, N, Cpad = x_bnc.shape
    tn = N if N <= tile_n else tile_n
    assert N % tn == 0 and tn % 8 == 0
    out = pl.pallas_call(
        _pointnet_kernel,
        out_shape=jax.ShapeDtypeStruct((B, 1, 1024), jnp.float32),
        grid_spec=pltpu.PrefetchScalarGridSpec(
            num_scalar_prefetch=0,
            grid=(B, N // tn),
            in_specs=[
                pl.BlockSpec((1, tn, Cpad), lambda b, n: (b, n, 0)),
                pl.BlockSpec((Cpad, 64), lambda b, n: (0, 0)),
                pl.BlockSpec((1, 64), lambda b, n: (0, 0)),
                pl.BlockSpec((64, 128), lambda b, n: (0, 0)),
                pl.BlockSpec((1, 128), lambda b, n: (0, 0)),
                pl.BlockSpec((128, 1024), lambda b, n: (0, 0)),
                pl.BlockSpec((1, 1024), lambda b, n: (0, 0)),
            ],
            out_specs=pl.BlockSpec((1, 1, 1024), lambda b, n: (b, 0, 0)),
            scratch_shapes=[pltpu.VMEM((8, 1024), jnp.float32)],
        ),
        compiler_params=pltpu.CompilerParams(
            dimension_semantics=("parallel", "arbitrary"),
            vmem_limit_bytes=32 << 20),
    )(x_bnc, w1, b1, w2, b2, w3, b3)
    return out[:, 0, :]                                              # (B, 1024)


# ---------------------------------------------------------------------------
# Kernel 2: encoder tail (Linear + BN + ReLU) + NormalDecoder MLP
#   grid = (output-column blocks [parallel], wd2-col / wd3-row blocks [arbitrary])
#   -> wd2/wd3 weight streaming is pipelined and can be split across TCs.
# ---------------------------------------------------------------------------
def _mlp_decoder_kernel(f_ref, we_ref, be_ref, wd1_ref, bd1_ref,
                        wd2_ref, bd2_ref, wd3_ref, bd3_ref, out_ref,
                        h1_ref, acc_ref):
    k = pl.program_id(1)

    @pl.when(k == 0)
    def _():
        f = f_ref[...].astype(jnp.bfloat16)                          # (B, 1024)
        z = jnp.dot(f, we_ref[...], preferred_element_type=jnp.float32) + be_ref[...]
        z = jnp.maximum(z, 0.0).astype(jnp.bfloat16)                 # (B, bneck)
        h1 = jnp.dot(z, wd1_ref[...], preferred_element_type=jnp.float32) + bd1_ref[...]
        h1_ref[...] = jnp.maximum(h1, 0.0)                           # (B, 1024) f32
        acc_ref[...] = jnp.zeros_like(acc_ref[...])

    h1 = h1_ref[...].astype(jnp.bfloat16)                            # (B, 1024)
    h2 = jnp.dot(h1, wd2_ref[...], preferred_element_type=jnp.float32) + bd2_ref[...]
    h2 = jnp.maximum(h2, 0.0).astype(jnp.bfloat16)                   # (B, TK)
    acc_ref[...] += jnp.dot(h2, wd3_ref[...], preferred_element_type=jnp.float32)

    @pl.when(k == pl.num_programs(1) - 1)
    def _():
        out_ref[...] = acc_ref[...] + bd3_ref[...]


def decode_features(feat, we, be, wd1, bd1, wd2, bd2, wd3, bd3,
                    *, tile_k=256, tile_out=512):
    B, F = feat.shape
    bneck = we.shape[1]
    hid = wd1.shape[1]           # = wd2.shape[0]
    kdim, dout_p = wd3.shape     # kdim = wd2.shape[1]
    assert dout_p % 128 == 0

    dn = dout_p                  # output-column tile (lane-dense, parallel axis)
    for cand in (tile_out, 384, 256, 128):
        if dout_p % cand == 0:
            dn = cand
            break
    tk = tile_k if kdim % tile_k == 0 else kdim

    return pl.pallas_call(
        _mlp_decoder_kernel,
        out_shape=jax.ShapeDtypeStruct((B, dout_p), jnp.float32),
        grid_spec=pltpu.PrefetchScalarGridSpec(
            num_scalar_prefetch=0,
            grid=(dout_p // dn, kdim // tk),
            in_specs=[
                pl.BlockSpec((B, F), lambda i, k: (0, 0)),
                pl.BlockSpec((F, bneck), lambda i, k: (0, 0)),
                pl.BlockSpec((1, bneck), lambda i, k: (0, 0)),
                pl.BlockSpec((bneck, hid), lambda i, k: (0, 0)),
                pl.BlockSpec((1, hid), lambda i, k: (0, 0)),
                pl.BlockSpec((hid, tk), lambda i, k: (0, k)),
                pl.BlockSpec((1, tk), lambda i, k: (0, k)),
                pl.BlockSpec((tk, dn), lambda i, k: (k, i)),
                pl.BlockSpec((1, dn), lambda i, k: (0, i)),
            ],
            out_specs=pl.BlockSpec((B, dn), lambda i, k: (0, i)),
            scratch_shapes=[pltpu.VMEM((B, hid), jnp.float32),
                            pltpu.VMEM((B, dn), jnp.float32)],
        ),
        compiler_params=pltpu.CompilerParams(
            dimension_semantics=("parallel", "arbitrary"),
            vmem_limit_bytes=16 << 20),
    )(feat, we, be, wd1, bd1, wd2, bd2, wd3, bd3)


# ---------------------------------------------------------------------------
# Parameters (deterministic, synthetic) and glue
# ---------------------------------------------------------------------------
BN_EPS = 1e-5


def make_params(key, bottleneck, npoints_out):
    ks = jax.random.split(key, 12)

    def lin(k, cin, cout, scale=0.05):
        kw, kb = jax.random.split(k)
        return (scale * jax.random.normal(kw, (cin, cout), jnp.float32),
                scale * jax.random.normal(kb, (cout,), jnp.float32))

    def bn(k, c):
        kg, kb, km, kv = jax.random.split(k, 4)
        gamma = 1.0 + 0.1 * jax.random.normal(kg, (c,), jnp.float32)
        beta = 0.1 * jax.random.normal(kb, (c,), jnp.float32)
        mean = 0.1 * jax.random.normal(km, (c,), jnp.float32)
        var = 1.0 + 0.1 * jax.random.uniform(kv, (c,), jnp.float32)
        return gamma, beta, mean, var

    p = {}
    p['w1'], p['b1'] = lin(ks[0], 3, 64);        p['bn1'] = bn(ks[1], 64)
    p['w2'], p['b2'] = lin(ks[2], 64, 128);      p['bn2'] = bn(ks[3], 128)
    p['w3'], p['b3'] = lin(ks[4], 128, 1024);    p['bn3'] = bn(ks[5], 1024)
    p['we'], p['be'] = lin(ks[6], 1024, bottleneck)
    p['bne'] = bn(ks[7], bottleneck)
    p['wd1'], p['bd1'] = lin(ks[8], bottleneck, 1024)
    p['wd2'], p['bd2'] = lin(ks[9], 1024, 1024)
    p['wd3'], p['bd3'] = lin(ks[10], 1024, npoints_out * 3)
    return p


def fold_bn(w, b, bn_params, eps=BN_EPS):
    gamma, beta, mean, var = bn_params
    s = gamma / jnp.sqrt(var + eps)
    return w * s[None, :], (b - mean) * s + beta


def prepare_params(params):
    """Fold eval-mode BN into weights, cast matmul weights to bf16, biases f32."""
    w1, b1 = fold_bn(params['w1'], params['b1'], params['bn1'])
    w1 = jnp.pad(w1, ((0, 5), (0, 0)))          # 3 -> 8 input channels (zeros)
    w2, b2 = fold_bn(params['w2'], params['b2'], params['bn2'])
    w3, b3 = fold_bn(params['w3'], params['b3'], params['bn3'])
    we, be = fold_bn(params['we'], params['be'], params['bne'])
    bf = lambda w: w.astype(jnp.bfloat16)
    return dict(
        w1=bf(w1), b1=b1[None], w2=bf(w2), b2=b2[None], w3=bf(w3), b3=b3[None],
        we=bf(we), be=be[None],
        wd1=bf(params['wd1']), bd1=params['bd1'][None],
        wd2=bf(params['wd2']), bd2=params['bd2'][None],
        wd3=bf(params['wd3']), bd3=params['bd3'][None],
    )


def autoencoder_forward(prep, x_ncl, *, npoints_out):
    B = x_ncl.shape[0]
    # NCL -> (B, N, 3), pad channels 3 -> 8 (zeros), bf16 matmul operand.
    x = jnp.transpose(x_ncl, (0, 2, 1))
    x = jnp.pad(x, ((0, 0), (0, 0), (0, 5))).astype(jnp.bfloat16)

    feat = pointnet_features(x, prep['w1'], prep['b1'], prep['w2'], prep['b2'],
                             prep['w3'], prep['b3'])

    dout = npoints_out * 3
    dout_p = ((dout + 127) // 128) * 128        # lane-dense output width
    wd3, bd3 = prep['wd3'], prep['bd3']
    if dout_p != dout:
        wd3 = jnp.pad(wd3, ((0, 0), (0, dout_p - dout)))
        bd3 = jnp.pad(bd3, ((0, 0), (0, dout_p - dout)))

    out = decode_features(feat, prep['we'], prep['be'],
                          prep['wd1'], prep['bd1'],
                          prep['wd2'], prep['bd2'],
                          wd3, bd3)
    return out[:, :dout].reshape(B, npoints_out, 3)


def reference_forward(prep, x_ncl, *, npoints_out):
    """Pure-JAX reference with the same precision policy (bf16 operands, f32 acc)."""
    x = jnp.transpose(x_ncl, (0, 2, 1))
    x = jnp.pad(x, ((0, 0), (0, 0), (0, 5))).astype(jnp.bfloat16)

    def lin(a, w, b):
        return jnp.matmul(a.astype(jnp.bfloat16), w,
                          preferred_element_type=jnp.float32) + b

    h = jax.nn.relu(lin(x, prep['w1'], prep['b1']))
    h = jax.nn.relu(lin(h, prep['w2'], prep['b2']))
    h = lin(h, prep['w3'], prep['b3'])
    f = jnp.max(h, axis=1)                                           # (B, 1024)
    z = jax.nn.relu(lin(f, prep['we'], prep['be']))
    h = jax.nn.relu(lin(z, prep['wd1'], prep['bd1']))
    h = jax.nn.relu(lin(h, prep['wd2'], prep['bd2']))
    o = lin(h, prep['wd3'], prep['bd3'])
    return o.reshape(-1, npoints_out, 3)


if __name__ == "__main__":
    B, N_IN, BOTTLENECK, N_OUT = 2, 512, 256, 128
    key = jax.random.PRNGKey(0)
    kx, kp = jax.random.split(key)
    x = jax.random.normal(kx, (B, 3, N_IN), jnp.float32)   # PyTorch NCL input
    params = make_params(kp, BOTTLENECK, N_OUT)
    prep = prepare_params(params)

    out = autoencoder_forward(prep, x, npoints_out=N_OUT)
    out = jax.block_until_ready(out)
    assert out.shape == (B, N_OUT, 3), out.shape

    ref = reference_forward(prep, x, npoints_out=N_OUT)
    if not jnp.allclose(out, ref, rtol=5e-3, atol=5e-3):
        raise AssertionError(
            f"mismatch: max abs diff = {jnp.max(jnp.abs(out - ref))}")
    print("KERNEL_OK")
</pallas_src>

<mosaic_0001>
module attributes {stable_mosaic.version = 11 : i64} {
  func.func @_pointnet_kernel(%arg0: i32, %arg1: i32, %arg2: memref<1x512x8xbf16, #tpu.memory_space<vmem>>, %arg3: memref<8x64xbf16, #tpu.memory_space<vmem>>, %arg4: memref<1x64xf32, #tpu.memory_space<vmem>>, %arg5: memref<64x128xbf16, #tpu.memory_space<vmem>>, %arg6: memref<1x128xf32, #tpu.memory_space<vmem>>, %arg7: memref<128x1024xbf16, #tpu.memory_space<vmem>>, %arg8: memref<1x1024xf32, #tpu.memory_space<vmem>>, %arg9: memref<1x1x1024xf32, #tpu.memory_space<vmem>>, %arg10: memref<8x1024xf32, #tpu.memory_space<vmem>>) attributes {dimension_semantics = [#tpu.dimension_semantics<parallel>, #tpu.dimension_semantics<arbitrary>], iteration_bounds = array<i64: 2, 1>, scalar_prefetch = 0 : i64, scratch_operands = 1 : i64, tpu.core_type = #tpu.core_type<tc>, window_params = [{transform_indices = @transform_0, window_bounds = array<i64: 1, 512, 8>}, {pipeline_mode = #tpu.pipeline_mode<synchronous>, transform_indices = @transform_1, window_bounds = array<i64: 8, 64>}, {pipeline_mode = #tpu.pipeline_mode<synchronous>, transform_indices = @transform_2, window_bounds = array<i64: 1, 64>}, {pipeline_mode = #tpu.pipeline_mode<synchronous>, transform_indices = @transform_3, window_bounds = array<i64: 64, 128>}, {pipeline_mode = #tpu.pipeline_mode<synchronous>, transform_indices = @transform_4, window_bounds = array<i64: 1, 128>}, {pipeline_mode = #tpu.pipeline_mode<synchronous>, transform_indices = @transform_5, window_bounds = array<i64: 128, 1024>}, {pipeline_mode = #tpu.pipeline_mode<synchronous>, transform_indices = @transform_6, window_bounds = array<i64: 1, 1024>}, {transform_indices = @transform_7, window_bounds = array<i64: 1, 1, 1024>}]} {
    %c0 = arith.constant 0 : index
    %c0_0 = arith.constant 0 : index
    %c0_1 = arith.constant 0 : index
    %0 = vector.load %arg2[%c0, %c0_0, %c0_1] : memref<1x512x8xbf16, #tpu.memory_space<vmem>>, vector<1x512x8xbf16>
    %1 = vector.shape_cast %0 : vector<1x512x8xbf16> to vector<512x8xbf16>
    %c0_2 = arith.constant 0 : index
    %c0_3 = arith.constant 0 : index
    %2 = vector.load %arg3[%c0_2, %c0_3] : memref<8x64xbf16, #tpu.memory_space<vmem>>, vector<8x64xbf16>
    %cst = arith.constant dense<0.000000e+00> : vector<512x64xf32>
    %3 = tpu.matmul %1, %2, %cst {dimension_numbers = #tpu.dot_dimension_numbers<[1], [0], [0], [1], [0, 0, 1, 1], [], []>} : vector<512x8xbf16>, vector<8x64xbf16>, vector<512x64xf32> -> vector<512x64xf32>
    %c0_4 = arith.constant 0 : index
    %c0_5 = arith.constant 0 : index
    %4 = vector.load %arg4[%c0_4, %c0_5] : memref<1x64xf32, #tpu.memory_space<vmem>>, vector<1x64xf32>
    %5 = vector.broadcast %4 : vector<1x64xf32> to vector<512x64xf32>
    %6 = arith.addf %3, %5 : vector<512x64xf32>
    %cst_6 = arith.constant 0.000000e+00 : f32
    %7 = vector.broadcast %cst_6 : f32 to vector<512x64xf32>
    %8 = arith.maximumf %6, %7 : vector<512x64xf32>
    %9 = arith.truncf %8 : vector<512x64xf32> to vector<512x64xbf16>
    %c0_7 = arith.constant 0 : index
    %c0_8 = arith.constant 0 : index
    %10 = vector.load %arg5[%c0_7, %c0_8] : memref<64x128xbf16, #tpu.memory_space<vmem>>, vector<64x128xbf16>
    %cst_9 = arith.constant dense<0.000000e+00> : vector<512x128xf32>
    %11 = tpu.matmul %9, %10, %cst_9 {dimension_numbers = #tpu.dot_dimension_numbers<[1], [0], [0], [1], [0, 0, 1, 1], [], []>} : vector<512x64xbf16>, vector<64x128xbf16>, vector<512x128xf32> -> vector<512x128xf32>
    %c0_10 = arith.constant 0 : index
    %c0_11 = arith.constant 0 : index
    %12 = vector.load %arg6[%c0_10, %c0_11] : memref<1x128xf32, #tpu.memory_space<vmem>>, vector<1x128xf32>
    %13 = vector.broadcast %12 : vector<1x128xf32> to vector<512x128xf32>
    %14 = arith.addf %11, %13 : vector<512x128xf32>
    %cst_12 = arith.constant 0.000000e+00 : f32
    %15 = vector.broadcast %cst_12 : f32 to vector<512x128xf32>
    %16 = arith.maximumf %14, %15 : vector<512x128xf32>
    %17 = arith.truncf %16 : vector<512x128xf32> to vector<512x128xbf16>
    %c0_13 = arith.constant 0 : index
    %c0_14 = arith.constant 0 : index
    %18 = vector.load %arg7[%c0_13, %c0_14] : memref<128x1024xbf16, #tpu.memory_space<vmem>>, vector<128x1024xbf16>
    %cst_15 = arith.constant dense<0.000000e+00> : vector<512x1024xf32>
    %19 = tpu.matmul %17, %18, %cst_15 {dimension_numbers = #tpu.dot_dimension_numbers<[1], [0], [0], [1], [0, 0, 1, 1], [], []>} : vector<512x128xbf16>, vector<128x1024xbf16>, vector<512x1024xf32> -> vector<512x1024xf32>
    %c0_16 = arith.constant 0 : index
    %c0_17 = arith.constant 0 : index
    %20 = vector.load %arg8[%c0_16, %c0_17] : memref<1x1024xf32, #tpu.memory_space<vmem>>, vector<1x1024xf32>
    %21 = vector.broadcast %20 : vector<1x1024xf32> to vector<512x1024xf32>
    %22 = arith.addf %19, %21 : vector<512x1024xf32>
    %23 = vector.shape_cast %22 : vector<512x1024xf32> to vector<64x8x1024xf32>
    %cst_18 = arith.constant dense<0xFF800000> : vector<8x1024xf32>
    %24 = vector.multi_reduction <maximumf>, %23, %cst_18 [0] : vector<64x8x1024xf32> to vector<8x1024xf32>
    %c0_i32 = arith.constant 0 : i32
    %25 = arith.cmpi eq, %arg1, %c0_i32 : i32
    %26 = arith.extui %25 : i1 to i32
    %c0_i32_19 = arith.constant 0 : i32
    %27 = arith.cmpi ne, %26, %c0_i32_19 : i32
    scf.if %27 {
      %cst_26 = arith.constant 0xFF800000 : f32
      %34 = vector.broadcast %cst_26 : f32 to vector<8x1024xf32>
      %c0_27 = arith.constant 0 : index
      %c0_28 = arith.constant 0 : index
      %35 = vector.load %arg10[%c0_27, %c0_28] : memref<8x1024xf32, #tpu.memory_space<vmem>>, vector<8x1024xf32>
      tpu.vector_store %arg10[%c0_27, %c0_28], %34 {strides = array<i32>} : memref<8x1024xf32, #tpu.memory_space<vmem>>, vector<8x1024xf32>,
    } else {
    }
    %c0_20 = arith.constant 0 : index
    %c0_21 = arith.constant 0 : index
    %28 = vector.load %arg10[%c0_20, %c0_21] : memref<8x1024xf32, #tpu.memory_space<vmem>>, vector<8x1024xf32>
    %29 = arith.maximumf %28, %24 : vector<8x1024xf32>
    %c0_22 = arith.constant 0 : index
    %c0_23 = arith.constant 0 : index
    %30 = vector.load %arg10[%c0_22, %c0_23] : memref<8x1024xf32, #tpu.memory_space<vmem>>, vector<8x1024xf32>
    tpu.vector_store %arg10[%c0_22, %c0_23], %29 {strides = array<i32>} : memref<8x1024xf32, #tpu.memory_space<vmem>>, vector<8x1024xf32>,
    %c0_i32_24 = arith.constant 0 : i32
    %31 = arith.cmpi eq, %arg1, %c0_i32_24 : i32
    %32 = arith.extui %31 : i1 to i32
    %c0_i32_25 = arith.constant 0 : i32
    %33 = arith.cmpi ne, %32, %c0_i32_25 : i32
    scf.if %33 {
      %c0_26 = arith.constant 0 : index
      %c0_27 = arith.constant 0 : index
      %34 = vector.load %arg10[%c0_26, %c0_27] : memref<8x1024xf32, #tpu.memory_space<vmem>>, vector<8x1024xf32>
      %cst_28 = arith.constant dense<0xFF800000> : vector<1024xf32>
      %35 = vector.multi_reduction <maximumf>, %34, %cst_28 [0] : vector<8x1024xf32> to vector<1024xf32>
      %36 = vector.shape_cast %35 : vector<1024xf32> to vector<1x1024xf32>
      %c0_29 = arith.constant 0 : index
      %c0_30 = arith.constant 0 : index
      %c0_31 = arith.constant 0 : index
      %37 = vector.load %arg9[%c0_29, %c0_30, %c0_31] : memref<1x1x1024xf32, #tpu.memory_space<vmem>>, vector<1x1x1024xf32>
      %38 = vector.shape_cast %37 : vector<1x1x1024xf32> to vector<1x1024xf32>
      %39 = vector.shape_cast %36 : vector<1x1024xf32> to vector<1x1x1024xf32>
      tpu.vector_store %arg9[%c0_29, %c0_30, %c0_31], %39 {strides = array<i32>} : memref<1x1x1024xf32, #tpu.memory_space<vmem>>, vector<1x1x1024xf32>,
    } else {
    }
    return
  }
  func.func @transform_0(%arg0: i32, %arg1: i32) -> (i32, i32, i32) {
    %c0_i32 = arith.constant 0 : i32
    %c0_i32_0 = arith.constant 0 : i32
    return %arg0, %arg1, %c0_i32 : i32, i32, i32
  }
  func.func @transform_1(%arg0: i32, %arg1: i32) -> (i32, i32) {
    %c0_i32 = arith.constant 0 : i32
    %c0_i32_0 = arith.constant 0 : i32
    %c0_i32_1 = arith.constant 0 : i32
    return %c0_i32, %c0_i32_0 : i32, i32
  }
  func.func @transform_2(%arg0: i32, %arg1: i32) -> (i32, i32) {
    %c0_i32 = arith.constant 0 : i32
    %c0_i32_0 = arith.constant 0 : i32
    %c0_i32_1 = arith.constant 0 : i32
    return %c0_i32, %c0_i32_0 : i32, i32
  }
  func.func @transform_3(%arg0: i32, %arg1: i32) -> (i32, i32) {
    %c0_i32 = arith.constant 0 : i32
    %c0_i32_0 = arith.constant 0 : i32
    %c0_i32_1 = arith.constant 0 : i32
    return %c0_i32, %c0_i32_0 : i32, i32
  }
  func.func @transform_4(%arg0: i32, %arg1: i32) -> (i32, i32) {
    %c0_i32 = arith.constant 0 : i32
    %c0_i32_0 = arith.constant 0 : i32
    %c0_i32_1 = arith.constant 0 : i32
    return %c0_i32, %c0_i32_0 : i32, i32
  }
  func.func @transform_5(%arg0: i32, %arg1: i32) -> (i32, i32) {
    %c0_i32 = arith.constant 0 : i32
    %c0_i32_0 = arith.constant 0 : i32
    %c0_i32_1 = arith.constant 0 : i32
    return %c0_i32, %c0_i32_0 : i32, i32
  }
  func.func @transform_6(%arg0: i32, %arg1: i32) -> (i32, i32) {
    %c0_i32 = arith.constant 0 : i32
    %c0_i32_0 = arith.constant 0 : i32
    %c0_i32_1 = arith.constant 0 : i32
    return %c0_i32, %c0_i32_0 : i32, i32
  }
  func.func @transform_7(%arg0: i32, %arg1: i32) -> (i32, i32, i32) {
    %c0_i32 = arith.constant 0 : i32
    %c0_i32_0 = arith.constant 0 : i32
    %c0_i32_1 = arith.constant 0 : i32
    return %arg0, %c0_i32, %c0_i32_0 : i32, i32, i32
  }
}

</mosaic_0001>

<llo_original>
// kernel: tpu_custom_call.1
$region0: #{tpu_custom_call.1}
  #allocation0 [shape = 'u32[]', space=smem, size = 0x4, offset = 0x4, fixed_abs, tag = 'smem constant byte address 0x4 - core index']
  #allocation1 [shape = 'u32[144,128]{1,0:T(1,128)}', space=vmem, size = 0x12000, scoped, tag = 'internal scratch']
  #allocation2 [shape = 'f32[8,1024]{1,0:T(8,128)}', space=vmem, size = 0x8000, scoped, tag = 'scratch operand']
  %s0 = inlined_call_operand.vmem [shape: bf16[2,512,8], index: 0, kind: input, shape index: {}]
  %s1 = inlined_call_operand.vmem [shape: bf16[8,64], index: 1, kind: input, shape index: {}]
  %s2 = inlined_call_operand.vmem [shape: f32[1,64], index: 2, kind: input, shape index: {}]
  %s3 = inlined_call_operand.vmem [shape: bf16[64,128], index: 3, kind: input, shape index: {}]
  %s4 = inlined_call_operand.vmem [shape: f32[1,128], index: 4, kind: input, shape index: {}]
  %s5 = inlined_call_operand.vmem [shape: bf16[128,1024], index: 5, kind: input, shape index: {}]
  %s6 = inlined_call_operand.vmem [shape: f32[1,1024], index: 6, kind: input, shape index: {}]
  %s7 = inlined_call_operand.hbm [shape: f32[2,1,1024], index: 7, kind: output, shape index: {}]
  %s8 = sld [smem:[#allocation0]]
  $region69: #{tpu_custom_call.1} parent=0
    _
  %s10 = ssub.s32 1, %s8
  %s11 = scalar_select 0, %s10, %s8
  $region1: #{tpu_custom_call.1} parent=0
    #allocation3 [shape = 'u8[8192]{0}', space=vmem, size = 0x2000, scoped, tag = 'output window, operand 0']
    #allocation4 [shape = 's32[2]{0}', space=sflag, size = 0x8, scoped, tag = 'scoped memory for tpu_custom_call.1']
    %12 = vsyncpa [#allocation4], 0
    %s13 = scalar_lea.sflag [#allocation4], 1
    %14 = vsyncpa %s13, 0
    loop: start=0, step=1, limit=4
    $region2: #{tpu_custom_call.1} parent=1 // loop_pre_header
      _
    $region3: #{tpu_custom_call.1} parent=1 // loop_header
      %s16 = sphi 0, %s20
      %p17 = scmp.ge.s32.totalorder %s16, 4
      %s23 = sphi 0, %s35
      %s24 = sphi 0, %s31
      %s25 = sphi 0, %s23
      %s26 = sphi 0, %s24
      %s27 = sphi 0, %s25
      %s28 = sphi 0, %s26
      %s40 = sphi 0, %s42
      %s43 = sphi 0, %s40
      %s44 = sphi 0, %s43
      %s60 = sphi 0, %s44
      %s64 = sphi 0, %s64
      %s66 = sphi 0, %s64
      %s67 = sphi 0, %s66
      %s81 = sphi 0, %s67
      %s85 = sphi 0, %s85
      %s87 = sphi 0, %s85
      %s88 = sphi 0, %s87
      %s102 = sphi 0, %s88
      %s106 = sphi 0, %s106
      %s108 = sphi 0, %s106
      %s109 = sphi 0, %s108
      %s123 = sphi 0, %s109
      %s127 = sphi 0, %s127
      %s129 = sphi 0, %s127
      %s130 = sphi 0, %s129
      %s144 = sphi 0, %s130
      %s148 = sphi 0, %s148
      %s150 = sphi 0, %s148
      %s151 = sphi 0, %s150
      %s165 = sphi 0, %s151
      %s169 = sphi 0, %s169
      %s171 = sphi 0, %s169
      %s172 = sphi 0, %s171
      %s186 = sphi 0, %s172
      %s192 = sphi 0, %s194
      %s195 = sphi 0, %s192
      %s196 = sphi 0, %s195
      %s212 = sphi 0, %s196
    $region4: #{tpu_custom_call.1} parent=1 // loop_header_branch
      %19 = sbr.rel (%p17) target = $region8
    $region5: #{tpu_custom_call.1} parent=1 // loop_body
      %s21 = ssub.s32 %s16, 1
      %s22 = ssub.s32 %s16, 2
      %s29 = sadd.s32 1, %s24
      %p30 = scmp.ge.s32.totalorder %s29, 1
      %s31 = scalar_select %p30, 0, %s29
      %s32 = sadd.s32 1, %s23
      %s33 = scalar_select %p30, %s32, %s23
      %p34 = scmp.ge.s32.totalorder %s33, 2
      %s35 = scalar_select %p34, 0, %s33
      %s36 = ssub.s32 %s23, %s35
      %s37 = ssub.s32 %s24, %s31
      %s38 = sor.u32 %s36, %s37
      %p39 = scmp.eq.s32.totalorder %s38, 0
      %s41 = sadd.s32 %s40, 1
      %s42 = scalar_select %p39, %s40, %s41
      %p45 = pneg %p39
      %p46 = scmp.eq.s32.totalorder %s16, 1
      %p47 = por %p45, %p46
      %p48 = scmp.ne.s32.totalorder %s40, %s43
      %p49 = scmp.eq.s32.totalorder %s16, 0
      %p50 = por %p48, %p49
      %p51 = scmp.ne.s32.totalorder %s40, %s43
      %p52 = scmp.eq.s32.totalorder %s21, 1
      %p53 = por %p51, %p52
      %p54 = scmp.ne.s32.totalorder %s43, %s44
      %p55 = scmp.eq.s32.totalorder %s21, 0
      %p56 = por %p54, %p55
      %p57 = scmp.ne.s32.totalorder %s43, %s44
      %p58 = scmp.eq.s32.totalorder %s22, 1
      %p59 = por %p57, %p58
      %p61 = scmp.ne.s32.totalorder %s44, %s60
      %p62 = scmp.eq.s32.totalorder %s22, 0
      %p63 = por %p61, %p62
      %s65 = sadd.s32 %s64, 1
      %p68 = scmp.eq.s32.totalorder %s16, 1
      %p69 = scmp.ne.s32.totalorder %s64, %s66
      %p70 = scmp.eq.s32.totalorder %s16, 0
      %p71 = por %p69, %p70
      %p72 = scmp.ne.s32.totalorder %s64, %s66
      %p73 = scmp.eq.s32.totalorder %s21, 1
      %p74 = por %p72, %p73
      %p75 = scmp.ne.s32.totalorder %s66, %s67
      %p76 = scmp.eq.s32.totalorder %s21, 0
      %p77 = por %p75, %p76
      %p78 = scmp.ne.s32.totalorder %s66, %s67
      %p79 = scmp.eq.s32.totalorder %s22, 1
      %p80 = por %p78, %p79
      %p82 = scmp.ne.s32.totalorder %s67, %s81
      %p83 = scmp.eq.s32.totalorder %s22, 0
      %p84 = por %p82, %p83
      %s86 = sadd.s32 %s85, 1
      %p89 = scmp.eq.s32.totalorder %s16, 1
      %p90 = scmp.ne.s32.totalorder %s85, %s87
      %p91 = scmp.eq.s32.totalorder %s16, 0
      %p92 = por %p90, %p91
      %p93 = scmp.ne.s32.totalorder %s85, %s87
      %p94 = scmp.eq.s32.totalorder %s21, 1
      %p95 = por %p93, %p94
      %p96 = scmp.ne.s32.totalorder %s87, %s88
      %p97 = scmp.eq.s32.totalorder %s21, 0
      %p98 = por %p96, %p97
      %p99 = scmp.ne.s32.totalorder %s87, %s88
      %p100 = scmp.eq.s32.totalorder %s22, 1
      %p101 = por %p99, %p100
      %p103 = scmp.ne.s32.totalorder %s88, %s102
      %p104 = scmp.eq.s32.totalorder %s22, 0
      %p105 = por %p103, %p104
      %s107 = sadd.s32 %s106, 1
      %p110 = scmp.eq.s32.totalorder %s16, 1
      %p111 = scmp.ne.s32.totalorder %s106, %s108
      %p112 = scmp.eq.s32.totalorder %s16, 0
      %p113 = por %p111, %p112
      %p114 = scmp.ne.s32.totalorder %s106, %s108
      %p115 = scmp.eq.s32.totalorder %s21, 1
      %p116 = por %p114, %p115
      %p117 = scmp.ne.s32.totalorder %s108, %s109
      %p118 = scmp.eq.s32.totalorder %s21, 0
      %p119 = por %p117, %p118
      %p120 = scmp.ne.s32.totalorder %s108, %s109
      %p121 = scmp.eq.s32.totalorder %s22, 1
      %p122 = por %p120, %p121
      %p124 = scmp.ne.s32.totalorder %s109, %s123
      %p125 = scmp.eq.s32.totalorder %s22, 0
      %p126 = por %p124, %p125
      %s128 = sadd.s32 %s127, 1
      %p131 = scmp.eq.s32.totalorder %s16, 1
      %p132 = scmp.ne.s32.totalorder %s127, %s129
      %p133 = scmp.eq.s32.totalorder %s16, 0
      %p134 = por %p132, %p133
      %p135 = scmp.ne.s32.totalorder %s127, %s129
      %p136 = scmp.eq.s32.totalorder %s21, 1
      %p137 = por %p135, %p136
      %p138 = scmp.ne.s32.totalorder %s129, %s130
      %p139 = scmp.eq.s32.totalorder %s21, 0
      %p140 = por %p138, %p139
      %p141 = scmp.ne.s32.totalorder %s129, %s130
      %p142 = scmp.eq.s32.totalorder %s22, 1
      %p143 = por %p141, %p142
      %p145 = scmp.ne.s32.totalorder %s130, %s144
      %p146 = scmp.eq.s32.totalorder %s22, 0
      %p147 = por %p145, %p146
      %s149 = sadd.s32 %s148, 1
      %p152 = scmp.eq.s32.totalorder %s16, 1
      %p153 = scmp.ne.s32.totalorder %s148, %s150
      %p154 = scmp.eq.s32.totalorder %s16, 0
      %p155 = por %p153, %p154
      %p156 = scmp.ne.s32.totalorder %s148, %s150
      %p157 = scmp.eq.s32.totalorder %s21, 1
      %p158 = por %p156, %p157
      %p159 = scmp.ne.s32.totalorder %s150, %s151
      %p160 = scmp.eq.s32.totalorder %s21, 0
      %p161 = por %p159, %p160
      %p162 = scmp.ne.s32.totalorder %s150, %s151
      %p163 = scmp.eq.s32.totalorder %s22, 1
      %p164 = por %p162, %p163
      %p166 = scmp.ne.s32.totalorder %s151, %s165
      %p167 = scmp.eq.s32.totalorder %s22, 0
      %p168 = por %p166, %p167
      %s170 = sadd.s32 %s169, 1
      %p173 = scmp.eq.s32.totalorder %s16, 1
      %p174 = scmp.ne.s32.totalorder %s169, %s171
      %p175 = scmp.eq.s32.totalorder %s16, 0
      %p176 = por %p174, %p175
      %p177 = scmp.ne.s32.totalorder %s169, %s171
      %p178 = scmp.eq.s32.totalorder %s21, 1
      %p179 = por %p177, %p178
      %p180 = scmp.ne.s32.totalorder %s171, %s172
      %p181 = scmp.eq.s32.totalorder %s21, 0
      %p182 = por %p180, %p181
      %p183 = scmp.ne.s32.totalorder %s171, %s172
      %p184 = scmp.eq.s32.totalorder %s22, 1
      %p185 = por %p183, %p184
      %p187 = scmp.ne.s32.totalorder %s172, %s186
      %p188 = scmp.eq.s32.totalorder %s22, 0
      %p189 = por %p187, %p188
      %s190 = ssub.s32 %s23, %s35
      %p191 = scmp.eq.s32.totalorder %s190, 0
      %s193 = sadd.s32 %s192, 1
      %s194 = scalar_select %p191, %s192, %s193
      %p197 = pneg %p191
      %p198 = scmp.eq.s32.totalorder %s16, 1
      %p199 = por %p197, %p198
      %p200 = scmp.ne.s32.totalorder %s192, %s195
      %p201 = scmp.eq.s32.totalorder %s16, 0
      %p202 = por %p200, %p201
      %p203 = scmp.ne.s32.totalorder %s192, %s195
      %p204 = scmp.eq.s32.totalorder %s21, 1
      %p205 = por %p203, %p204
      %p206 = scmp.ne.s32.totalorder %s195, %s196
      %p207 = scmp.eq.s32.totalorder %s21, 0
      %p208 = por %p206, %p207
      %p209 = scmp.ne.s32.totalorder %s195, %s196
      %p210 = scmp.eq.s32.totalorder %s22, 1
      %p211 = por %p209, %p210
      %p213 = scmp.ne.s32.totalorder %s196, %s212
      %p214 = scmp.eq.s32.totalorder %s22, 0
      %p215 = por %p213, %p214
      %p216 = scmp.le.s32.totalorder 1, %s16
      %p217 = scmp.lt.s32.totalorder %s16, 3
      %p218 = pnand %p216, %p217
      %p219 = pneg %p218
      // Predicated region
      $region9: #{tpu_custom_call.1} parent=5 // pred_check
        _
      $region10: #{tpu_custom_call.1} parent=5 // pred_check_branch
        %221 = sbr.rel (%p218) target = $region12
      $region11: #{tpu_custom_call.1} parent=5 // pred_region
        %s222 = ssub.s32 %s16, 1
        // Predicated region
        $region13: #{tpu_custom_call.1} parent=11 // pred_check
          %p223 = pneg %p77
        $region14: #{tpu_custom_call.1} parent=11 // pred_check_branch
          %225 = sbr.rel (%p223) target = $region16
        $region15: #{tpu_custom_call.1} parent=11 // pred_region
          _
        $region16: #{tpu_custom_call.1} parent=11 // pred_fallthru
          _
        // Predicated region
        $region17: #{tpu_custom_call.1} parent=11 // pred_check
          %p226 = pneg %p98
        $region18: #{tpu_custom_call.1} parent=11 // pred_check_branch
          %228 = sbr.rel (%p226) target = $region20
        $region19: #{tpu_custom_call.1} parent=11 // pred_region
          _
        $region20: #{tpu_custom_call.1} parent=11 // pred_fallthru
          _
        // Predicated region
        $region21: #{tpu_custom_call.1} parent=11 // pred_check
          %p229 = pneg %p119
        $region22: #{tpu_custom_call.1} parent=11 // pred_check_branch
          %231 = sbr.rel (%p229) target = $region24
        $region23: #{tpu_custom_call.1} parent=11 // pred_region
          _
        $region24: #{tpu_custom_call.1} parent=11 // pred_fallthru
          _
        // Predicated region
        $region25: #{tpu_custom_call.1} parent=11 // pred_check
          %p232 = pneg %p140
        $region26: #{tpu_custom_call.1} parent=11 // pred_check_branch
          %234 = sbr.rel (%p232) target = $region28
        $region27: #{tpu_custom_call.1} parent=11 // pred_region
          _
        $region28: #{tpu_custom_call.1} parent=11 // pred_fallthru
          _
        // Predicated region
        $region29: #{tpu_custom_call.1} parent=11 // pred_check
          %p235 = pneg %p161
        $region30: #{tpu_custom_call.1} parent=11 // pred_check_branch
          %237 = sbr.rel (%p235) target = $region32
        $region31: #{tpu_custom_call.1} parent=11 // pred_region
          _
        $region32: #{tpu_custom_call.1} parent=11 // pred_fallthru
          _
        // Predicated region
        $region33: #{tpu_custom_call.1} parent=11 // pred_check
          %p238 = pneg %p182
        $region34: #{tpu_custom_call.1} parent=11 // pred_check_branch
          %240 = sbr.rel (%p238) target = $region36
        $region35: #{tpu_custom_call.1} parent=11 // pred_region
          _
        $region36: #{tpu_custom_call.1} parent=11 // pred_fallthru
          _
      $region12: #{tpu_custom_call.1} parent=5 // pred_fallthru
        _
      %p241 = scmp.lt.s32.totalorder %s16, 2
      // Predicated region
      $region37: #{tpu_custom_call.1} parent=5 // pred_check
        %p242 = pneg %p241
      $region38: #{tpu_custom_call.1} parent=5 // pred_check_branch
        %244 = sbr.rel (%p242) target = $region40
      $region39: #{tpu_custom_call.1} parent=5 // pred_region
        // Predicated region
        $region41: #{tpu_custom_call.1} parent=39 // pred_check
          %p245 = pneg %p50
        $region42: #{tpu_custom_call.1} parent=39 // pred_check_branch
          %247 = sbr.rel (%p245) target = $region44
        $region43: #{tpu_custom_call.1} parent=39 // pred_region
          %s248 = smul.u32 64, %s24
          %p249 = scmp.lt.s32.totalorder %s23, 1
          %s250 = scalar_select %p249, %s23, 1
          %p251 = scmp.lt.s32.totalorder %s248, 63
          %s252 = scalar_select %p251, %s248, 63
          %s253 = smul.addr %s250, 64
          %s254 = sadd.s32 %s252, %s253
          %s255 = smul.addr %s254, 4
          %s256 = scalar_lea.vmem %s0, %s255
          %s257 = smul.u32 64, %s24
        $region44: #{tpu_custom_call.1} parent=39 // pred_fallthru
          _
      $region40: #{tpu_custom_call.1} parent=5 // pred_fallthru
        _
      %p258 = scmp.le.s32.totalorder 1, %s16
      %p259 = scmp.lt.s32.totalorder %s16, 3
      %p260 = pnand %p258, %p259
      %p261 = pneg %p260
      // Predicated region
      $region45: #{tpu_custom_call.1} parent=5 // pred_check
        _
      $region46: #{tpu_custom_call.1} parent=5 // pred_check_branch
        %263 = sbr.rel (%p260) target = $region48
      $region47: #{tpu_custom_call.1} parent=5 // pred_region
        %s264 = ssub.s32 %s16, 1
        %s265 = smul.u32 64, %s26
        %p266 = scmp.lt.s32.totalorder %s25, 1
        %s267 = scalar_select %p266, %s25, 1
        %p268 = scmp.lt.s32.totalorder %s265, 63
        %s269 = scalar_select %p268, %s265, 63
        %s270 = smul.addr %s267, 64
        %s271 = sadd.s32 %s269, %s270
        %s272 = smul.addr %s271, 4
        %s273 = scalar_lea.vmem %s0, %s272
        %p274 = pneg %p56
        %p275 = pneg %p53
        %p276 = pneg %p77
        %p277 = pneg %p74
        %p278 = pneg %p98
        %p279 = pneg %p95
        %p280 = pneg %p119
        %p281 = pneg %p116
        %p282 = pneg %p140
        %p283 = pneg %p137
        %p284 = pneg %p161
        %p285 = pneg %p158
        %p286 = pneg %p182
        %p287 = pneg %p179
        %p288 = pneg %p208
        %p289 = pneg %p205
        %s290 = sand.u32 %s195, 1
        %s291 = scalar_lea.sflag [#allocation4], %s290
        %s292 = sand.u32 %s195, 1
        %s293 = smul.addr %s292, 8
        %s294 = scalar_lea.vmem [#allocation3], %s293
        %s295 = smul.u32 64, %s26
        %p296 = scmp.lt.s32.totalorder %s25, 1
        %s297 = scalar_select %p296, %s25, 1
        %p298 = scmp.lt.s32.totalorder %s295, 63
        %s299 = scalar_select %p298, %s295, 63
        %s300 = smul.addr %s297, 64
        %s301 = sadd.s32 %s299, %s300
        %s302 = smul.addr %s301, 4
        %s303 = scalar_lea.vmem %s0, %s302
        %s304 = smul.u32 64, %s26
        %v306 = vld [vmem:[%s303] sm:$0xf]
        %v307 = vld [vmem:[%s303 + $0x4] sm:$0xf]
        %v308 = vld [vmem:[%s303 + $0x8] sm:$0xf]
        %v309 = vld [vmem:[%s303 + $0xc] sm:$0xf]
        %v310 = vld [vmem:[%s303 + $0x10] sm:$0xf]
        %v311 = vld [vmem:[%s303 + $0x14] sm:$0xf]
        %v312 = vld [vmem:[%s303 + $0x18] sm:$0xf]
        %v313 = vld [vmem:[%s303 + $0x1c] sm:$0xf]
        %v314 = vld [vmem:[%s303 + $0x20] sm:$0xf]
        %v315 = vld [vmem:[%s303 + $0x24] sm:$0xf]
        %v316 = vld [vmem:[%s303 + $0x28] sm:$0xf]
        %v317 = vld [vmem:[%s303 + $0x2c] sm:$0xf]
        %v318 = vld [vmem:[%s303 + $0x30] sm:$0xf]
        %v319 = vld [vmem:[%s303 + $0x34] sm:$0xf]
        %v320 = vld [vmem:[%s303 + $0x38] sm:$0xf]
        %v321 = vld [vmem:[%s303 + $0x3c] sm:$0xf]
        %v322 = vld [vmem:[%s303 + $0x40] sm:$0xf]
        %v323 = vld [vmem:[%s303 + $0x44] sm:$0xf]
        %v324 = vld [vmem:[%s303 + $0x48] sm:$0xf]
        %v325 = vld [vmem:[%s303 + $0x4c] sm:$0xf]
        %v326 = vld [vmem:[%s303 + $0x50] sm:$0xf]
        %v327 = vld [vmem:[%s303 + $0x54] sm:$0xf]
        %v328 = vld [vmem:[%s303 + $0x58] sm:$0xf]
        %v329 = vld [vmem:[%s303 + $0x5c] sm:$0xf]
        %v330 = vld [vmem:[%s303 + $0x60] sm:$0xf]
        %v331 = vld [vmem:[%s303 + $0x64] sm:$0xf]
        %v332 = vld [vmem:[%s303 + $0x68] sm:$0xf]
        %v333 = vld [vmem:[%s303 + $0x6c] sm:$0xf]
        %v334 = vld [vmem:[%s303 + $0x70] sm:$0xf]
        %v335 = vld [vmem:[%s303 + $0x74] sm:$0xf]
        %v336 = vld [vmem:[%s303 + $0x78] sm:$0xf]
        %v337 = vld [vmem:[%s303 + $0x7c] sm:$0xf]
        %v338 = vld [vmem:[%s303 + $0x80] sm:$0xf]
        %v339 = vld [vmem:[%s303 + $0x84] sm:$0xf]
        %v340 = vld [vmem:[%s303 + $0x88] sm:$0xf]
        %v341 = vld [vmem:[%s303 + $0x8c] sm:$0xf]
        %v342 = vld [vmem:[%s303 + $0x90] sm:$0xf]
        %v343 = vld [vmem:[%s303 + $0x94] sm:$0xf]
        %v344 = vld [vmem:[%s303 + $0x98] sm:$0xf]
        %v345 = vld [vmem:[%s303 + $0x9c] sm:$0xf]
        %v346 = vld [vmem:[%s303 + $0xa0] sm:$0xf]
        %v347 = vld [vmem:[%s303 + $0xa4] sm:$0xf]
        %v348 = vld [vmem:[%s303 + $0xa8] sm:$0xf]
        %v349 = vld [vmem:[%s303 + $0xac] sm:$0xf]
        %v350 = vld [vmem:[%s303 + $0xb0] sm:$0xf]
        %v351 = vld [vmem:[%s303 + $0xb4] sm:$0xf]
        %v352 = vld [vmem:[%s303 + $0xb8] sm:$0xf]
        %v353 = vld [vmem:[%s303 + $0xbc] sm:$0xf]
        %v354 = vld [vmem:[%s303 + $0xc0] sm:$0xf]
        %v355 = vld [vmem:[%s303 + $0xc4] sm:$0xf]
        %v356 = vld [vmem:[%s303 + $0xc8] sm:$0xf]
        %v357 = vld [vmem:[%s303 + $0xcc] sm:$0xf]
        %v358 = vld [vmem:[%s303 + $0xd0] sm:$0xf]
        %v359 = vld [vmem:[%s303 + $0xd4] sm:$0xf]
        %v360 = vld [vmem:[%s303 + $0xd8] sm:$0xf]
        %v361 = vld [vmem:[%s303 + $0xdc] sm:$0xf]
        %v362 = vld [vmem:[%s303 + $0xe0] sm:$0xf]
        %v363 = vld [vmem:[%s303 + $0xe4] sm:$0xf]
        %v364 = vld [vmem:[%s303 + $0xe8] sm:$0xf]
        %v365 = vld [vmem:[%s303 + $0xec] sm:$0xf]
        %v366 = vld [vmem:[%s303 + $0xf0] sm:$0xf]
        %v367 = vld [vmem:[%s303 + $0xf4] sm:$0xf]
        %v368 = vld [vmem:[%s303 + $0xf8] sm:$0xf]
        %v369 = vld [vmem:[%s303 + $0xfc] sm:$0xf]
        %v370 = vld [vmem:[%s1] sm:$0xf]
        %v371 = vld [vmem:[%s2] sm:$0x1]
        %v373 = vlaneseq
        %v374 = vshrl.u32 %v373, 7
        %v375 = vsub.s32 0, %v374
        %v376 = vrot.slane %v371, %v375
        %v442 = vunpack.c.l.b16 %v306
        %v443 = vunpack.c.l.b16 %v307
        %v444 = vunpack.c.l.b16 %v308
        %v445 = vunpack.c.l.b16 %v309
        %v446 = vunpack.c.l.b16 %v310
        %v447 = vunpack.c.l.b16 %v311
        %v448 = vunpack.c.l.b16 %v312
        %v449 = vunpack.c.l.b16 %v313
        %v450 = vunpack.c.l.b16 %v314
        %v451 = vunpack.c.l.b16 %v315
        %v452 = vunpack.c.l.b16 %v316
        %v453 = vunpack.c.l.b16 %v317
        %v454 = vunpack.c.l.b16 %v318
        %v455 = vunpack.c.l.b16 %v319
        %v456 = vunpack.c.l.b16 %v320
        %v457 = vunpack.c.l.b16 %v321
        %v458 = vunpack.c.l.b16 %v322
        %v459 = vunpack.c.l.b16 %v323
        %v460 = vunpack.c.l.b16 %v324
        %v461 = vunpack.c.l.b16 %v325
        %v462 = vunpack.c.l.b16 %v326
        %v463 = vunpack.c.l.b16 %v327
        %v464 = vunpack.c.l.b16 %v328
        %v465 = vunpack.c.l.b16 %v329
        %v466 = vunpack.c.l.b16 %v330
        %v467 = vunpack.c.l.b16 %v331
        %v468 = vunpack.c.l.b16 %v332
        %v469 = vunpack.c.l.b16 %v333
        %v470 = vunpack.c.l.b16 %v334
        %v471 = vunpack.c.l.b16 %v335
        %v472 = vunpack.c.l.b16 %v336
        %v473 = vunpack.c.l.b16 %v337
        %v474 = vunpack.c.l.b16 %v338
        %v475 = vunpack.c.l.b16 %v339
        %v476 = vunpack.c.l.b16 %v340
        %v477 = vunpack.c.l.b16 %v341
        %v478 = vunpack.c.l.b16 %v342
        %v479 = vunpack.c.l.b16 %v343
        %v480 = vunpack.c.l.b16 %v344
        %v481 = vunpack.c.l.b16 %v345
        %v482 = vunpack.c.l.b16 %v346
        %v483 = vunpack.c.l.b16 %v347
        %v484 = vunpack.c.l.b16 %v348
        %v485 = vunpack.c.l.b16 %v349
        %v486 = vunpack.c.l.b16 %v350
        %v487 = vunpack.c.l.b16 %v351
        %v488 = vunpack.c.l.b16 %v352
        %v489 = vunpack.c.l.b16 %v353
        %v490 = vunpack.c.l.b16 %v354
        %v491 = vunpack.c.l.b16 %v355
        %v492 = vunpack.c.l.b16 %v356
        %v493 = vunpack.c.l.b16 %v357
        %v494 = vunpack.c.l.b16 %v358
        %v495 = vunpack.c.l.b16 %v359
        %v496 = vunpack.c.l.b16 %v360
        %v497 = vunpack.c.l.b16 %v361
        %v498 = vunpack.c.l.b16 %v362
        %v499 = vunpack.c.l.b16 %v363
        %v500 = vunpack.c.l.b16 %v364
        %v501 = vunpack.c.l.b16 %v365
        %v502 = vunpack.c.l.b16 %v366
        %v503 = vunpack.c.l.b16 %v367
        %v504 = vunpack.c.l.b16 %v368
        %v505 = vunpack.c.l.b16 %v369
        %v506 = vpack.c.b16 %v443, %v442
        %v507 = vpack.c.b16 %v445, %v444
        %v508 = vpack.c.b16 %v447, %v446
        %v509 = vpack.c.b16 %v449, %v448
        %v510 = vpack.c.b16 %v451, %v450
        %v511 = vpack.c.b16 %v453, %v452
        %v512 = vpack.c.b16 %v455, %v454
        %v513 = vpack.c.b16 %v457, %v456
        %v514 = vpack.c.b16 %v459, %v458
        %v515 = vpack.c.b16 %v461, %v460
        %v516 = vpack.c.b16 %v463, %v462
        %v517 = vpack.c.b16 %v465, %v464
        %v518 = vpack.c.b16 %v467, %v466
        %v519 = vpack.c.b16 %v469, %v468
        %v520 = vpack.c.b16 %v471, %v470
        %v521 = vpack.c.b16 %v473, %v472
        %v522 = vpack.c.b16 %v475, %v474
        %v523 = vpack.c.b16 %v477, %v476
        %v524 = vpack.c.b16 %v479, %v478
        %v525 = vpack.c.b16 %v481, %v480
        %v526 = vpack.c.b16 %v483, %v482
        %v527 = vpack.c.b16 %v485, %v484
        %v528 = vpack.c.b16 %v487, %v486
        %v529 = vpack.c.b16 %v489, %v488
        %v530 = vpack.c.b16 %v491, %v490
        %v531 = vpack.c.b16 %v493, %v492
        %v532 = vpack.c.b16 %v495, %v494
        %v533 = vpack.c.b16 %v497, %v496
        %v534 = vpack.c.b16 %v499, %v498
        %v535 = vpack.c.b16 %v501, %v500
        %v536 = vpack.c.b16 %v503, %v502
        %v537 = vpack.c.b16 %v505, %v504
        %vm538 = vcmask 64512
        %v540 = vsel %vm538, %v506, 0
        %v543 = vsel %vm538, %v507, 0
        %v546 = vsel %vm538, %v508, 0
        %v549 = vsel %vm538, %v509, 0
        %v552 = vsel %vm538, %v510, 0
        %v555 = vsel %vm538, %v511, 0
        %v558 = vsel %vm538, %v512, 0
        %v561 = vsel %vm538, %v513, 0
        %v564 = vsel %vm538, %v514, 0
        %v567 = vsel %vm538, %v515, 0
        %v570 = vsel %vm538, %v516, 0
        %v573 = vsel %vm538, %v517, 0
        %v576 = vsel %vm538, %v518, 0
        %v579 = vsel %vm538, %v519, 0
        %v582 = vsel %vm538, %v520, 0
        %v585 = vsel %vm538, %v521, 0
        %v588 = vsel %vm538, %v522, 0
        %v591 = vsel %vm538, %v523, 0
        %v594 = vsel %vm538, %v524, 0
        %v597 = vsel %vm538, %v525, 0
        %v600 = vsel %vm538, %v526, 0
        %v603 = vsel %vm538, %v527, 0
        %v606 = vsel %vm538, %v528, 0
        %v609 = vsel %vm538, %v529, 0
        %v612 = vsel %vm538, %v530, 0
        %v615 = vsel %vm538, %v531, 0
        %v618 = vsel %vm538, %v532, 0
        %v621 = vsel %vm538, %v533, 0
        %v624 = vsel %vm538, %v534, 0
        %v627 = vsel %vm538, %v535, 0
        %v630 = vsel %vm538, %v536, 0
        %v633 = vsel %vm538, %v537, 0
        %vm635 = vcmask 1043456
        %v637 = vsel %vm635, %v370, 0
        %639 = vmatprep.subr.bf16.mxu0 0
        %640 = vmatpush1.bf16.msra.mxu0 %v637
        %641 = vmatprep.subr.bf16.mxu0 0
        %642 = vmatpush1.bf16.msra.mxu0 0
        %643 = vmatprep.subr.bf16.mxu0 0
        %644 = vmatpush1.bf16.msra.mxu0 0
        %645 = vmatprep.subr.bf16.mxu0 0
        %646 = vmatpush1.bf16.msra.mxu0 0
        %647 = vmatprep.subr.bf16.mxu0 0
        %648 = vmatpush1.bf16.msra.mxu0 0
        %649 = vmatprep.subr.bf16.mxu0 0
        %650 = vmatpush1.bf16.msra.mxu0 0
        %651 = vmatprep.subr.bf16.mxu0 0
        %652 = vmatpush1.bf16.msra.mxu0 0
        %653 = vmatprep.subr.bf16.mxu0 0
        %654 = vmatpush1.bf16.msra.mxu0 0
        %655 = vmatprep.subr.bf16.mxu0 0
        %656 = vmatpush1.bf16.msra.mxu0 0
        %657 = vmatprep.subr.bf16.mxu0 0
        %658 = vmatpush1.bf16.msra.mxu0 0
        %659 = vmatprep.subr.bf16.mxu0 0
        %660 = vmatpush1.bf16.msra.mxu0 0
        %661 = vmatprep.subr.bf16.mxu0 0
        %662 = vmatpush1.bf16.msra.mxu0 0
        %663 = vmatprep.subr.bf16.mxu0 0
        %664 = vmatpush1.bf16.msra.mxu0 0
        %665 = vmatprep.subr.bf16.mxu0 0
        %666 = vmatpush1.bf16.msra.mxu0 0
        %667 = vmatprep.subr.bf16.mxu0 0
        %668 = vmatpush1.bf16.msra.mxu0 0
        %669 = vmatprep.subr.bf16.mxu0 0
        %670 = vmatpush1.bf16.msra.mxu0 0
        %671 = vmatprep.mubr.bf16.mxu0 0
        %672 = vmatmul.mubr.bf16.gmra.mrb[0].mxu0 %v540
        %v673 = vpop.f32.mrb[0].mxu0
        %v674 = vadd.f32 %v376, %v673
        %v675 = vpop.f32.mrb[0].mxu0
        %v676 = vpop.f32.mrb[0].mxu0
        %v677 = vadd.f32 %v376, %v676
        %v678 = vpop.f32.mrb[0].mxu0
        %679 = vmatprep.mubr.bf16.mxu0 0
        %680 = vmatmul.mubr.bf16.gmra.mrb[0].mxu0 %v543
        %v681 = vpop.f32.mrb[0].mxu0
        %v682 = vadd.f32 %v376, %v681
        %v683 = vpop.f32.mrb[0].mxu0
        %v684 = vpop.f32.mrb[0].mxu0
        %v685 = vadd.f32 %v376, %v684
        %v686 = vpop.f32.mrb[0].mxu0
        %687 = vmatprep.mubr.bf16.mxu0 0
        %688 = vmatmul.mubr.bf16.gmra.mrb[0].mxu0 %v546
        %v689 = vpop.f32.mrb[0].mxu0
        %v690 = vadd.f32 %v376, %v689
        %v691 = vpop.f32.mrb[0].mxu0
        %v692 = vpop.f32.mrb[0].mxu0
        %v693 = vadd.f32 %v376, %v692
        %v694 = vpop.f32.mrb[0].mxu0
        %695 = vmatprep.mubr.bf16.mxu0 0
        %696 = vmatmul.mubr.bf16.gmra.mrb[0].mxu0 %v549
        %v697 = vpop.f32.mrb[0].mxu0
        %v698 = vadd.f32 %v376, %v697
        %v699 = vpop.f32.mrb[0].mxu0
        %v700 = vpop.f32.mrb[0].mxu0
        %v701 = vadd.f32 %v376, %v700
        %v702 = vpop.f32.mrb[0].mxu0
        %703 = vmatprep.mubr.bf16.mxu0 0
        %704 = vmatmul.mubr.bf16.gmra.mrb[0].mxu0 %v552
        %v705 = vpop.f32.mrb[0].mxu0
        %v706 = vadd.f32 %v376, %v705
        %v707 = vpop.f32.mrb[0].mxu0
        %v708 = vpop.f32.mrb[0].mxu0
        %v709 = vadd.f32 %v376, %v708
        %v710 = vpop.f32.mrb[0].mxu0
        %711 = vmatprep.mubr.bf16.mxu0 0
        %712 = vmatmul.mubr.bf16.gmra.mrb[0].mxu0 %v555
        %v713 = vpop.f32.mrb[0].mxu0
        %v714 = vadd.f32 %v376, %v713
        %v715 = vpop.f32.mrb[0].mxu0
        %v716 = vpop.f32.mrb[0].mxu0
        %v717 = vadd.f32 %v376, %v716
        %v718 = vpop.f32.mrb[0].mxu0
        %719 = vmatprep.mubr.bf16.mxu0 0
        %720 = vmatmul.mubr.bf16.gmra.mrb[0].mxu0 %v558
        %v721 = vpop.f32.mrb[0].mxu0
        %v722 = vadd.f32 %v376, %v721
        %v723 = vpop.f32.mrb[0].mxu0
        %v724 = vpop.f32.mrb[0].mxu0
        %v725 = vadd.f32 %v376, %v724
        %v726 = vpop.f32.mrb[0].mxu0
        %727 = vmatprep.mubr.bf16.mxu0 0
        %728 = vmatmul.mubr.bf16.gmra.mrb[0].mxu0 %v561
        %v729 = vpop.f32.mrb[0].mxu0
        %v730 = vadd.f32 %v376, %v729
        %v731 = vpop.f32.mrb[0].mxu0
        %v732 = vpop.f32.mrb[0].mxu0
        %v733 = vadd.f32 %v376, %v732
        %v734 = vpop.f32.mrb[0].mxu0
        %735 = vmatprep.mubr.bf16.mxu0 0
        %736 = vmatmul.mubr.bf16.gmra.mrb[0].mxu0 %v564
        %v737 = vpop.f32.mrb[0].mxu0
        %v738 = vadd.f32 %v376, %v737
        %v739 = vpop.f32.mrb[0].mxu0
        %v740 = vpop.f32.mrb[0].mxu0
        %v741 = vadd.f32 %v376, %v740
        %v742 = vpop.f32.mrb[0].mxu0
        %743 = vmatprep.mubr.bf16.mxu0 0
        %744 = vmatmul.mubr.bf16.gmra.mrb[0].mxu0 %v567
        %v745 = vpop.f32.mrb[0].mxu0
        %v746 = vadd.f32 %v376, %v745
        %v747 = vpop.f32.mrb[0].mxu0
        %v748 = vpop.f32.mrb[0].mxu0
        %v749 = vadd.f32 %v376, %v748
        %v750 = vpop.f32.mrb[0].mxu0
        %751 = vmatprep.mubr.bf16.mxu0 0
        %752 = vmatmul.mubr.bf16.gmra.mrb[0].mxu0 %v570
        %v753 = vpop.f32.mrb[0].mxu0
        %v754 = vadd.f32 %v376, %v753
        %v755 = vpop.f32.mrb[0].mxu0
        %v756 = vpop.f32.mrb[0].mxu0
        %v757 = vadd.f32 %v376, %v756
        %v758 = vpop.f32.mrb[0].mxu0
        %759 = vmatprep.mubr.bf16.mxu0 0
        %760 = vmatmul.mubr.bf16.gmra.mrb[0].mxu0 %v573
        %v761 = vpop.f32.mrb[0].mxu0
        %v762 = vadd.f32 %v376, %v761
        %v763 = vpop.f32.mrb[0].mxu0
        %v764 = vpop.f32.mrb[0].mxu0
        %v765 = vadd.f32 %v376, %v764
        %v766 = vpop.f32.mrb[0].mxu0
        %767 = vmatprep.mubr.bf16.mxu0 0
        %768 = vmatmul.mubr.bf16.gmra.mrb[0].mxu0 %v576
        %v769 = vpop.f32.mrb[0].mxu0
        %v770 = vadd.f32 %v376, %v769
        %v771 = vpop.f32.mrb[0].mxu0
        %v772 = vpop.f32.mrb[0].mxu0
        %v773 = vadd.f32 %v376, %v772
        %v774 = vpop.f32.mrb[0].mxu0
        %775 = vmatprep.mubr.bf16.mxu0 0
        %776 = vmatmul.mubr.bf16.gmra.mrb[0].mxu0 %v579
        %v777 = vpop.f32.mrb[0].mxu0
        %v778 = vadd.f32 %v376, %v777
        %v779 = vpop.f32.mrb[0].mxu0
        %v780 = vpop.f32.mrb[0].mxu0
        %v781 = vadd.f32 %v376, %v780
        %v782 = vpop.f32.mrb[0].mxu0
        %783 = vmatprep.mubr.bf16.mxu0 0
        %784 = vmatmul.mubr.bf16.gmra.mrb[0].mxu0 %v582
        %v785 = vpop.f32.mrb[0].mxu0
        %v786 = vadd.f32 %v376, %v785
        %v787 = vpop.f32.mrb[0].mxu0
        %v788 = vpop.f32.mrb[0].mxu0
        %v789 = vadd.f32 %v376, %v788
        %v790 = vpop.f32.mrb[0].mxu0
        %791 = vmatprep.mubr.bf16.mxu0 0
        %792 = vmatmul.mubr.bf16.gmra.mrb[0].mxu0 %v585
        %v793 = vpop.f32.mrb[0].mxu0
        %v794 = vadd.f32 %v376, %v793
        %v795 = vpop.f32.mrb[0].mxu0
        %v796 = vpop.f32.mrb[0].mxu0
        %v797 = vadd.f32 %v376, %v796
        %v798 = vpop.f32.mrb[0].mxu0
        %799 = vmatprep.mubr.bf16.mxu0 0
        %800 = vmatmul.mubr.bf16.gmra.mrb[0].mxu0 %v588
        %v801 = vpop.f32.mrb[0].mxu0
        %v802 = vadd.f32 %v376, %v801
        %v803 = vpop.f32.mrb[0].mxu0
        %v804 = vpop.f32.mrb[0].mxu0
        %v805 = vadd.f32 %v376, %v804
        %v806 = vpop.f32.mrb[0].mxu0
        %807 = vmatprep.mubr.bf16.mxu0 0
        %808 = vmatmul.mubr.bf16.gmra.mrb[0].mxu0 %v591
        %v809 = vpop.f32.mrb[0].mxu0
        %v810 = vadd.f32 %v376, %v809
        %v811 = vpop.f32.mrb[0].mxu0
        %v812 = vpop.f32.mrb[0].mxu0
        %v813 = vadd.f32 %v376, %v812
        %v814 = vpop.f32.mrb[0].mxu0
        %815 = vmatprep.mubr.bf16.mxu0 0
        %816 = vmatmul.mubr.bf16.gmra.mrb[0].mxu0 %v594
        %v817 = vpop.f32.mrb[0].mxu0
        %v818 = vadd.f32 %v376, %v817
        %v819 = vpop.f32.mrb[0].mxu0
        %v820 = vpop.f32.mrb[0].mxu0
        %v821 = vadd.f32 %v376, %v820
        %v822 = vpop.f32.mrb[0].mxu0
        %823 = vmatprep.mubr.bf16.mxu0 0
        %824 = vmatmul.mubr.bf16.gmra.mrb[0].mxu0 %v597
        %v825 = vpop.f32.mrb[0].mxu0
        %v826 = vadd.f32 %v376, %v825
        %v827 = vpop.f32.mrb[0].mxu0
        %v828 = vpop.f32.mrb[0].mxu0
        %v829 = vadd.f32 %v376, %v828
        %v830 = vpop.f32.mrb[0].mxu0
        %831 = vmatprep.mubr.bf16.mxu0 0
        %832 = vmatmul.mubr.bf16.gmra.mrb[0].mxu0 %v600
        %v833 = vpop.f32.mrb[0].mxu0
        %v834 = vadd.f32 %v376, %v833
        %v835 = vpop.f32.mrb[0].mxu0
        %v836 = vpop.f32.mrb[0].mxu0
        %v837 = vadd.f32 %v376, %v836
        %v838 = vpop.f32.mrb[0].mxu0
        %839 = vmatprep.mubr.bf16.mxu0 0
        %840 = vmatmul.mubr.bf16.gmra.mrb[0].mxu0 %v603
        %v841 = vpop.f32.mrb[0].mxu0
        %v842 = vadd.f32 %v376, %v841
        %v843 = vpop.f32.mrb[0].mxu0
        %v844 = vpop.f32.mrb[0].mxu0
        %v845 = vadd.f32 %v376, %v844
        %v846 = vpop.f32.mrb[0].mxu0
        %847 = vmatprep.mubr.bf16.mxu0 0
        %848 = vmatmul.mubr.bf16.gmra.mrb[0].mxu0 %v606
        %v849 = vpop.f32.mrb[0].mxu0
        %v850 = vadd.f32 %v376, %v849
        %v851 = vpop.f32.mrb[0].mxu0
        %v852 = vpop.f32.mrb[0].mxu0
        %v853 = vadd.f32 %v376, %v852
        %v854 = vpop.f32.mrb[0].mxu0
        %855 = vmatprep.mubr.bf16.mxu0 0
        %856 = vmatmul.mubr.bf16.gmra.mrb[0].mxu0 %v609
        %v857 = vpop.f32.mrb[0].mxu0
        %v858 = vadd.f32 %v376, %v857
        %v859 = vpop.f32.mrb[0].mxu0
        %v860 = vpop.f32.mrb[0].mxu0
        %v861 = vadd.f32 %v376, %v860
        %v862 = vpop.f32.mrb[0].mxu0
        %863 = vmatprep.mubr.bf16.mxu0 0
        %864 = vmatmul.mubr.bf16.gmra.mrb[0].mxu0 %v612
        %v865 = vpop.f32.mrb[0].mxu0
        %v866 = vadd.f32 %v376, %v865
        %v867 = vpop.f32.mrb[0].mxu0
        %v868 = vpop.f32.mrb[0].mxu0
        %v869 = vadd.f32 %v376, %v868
        %v870 = vpop.f32.mrb[0].mxu0
        %871 = vmatprep.mubr.bf16.mxu0 0
        %872 = vmatmul.mubr.bf16.gmra.mrb[0].mxu0 %v615
        %v873 = vpop.f32.mrb[0].mxu0
        %v874 = vadd.f32 %v376, %v873
        %v875 = vpop.f32.mrb[0].mxu0
        %v876 = vpop.f32.mrb[0].mxu0
        %v877 = vadd.f32 %v376, %v876
        %v878 = vpop.f32.mrb[0].mxu0
        %879 = vmatprep.mubr.bf16.mxu0 0
        %880 = vmatmul.mubr.bf16.gmra.mrb[0].mxu0 %v618
        %v881 = vpop.f32.mrb[0].mxu0
        %v882 = vadd.f32 %v376, %v881
        %v883 = vpop.f32.mrb[0].mxu0
        %v884 = vpop.f32.mrb[0].mxu0
        %v885 = vadd.f32 %v376, %v884
        %v886 = vpop.f32.mrb[0].mxu0
        %887 = vmatprep.mubr.bf16.mxu0 0
        %888 = vmatmul.mubr.bf16.gmra.mrb[0].mxu0 %v621
        %v889 = vpop.f32.mrb[0].mxu0
        %v890 = vadd.f32 %v376, %v889
        %v891 = vpop.f32.mrb[0].mxu0
        %v892 = vpop.f32.mrb[0].mxu0
        %v893 = vadd.f32 %v376, %v892
        %v894 = vpop.f32.mrb[0].mxu0
        %895 = vmatprep.mubr.bf16.mxu0 0
        %896 = vmatmul.mubr.bf16.gmra.mrb[0].mxu0 %v624
        %v897 = vpop.f32.mrb[0].mxu0
        %v898 = vadd.f32 %v376, %v897
        %v899 = vpop.f32.mrb[0].mxu0
        %v900 = vpop.f32.mrb[0].mxu0
        %v901 = vadd.f32 %v376, %v900
        %v902 = vpop.f32.mrb[0].mxu0
        %903 = vmatprep.mubr.bf16.mxu0 0
        %904 = vmatmul.mubr.bf16.gmra.mrb[0].mxu0 %v627
        %v905 = vpop.f32.mrb[0].mxu0
        %v906 = vadd.f32 %v376, %v905
        %v907 = vpop.f32.mrb[0].mxu0
        %v908 = vpop.f32.mrb[0].mxu0
        %v909 = vadd.f32 %v376, %v908
        %v910 = vpop.f32.mrb[0].mxu0
        %911 = vmatprep.mubr.bf16.mxu0 0
        %912 = vmatmul.mubr.bf16.gmra.mrb[0].mxu0 %v630
        %v913 = vpop.f32.mrb[0].mxu0
        %v914 = vadd.f32 %v376, %v913
        %v915 = vpop.f32.mrb[0].mxu0
        %v916 = vpop.f32.mrb[0].mxu0
        %v917 = vadd.f32 %v376, %v916
        %v918 = vpop.f32.mrb[0].mxu0
        %919 = vmatprep.mubr.bf16.mxu0 0
        %920 = vmatmul.mubr.bf16.gmra.mrb[0].mxu0 %v633
        %v921 = vpop.f32.mrb[0].mxu0
        %v922 = vadd.f32 %v376, %v921
        %v923 = vpop.f32.mrb[0].mxu0
        %v924 = vpop.f32.mrb[0].mxu0
        %v925 = vadd.f32 %v376, %v924
        %v926 = vpop.f32.mrb[0].mxu0
        %927 = vdwg.mxu0
        %v928 = vmax.f32 %v674, 0.0
        %v929 = vmax.f32 %v677, 0.0
        %v930 = vmax.f32 %v682, 0.0
        %v931 = vmax.f32 %v685, 0.0
        %v932 = vmax.f32 %v690, 0.0
        %v933 = vmax.f32 %v693, 0.0
        %v934 = vmax.f32 %v698, 0.0
        %v935 = vmax.f32 %v701, 0.0
        %v936 = vmax.f32 %v706, 0.0
        %v937 = vmax.f32 %v709, 0.0
        %v938 = vmax.f32 %v714, 0.0
        %v939 = vmax.f32 %v717, 0.0
        %v940 = vmax.f32 %v722, 0.0
        %v941 = vmax.f32 %v725, 0.0
        %v942 = vmax.f32 %v730, 0.0
        %v943 = vmax.f32 %v733, 0.0
        %v944 = vmax.f32 %v738, 0.0
        %v945 = vmax.f32 %v741, 0.0
        %v946 = vmax.f32 %v746, 0.0
        %v947 = vmax.f32 %v749, 0.0
        %v948 = vmax.f32 %v754, 0.0
        %v949 = vmax.f32 %v757, 0.0
        %v950 = vmax.f32 %v762, 0.0
        %v951 = vmax.f32 %v765, 0.0
        %v952 = vmax.f32 %v770, 0.0
        %v953 = vmax.f32 %v773, 0.0
        %v954 = vmax.f32 %v778, 0.0
        %v955 = vmax.f32 %v781, 0.0
        %v956 = vmax.f32 %v786, 0.0
        %v957 = vmax.f32 %v789, 0.0
        %v958 = vmax.f32 %v794, 0.0
        %v959 = vmax.f32 %v797, 0.0
        %v960 = vmax.f32 %v802, 0.0
        %v961 = vmax.f32 %v805, 0.0
        %v962 = vmax.f32 %v810, 0.0
        %v963 = vmax.f32 %v813, 0.0
        %v964 = vmax.f32 %v818, 0.0
        %v965 = vmax.f32 %v821, 0.0
        %v966 = vmax.f32 %v826, 0.0
        %v967 = vmax.f32 %v829, 0.0
        %v968 = vmax.f32 %v834, 0.0
        %v969 = vmax.f32 %v837, 0.0
        %v970 = vmax.f32 %v842, 0.0
        %v971 = vmax.f32 %v845, 0.0
        %v972 = vmax.f32 %v850, 0.0
        %v973 = vmax.f32 %v853, 0.0
        %v974 = vmax.f32 %v858, 0.0
        %v975 = vmax.f32 %v861, 0.0
        %v976 = vmax.f32 %v866, 0.0
        %v977 = vmax.f32 %v869, 0.0
        %v978 = vmax.f32 %v874, 0.0
        %v979 = vmax.f32 %v877, 0.0
        %v980 = vmax.f32 %v882, 0.0
        %v981 = vmax.f32 %v885, 0.0
        %v982 = vmax.f32 %v890, 0.0
        %v983 = vmax.f32 %v893, 0.0
        %v984 = vmax.f32 %v898, 0.0
        %v985 = vmax.f32 %v901, 0.0
        %v986 = vmax.f32 %v906, 0.0
        %v987 = vmax.f32 %v909, 0.0
        %v988 = vmax.f32 %v914, 0.0
        %v989 = vmax.f32 %v917, 0.0
        %v990 = vmax.f32 %v922, 0.0
        %v991 = vmax.f32 %v925, 0.0
        %v992 = vpack.c.bf16 %v929, %v928
        %v993 = vpack.c.bf16 %v931, %v930
        %v994 = vpack.c.bf16 %v933, %v932
        %v995 = vpack.c.bf16 %v935, %v934
        %v996 = vpack.c.bf16 %v937, %v936
        %v997 = vpack.c.bf16 %v939, %v938
        %v998 = vpack.c.bf16 %v941, %v940
        %v999 = vpack.c.bf16 %v943, %v942
        %v1000 = vpack.c.bf16 %v945, %v944
        %v1001 = vpack.c.bf16 %v947, %v946
        %v1002 = vpack.c.bf16 %v949, %v948
        %v1003 = vpack.c.bf16 %v951, %v950
        %v1004 = vpack.c.bf16 %v953, %v952
        %v1005 = vpack.c.bf16 %v955, %v954
        %v1006 = vpack.c.bf16 %v957, %v956
        %v1007 = vpack.c.bf16 %v959, %v958
        %v1008 = vpack.c.bf16 %v961, %v960
        %v1009 = vpack.c.bf16 %v963, %v962
        %v1010 = vpack.c.bf16 %v965, %v964
        %v1011 = vpack.c.bf16 %v967, %v966
        %v1012 = vpack.c.bf16 %v969, %v968
        %v1013 = vpack.c.bf16 %v971, %v970
        %v1014 = vpack.c.bf16 %v973, %v972
        %v1015 = vpack.c.bf16 %v975, %v974
        %v1016 = vpack.c.bf16 %v977, %v976
        %v1017 = vpack.c.bf16 %v979, %v978
        %v1018 = vpack.c.bf16 %v981, %v980
        %v1019 = vpack.c.bf16 %v983, %v982
        %v1020 = vpack.c.bf16 %v985, %v984
        %v1021 = vpack.c.bf16 %v987, %v986
        %v1022 = vpack.c.bf16 %v989, %v988
        %v1023 = vpack.c.bf16 %v991, %v990
        %v1024 = vld [vmem:[%s3] sm:$0xf]
        %v1025 = vld [vmem:[%s3 + $0x4] sm:$0xf]
        %v1026 = vld [vmem:[%s3 + $0x8] sm:$0xf]
        %v1027 = vld [vmem:[%s3 + $0xc] sm:$0xf]
        %v1028 = vld [vmem:[%s3 + $0x10] sm:$0xf]
        %v1029 = vld [vmem:[%s3 + $0x14] sm:$0xf]
        %v1030 = vld [vmem:[%s3 + $0x18] sm:$0xf]
        %v1031 = vld [vmem:[%s3 + $0x1c] sm:$0xf]
        %v1032 = vld [vmem:[%s4] sm:$0x1]
        %v1034 = vlaneseq
        %v1035 = vshrl.u32 %v1034, 7
        %v1036 = vsub.s32 0, %v1035
        %v1037 = vrot.slane %v1032, %v1036
        %v1047 = vunpack.c.l.b16 %v1024
        %v1048 = vunpack.c.l.b16 %v1025
        %v1049 = vunpack.c.l.b16 %v1026
        %v1050 = vunpack.c.l.b16 %v1027
        %v1051 = vunpack.c.l.b16 %v1028
        %v1052 = vunpack.c.l.b16 %v1029
        %v1053 = vunpack.c.l.b16 %v1030
        %v1054 = vunpack.c.l.b16 %v1031
        %v1055 = vpack.c.b16 %v1048, %v1047
        %v1056 = vpack.c.b16 %v1050, %v1049
        %v1057 = vpack.c.b16 %v1052, %v1051
        %v1058 = vpack.c.b16 %v1054, %v1053
        %vm1063 = vcmask 523264
        %v1065 = vsel %vm1063, %v992, 0
        %v1068 = vsel %vm1063, %v993, 0
        %v1071 = vsel %vm1063, %v994, 0
        %v1074 = vsel %vm1063, %v995, 0
        %v1077 = vsel %vm1063, %v996, 0
        %v1080 = vsel %vm1063, %v997, 0
        %v1083 = vsel %vm1063, %v998, 0
        %v1086 = vsel %vm1063, %v999, 0
        %v1089 = vsel %vm1063, %v1000, 0
        %v1092 = vsel %vm1063, %v1001, 0
        %v1095 = vsel %vm1063, %v1002, 0
        %v1098 = vsel %vm1063, %v1003, 0
        %v1101 = vsel %vm1063, %v1004, 0
        %v1104 = vsel %vm1063, %v1005, 0
        %v1107 = vsel %vm1063, %v1006, 0
        %v1110 = vsel %vm1063, %v1007, 0
        %v1113 = vsel %vm1063, %v1008, 0
        %v1116 = vsel %vm1063, %v1009, 0
        %v1119 = vsel %vm1063, %v1010, 0
        %v1122 = vsel %vm1063, %v1011, 0
        %v1125 = vsel %vm1063, %v1012, 0
        %v1128 = vsel %vm1063, %v1013, 0
        %v1131 = vsel %vm1063, %v1014, 0
        %v1134 = vsel %vm1063, %v1015, 0
        %v1137 = vsel %vm1063, %v1016, 0
        %v1140 = vsel %vm1063, %v1017, 0
        %v1143 = vsel %vm1063, %v1018, 0
        %v1146 = vsel %vm1063, %v1019, 0
        %v1149 = vsel %vm1063, %v1020, 0
        %v1152 = vsel %vm1063, %v1021, 0
        %v1155 = vsel %vm1063, %v1022, 0
        %v1158 = vsel %vm1063, %v1023, 0
        %1160 = vmatprep.subr.bf16.mxu0 0
        %1161 = vmatpush1.bf16.msra.mxu0 %v1055
        %1162 = vmatprep.subr.bf16.mxu0 0
        %1163 = vmatpush1.bf16.msra.mxu0 %v1056
        %1164 = vmatprep.subr.bf16.mxu0 0
        %1165 = vmatpush1.bf16.msra.mxu0 %v1057
        %1166 = vmatprep.subr.bf16.mxu0 0
        %1167 = vmatpush1.bf16.msra.mxu0 %v1058
        %1168 = vmatprep.subr.bf16.mxu0 0
        %1169 = vmatpush1.bf16.msra.mxu0 0
        %1170 = vmatprep.subr.bf16.mxu0 0
        %1171 = vmatpush1.bf16.msra.mxu0 0
        %1172 = vmatprep.subr.bf16.mxu0 0
        %1173 = vmatpush1.bf16.msra.mxu0 0
        %1174 = vmatprep.subr.bf16.mxu0 0
        %1175 = vmatpush1.bf16.msra.mxu0 0
        %1176 = vmatprep.subr.bf16.mxu0 0
        %1177 = vmatpush1.bf16.msra.mxu0 0
        %1178 = vmatprep.subr.bf16.mxu0 0
        %1179 = vmatpush1.bf16.msra.mxu0 0
        %1180 = vmatprep.subr.bf16.mxu0 0
        %1181 = vmatpush1.bf16.msra.mxu0 0
        %1182 = vmatprep.subr.bf16.mxu0 0
        %1183 = vmatpush1.bf16.msra.mxu0 0
        %1184 = vmatprep.subr.bf16.mxu0 0
        %1185 = vmatpush1.bf16.msra.mxu0 0
        %1186 = vmatprep.subr.bf16.mxu0 0
        %1187 = vmatpush1.bf16.msra.mxu0 0
        %1188 = vmatprep.subr.bf16.mxu0 0
        %1189 = vmatpush1.bf16.msra.mxu0 0
        %1190 = vmatprep.subr.bf16.mxu0 0
        %1191 = vmatpush1.bf16.msra.mxu0 0
        %1192 = vmatprep.mubr.bf16.mxu0 0
        %1193 = vmatmul.mubr.bf16.gmra.mrb[0].mxu0 %v1065
        %v1194 = vpop.f32.mrb[0].mxu0
        %v1195 = vadd.f32 %v1037, %v1194
        %v1196 = vpop.f32.mrb[0].mxu0
        %v1197 = vpop.f32.mrb[0].mxu0
        %v1198 = vadd.f32 %v1037, %v1197
        %v1199 = vpop.f32.mrb[0].mxu0
        %1200 = vmatprep.mubr.bf16.mxu0 0
        %1201 = vmatmul.mubr.bf16.gmra.mrb[0].mxu0 %v1068
        %v1202 = vpop.f32.mrb[0].mxu0
        %v1203 = vadd.f32 %v1037, %v1202
        %v1204 = vpop.f32.mrb[0].mxu0
        %v1205 = vpop.f32.mrb[0].mxu0
        %v1206 = vadd.f32 %v1037, %v1205
        %v1207 = vpop.f32.mrb[0].mxu0
        %1208 = vmatprep.mubr.bf16.mxu0 0
        %1209 = vmatmul.mubr.bf16.gmra.mrb[0].mxu0 %v1071
        %v1210 = vpop.f32.mrb[0].mxu0
        %v1211 = vadd.f32 %v1037, %v1210
        %v1212 = vpop.f32.mrb[0].mxu0
        %v1213 = vpop.f32.mrb[0].mxu0
        %v1214 = vadd.f32 %v1037, %v1213
        %v1215 = vpop.f32.mrb[0].mxu0
        %1216 = vmatprep.mubr.bf16.mxu0 0
        %1217 = vmatmul.mubr.bf16.gmra.mrb[0].mxu0 %v1074
        %v1218 = vpop.f32.mrb[0].mxu0
        %v1219 = vadd.f32 %v1037, %v1218
        %v1220 = vpop.f32.mrb[0].mxu0
        %v1221 = vpop.f32.mrb[0].mxu0
        %v1222 = vadd.f32 %v1037, %v1221
        %v1223 = vpop.f32.mrb[0].mxu0
        %1224 = vmatprep.mubr.bf16.mxu0 0
        %1225 = vmatmul.mubr.bf16.gmra.mrb[0].mxu0 %v1077
        %v1226 = vpop.f32.mrb[0].mxu0
        %v1227 = vadd.f32 %v1037, %v1226
        %v1228 = vpop.f32.mrb[0].mxu0
        %v1229 = vpop.f32.mrb[0].mxu0
        %v1230 = vadd.f32 %v1037, %v1229
        %v1231 = vpop.f32.mrb[0].mxu0
        %1232 = vmatprep.mubr.bf16.mxu0 0
        %1233 = vmatmul.mubr.bf16.gmra.mrb[0].mxu0 %v1080
        %v1234 = vpop.f32.mrb[0].mxu0
        %v1235 = vadd.f32 %v1037, %v1234
        %v1236 = vpop.f32.mrb[0].mxu0
        %v1237 = vpop.f32.mrb[0].mxu0
        %v1238 = vadd.f32 %v1037, %v1237
        %v1239 = vpop.f32.mrb[0].mxu0
        %1240 = vmatprep.mubr.bf16.mxu0 0
        %1241 = vmatmul.mubr.bf16.gmra.mrb[0].mxu0 %v1083
        %v1242 = vpop.f32.mrb[0].mxu0
        %v1243 = vadd.f32 %v1037, %v1242
        %v1244 = vpop.f32.mrb[0].mxu0
        %v1245 = vpop.f32.mrb[0].mxu0
        %v1246 = vadd.f32 %v1037, %v1245
        %v1247 = vpop.f32.mrb[0].mxu0
        %1248 = vmatprep.mubr.bf16.mxu0 0
        %1249 = vmatmul.mubr.bf16.gmra.mrb[0].mxu0 %v1086
        %v1250 = vpop.f32.mrb[0].mxu0
        %v1251 = vadd.f32 %v1037, %v1250
        %v1252 = vpop.f32.mrb[0].mxu0
        %v1253 = vpop.f32.mrb[0].mxu0
        %v1254 = vadd.f32 %v1037, %v1253
        %v1255 = vpop.f32.mrb[0].mxu0
        %1256 = vmatprep.mubr.bf16.mxu0 0
        %1257 = vmatmul.mubr.bf16.gmra.mrb[0].mxu0 %v1089
        %v1258 = vpop.f32.mrb[0].mxu0
        %v1259 = vadd.f32 %v1037, %v1258
        %v1260 = vpop.f32.mrb[0].mxu0
        %v1261 = vpop.f32.mrb[0].mxu0
        %v1262 = vadd.f32 %v1037, %v1261
        %v1263 = vpop.f32.mrb[0].mxu0
        %1264 = vmatprep.mubr.bf16.mxu0 0
        %1265 = vmatmul.mubr.bf16.gmra.mrb[0].mxu0 %v1092
        %v1266 = vpop.f32.mrb[0].mxu0
        %v1267 = vadd.f32 %v1037, %v1266
        %v1268 = vpop.f32.mrb[0].mxu0
        %v1269 = vpop.f32.mrb[0].mxu0
        %v1270 = vadd.f32 %v1037, %v1269
        %v1271 = vpop.f32.mrb[0].mxu0
        %1272 = vmatprep.mubr.bf16.mxu0 0
        %1273 = vmatmul.mubr.bf16.gmra.mrb[0].mxu0 %v1095
        %v1274 = vpop.f32.mrb[0].mxu0
        %v1275 = vadd.f32 %v1037, %v1274
        %v1276 = vpop.f32.mrb[0].mxu0
        %v1277 = vpop.f32.mrb[0].mxu0
        %v1278 = vadd.f32 %v1037, %v1277
        %v1279 = vpop.f32.mrb[0].mxu0
        %1280 = vmatprep.mubr.bf16.mxu0 0
        %1281 = vmatmul.mubr.bf16.gmra.mrb[0].mxu0 %v1098
        %v1282 = vpop.f32.mrb[0].mxu0
        %v1283 = vadd.f32 %v1037, %v1282
        %v1284 = vpop.f32.mrb[0].mxu0
        %v1285 = vpop.f32.mrb[0].mxu0
        %v1286 = vadd.f32 %v1037, %v1285
        %v1287 = vpop.f32.mrb[0].mxu0
        %1288 = vmatprep.mubr.bf16.mxu0 0
        %1289 = vmatmul.mubr.bf16.gmra.mrb[0].mxu0 %v1101
        %v1290 = vpop.f32.mrb[0].mxu0
        %v1291 = vadd.f32 %v1037, %v1290
        %v1292 = vpop.f32.mrb[0].mxu0
        %v1293 = vpop.f32.mrb[0].mxu0
        %v1294 = vadd.f32 %v1037, %v1293
        %v1295 = vpop.f32.mrb[0].mxu0
        %1296 = vmatprep.mubr.bf16.mxu0 0
        %1297 = vmatmul.mubr.bf16.gmra.mrb[0].mxu0 %v1104
        %v1298 = vpop.f32.mrb[0].mxu0
        %v1299 = vadd.f32 %v1037, %v1298
        %v1300 = vpop.f32.mrb[0].mxu0
        %v1301 = vpop.f32.mrb[0].mxu0
        %v1302 = vadd.f32 %v1037, %v1301
        %v1303 = vpop.f32.mrb[0].mxu0
        %1304 = vmatprep.mubr.bf16.mxu0 0
        %1305 = vmatmul.mubr.bf16.gmra.mrb[0].mxu0 %v1107
        %v1306 = vpop.f32.mrb[0].mxu0
        %v1307 = vadd.f32 %v1037, %v1306
        %v1308 = vpop.f32.mrb[0].mxu0
        %v1309 = vpop.f32.mrb[0].mxu0
        %v1310 = vadd.f32 %v1037, %v1309
        %v1311 = vpop.f32.mrb[0].mxu0
        %1312 = vmatprep.mubr.bf16.mxu0 0
        %1313 = vmatmul.mubr.bf16.gmra.mrb[0].mxu0 %v1110
        %v1314 = vpop.f32.mrb[0].mxu0
        %v1315 = vadd.f32 %v1037, %v1314
        %v1316 = vpop.f32.mrb[0].mxu0
        %v1317 = vpop.f32.mrb[0].mxu0
        %v1318 = vadd.f32 %v1037, %v1317
        %v1319 = vpop.f32.mrb[0].mxu0
        %1320 = vmatprep.mubr.bf16.mxu0 0
        %1321 = vmatmul.mubr.bf16.gmra.mrb[0].mxu0 %v1113
        %v1322 = vpop.f32.mrb[0].mxu0
        %v1323 = vadd.f32 %v1037, %v1322
        %v1324 = vpop.f32.mrb[0].mxu0
        %v1325 = vpop.f32.mrb[0].mxu0
        %v1326 = vadd.f32 %v1037, %v1325
        %v1327 = vpop.f32.mrb[0].mxu0
        %1328 = vmatprep.mubr.bf16.mxu0 0
        %1329 = vmatmul.mubr.bf16.gmra.mrb[0].mxu0 %v1116
        %v1330 = vpop.f32.mrb[0].mxu0
        %v1331 = vadd.f32 %v1037, %v1330
        %v1332 = vpop.f32.mrb[0].mxu0
        %v1333 = vpop.f32.mrb[0].mxu0
        %v1334 = vadd.f32 %v1037, %v1333
        %v1335 = vpop.f32.mrb[0].mxu0
        %1336 = vmatprep.mubr.bf16.mxu0 0
        %1337 = vmatmul.mubr.bf16.gmra.mrb[0].mxu0 %v1119
        %v1338 = vpop.f32.mrb[0].mxu0
        %v1339 = vadd.f32 %v1037, %v1338
        %v1340 = vpop.f32.mrb[0].mxu0
        %v1341 = vpop.f32.mrb[0].mxu0
        %v1342 = vadd.f32 %v1037, %v1341
        %v1343 = vpop.f32.mrb[0].mxu0
        %1344 = vmatprep.mubr.bf16.mxu0 0
        %1345 = vmatmul.mubr.bf16.gmra.mrb[0].mxu0 %v1122
        %v1346 = vpop.f32.mrb[0].mxu0
        %v1347 = vadd.f32 %v1037, %v1346
        %v1348 = vpop.f32.mrb[0].mxu0
        %v1349 = vpop.f32.mrb[0].mxu0
        %v1350 = vadd.f32 %v1037, %v1349
        %v1351 = vpop.f32.mrb[0].mxu0
        %1352 = vmatprep.mubr.bf16.mxu0 0
        %1353 = vmatmul.mubr.bf16.gmra.mrb[0].mxu0 %v1125
        %v1354 = vpop.f32.mrb[0].mxu0
        %v1355 = vadd.f32 %v1037, %v1354
        %v1356 = vpop.f32.mrb[0].mxu0
        %v1357 = vpop.f32.mrb[0].mxu0
        %v1358 = vadd.f32 %v1037, %v1357
        %v1359 = vpop.f32.mrb[0].mxu0
        %1360 = vmatprep.mubr.bf16.mxu0 0
        %1361 = vmatmul.mubr.bf16.gmra.mrb[0].mxu0 %v1128
        %v1362 = vpop.f32.mrb[0].mxu0
        %v1363 = vadd.f32 %v1037, %v1362
        %v1364 = vpop.f32.mrb[0].mxu0
        %v1365 = vpop.f32.mrb[0].mxu0
        %v1366 = vadd.f32 %v1037, %v1365
        %v1367 = vpop.f32.mrb[0].mxu0
        %1368 = vmatprep.mubr.bf16.mxu0 0
        %1369 = vmatmul.mubr.bf16.gmra.mrb[0].mxu0 %v1131
        %v1370 = vpop.f32.mrb[0].mxu0
        %v1371 = vadd.f32 %v1037, %v1370
        %v1372 = vpop.f32.mrb[0].mxu0
        %v1373 = vpop.f32.mrb[0].mxu0
        %v1374 = vadd.f32 %v1037, %v1373
        %v1375 = vpop.f32.mrb[0].mxu0
        %1376 = vmatprep.mubr.bf16.mxu0 0
        %1377 = vmatmul.mubr.bf16.gmra.mrb[0].mxu0 %v1134
        %v1378 = vpop.f32.mrb[0].mxu0
        %v1379 = vadd.f32 %v1037, %v1378
        %v1380 = vpop.f32.mrb[0].mxu0
        %v1381 = vpop.f32.mrb[0].mxu0
        %v1382 = vadd.f32 %v1037, %v1381
        %v1383 = vpop.f32.mrb[0].mxu0
        %1384 = vmatprep.mubr.bf16.mxu0 0
        %1385 = vmatmul.mubr.bf16.gmra.mrb[0].mxu0 %v1137
        %v1386 = vpop.f32.mrb[0].mxu0
        %v1387 = vadd.f32 %v1037, %v1386
        %v1388 = vpop.f32.mrb[0].mxu0
        %v1389 = vpop.f32.mrb[0].mxu0
        %v1390 = vadd.f32 %v1037, %v1389
        %v1391 = vpop.f32.mrb[0].mxu0
        %1392 = vmatprep.mubr.bf16.mxu0 0
        %1393 = vmatmul.mubr.bf16.gmra.mrb[0].mxu0 %v1140
        %v1394 = vpop.f32.mrb[0].mxu0
        %v1395 = vadd.f32 %v1037, %v1394
        %v1396 = vpop.f32.mrb[0].mxu0
        %v1397 = vpop.f32.mrb[0].mxu0
        %v1398 = vadd.f32 %v1037, %v1397
        %v1399 = vpop.f32.mrb[0].mxu0
        %1400 = vmatprep.mubr.bf16.mxu0 0
        %1401 = vmatmul.mubr.bf16.gmra.mrb[0].mxu0 %v1143
        %v1402 = vpop.f32.mrb[0].mxu0
        %v1403 = vadd.f32 %v1037, %v1402
        %v1404 = vpop.f32.mrb[0].mxu0
        %v1405 = vpop.f32.mrb[0].mxu0
        %v1406 = vadd.f32 %v1037, %v1405
        %v1407 = vpop.f32.mrb[0].mxu0
        %1408 = vmatprep.mubr.bf16.mxu0 0
        %1409 = vmatmul.mubr.bf16.gmra.mrb[0].mxu0 %v1146
        %v1410 = vpop.f32.mrb[0].mxu0
        %v1411 = vadd.f32 %v1037, %v1410
        %v1412 = vpop.f32.mrb[0].mxu0
        %v1413 = vpop.f32.mrb[0].mxu0
        %v1414 = vadd.f32 %v1037, %v1413
        %v1415 = vpop.f32.mrb[0].mxu0
        %1416 = vmatprep.mubr.bf16.mxu0 0
        %1417 = vmatmul.mubr.bf16.gmra.mrb[0].mxu0 %v1149
        %v1418 = vpop.f32.mrb[0].mxu0
        %v1419 = vadd.f32 %v1037, %v1418
        %v1420 = vpop.f32.mrb[0].mxu0
        %v1421 = vpop.f32.mrb[0].mxu0
        %v1422 = vadd.f32 %v1037, %v1421
        %v1423 = vpop.f32.mrb[0].mxu0
        %1424 = vmatprep.mubr.bf16.mxu0 0
        %1425 = vmatmul.mubr.bf16.gmra.mrb[0].mxu0 %v1152
        %v1426 = vpop.f32.mrb[0].mxu0
        %v1427 = vadd.f32 %v1037, %v1426
        %v1428 = vpop.f32.mrb[0].mxu0
        %v1429 = vpop.f32.mrb[0].mxu0
        %v1430 = vadd.f32 %v1037, %v1429
        %v1431 = vpop.f32.mrb[0].mxu0
        %1432 = vmatprep.mubr.bf16.mxu0 0
        %1433 = vmatmul.mubr.bf16.gmra.mrb[0].mxu0 %v1155
        %v1434 = vpop.f32.mrb[0].mxu0
        %v1435 = vadd.f32 %v1037, %v1434
        %v1436 = vpop.f32.mrb[0].mxu0
        %v1437 = vpop.f32.mrb[0].mxu0
        %v1438 = vadd.f32 %v1037, %v1437
        %v1439 = vpop.f32.mrb[0].mxu0
        %1440 = vmatprep.mubr.bf16.mxu0 0
        %1441 = vmatmul.mubr.bf16.gmra.mrb[0].mxu0 %v1158
        %v1442 = vpop.f32.mrb[0].mxu0
        %v1443 = vadd.f32 %v1037, %v1442
        %v1444 = vpop.f32.mrb[0].mxu0
        %v1445 = vpop.f32.mrb[0].mxu0
        %v1446 = vadd.f32 %v1037, %v1445
        %v1447 = vpop.f32.mrb[0].mxu0
        %1448 = vdwg.mxu0
        %v1449 = vmax.f32 %v1195, 0.0
        %v1450 = vmax.f32 %v1198, 0.0
        %v1451 = vmax.f32 %v1203, 0.0
        %v1452 = vmax.f32 %v1206, 0.0
        %v1453 = vmax.f32 %v1211, 0.0
        %v1454 = vmax.f32 %v1214, 0.0
        %v1455 = vmax.f32 %v1219, 0.0
        %v1456 = vmax.f32 %v1222, 0.0
        %v1457 = vmax.f32 %v1227, 0.0
        %v1458 = vmax.f32 %v1230, 0.0
        %v1459 = vmax.f32 %v1235, 0.0
        %v1460 = vmax.f32 %v1238, 0.0
        %v1461 = vmax.f32 %v1243, 0.0
        %v1462 = vmax.f32 %v1246, 0.0
        %v1463 = vmax.f32 %v1251, 0.0
        %v1464 = vmax.f32 %v1254, 0.0
        %v1465 = vmax.f32 %v1259, 0.0
        %v1466 = vmax.f32 %v1262, 0.0
        %v1467 = vmax.f32 %v1267, 0.0
        %v1468 = vmax.f32 %v1270, 0.0
        %v1469 = vmax.f32 %v1275, 0.0
        %v1470 = vmax.f32 %v1278, 0.0
        %v1471 = vmax.f32 %v1283, 0.0
        %v1472 = vmax.f32 %v1286, 0.0
        %v1473 = vmax.f32 %v1291, 0.0
        %v1474 = vmax.f32 %v1294, 0.0
        %v1475 = vmax.f32 %v1299, 0.0
        %v1476 = vmax.f32 %v1302, 0.0
        %v1477 = vmax.f32 %v1307, 0.0
        %v1478 = vmax.f32 %v1310, 0.0
        %v1479 = vmax.f32 %v1315, 0.0
        %v1480 = vmax.f32 %v1318, 0.0
        %v1481 = vmax.f32 %v1323, 0.0
        %v1482 = vmax.f32 %v1326, 0.0
        %v1483 = vmax.f32 %v1331, 0.0
        %v1484 = vmax.f32 %v1334, 0.0
        %v1485 = vmax.f32 %v1339, 0.0
        %v1486 = vmax.f32 %v1342, 0.0
        %v1487 = vmax.f32 %v1347, 0.0
        %v1488 = vmax.f32 %v1350, 0.0
        %v1489 = vmax.f32 %v1355, 0.0
        %v1490 = vmax.f32 %v1358, 0.0
        %v1491 = vmax.f32 %v1363, 0.0
        %v1492 = vmax.f32 %v1366, 0.0
        %v1493 = vmax.f32 %v1371, 0.0
        %v1494 = vmax.f32 %v1374, 0.0
        %v1495 = vmax.f32 %v1379, 0.0
        %v1496 = vmax.f32 %v1382, 0.0
        %v1497 = vmax.f32 %v1387, 0.0
        %v1498 = vmax.f32 %v1390, 0.0
        %v1499 = vmax.f32 %v1395, 0.0
        %v1500 = vmax.f32 %v1398, 0.0
        %v1501 = vmax.f32 %v1403, 0.0
        %v1502 = vmax.f32 %v1406, 0.0
        %v1503 = vmax.f32 %v1411, 0.0
        %v1504 = vmax.f32 %v1414, 0.0
        %v1505 = vmax.f32 %v1419, 0.0
        %v1506 = vmax.f32 %v1422, 0.0
        %v1507 = vmax.f32 %v1427, 0.0
        %v1508 = vmax.f32 %v1430, 0.0
        %v1509 = vmax.f32 %v1435, 0.0
        %v1510 = vmax.f32 %v1438, 0.0
        %v1511 = vmax.f32 %v1443, 0.0
        %v1512 = vmax.f32 %v1446, 0.0
        %v1513 = vpack.c.bf16 %v1450, %v1449
        %v1514 = vpack.c.bf16 %v1452, %v1451
        %v1515 = vpack.c.bf16 %v1454, %v1453
        %v1516 = vpack.c.bf16 %v1456, %v1455
        %v1517 = vpack.c.bf16 %v1458, %v1457
        %v1518 = vpack.c.bf16 %v1460, %v1459
        %v1519 = vpack.c.bf16 %v1462, %v1461
        %v1520 = vpack.c.bf16 %v1464, %v1463
        %v1521 = vpack.c.bf16 %v1466, %v1465
        %v1522 = vpack.c.bf16 %v1468, %v1467
        %v1523 = vpack.c.bf16 %v1470, %v1469
        %v1524 = vpack.c.bf16 %v1472, %v1471
        %v1525 = vpack.c.bf16 %v1474, %v1473
        %v1526 = vpack.c.bf16 %v1476, %v1475
        %v1527 = vpack.c.bf16 %v1478, %v1477
        %v1528 = vpack.c.bf16 %v1480, %v1479
        %v1529 = vpack.c.bf16 %v1482, %v1481
        %v1530 = vpack.c.bf16 %v1484, %v1483
        %v1531 = vpack.c.bf16 %v1486, %v1485
        %v1532 = vpack.c.bf16 %v1488, %v1487
        %v1533 = vpack.c.bf16 %v1490, %v1489
        %v1534 = vpack.c.bf16 %v1492, %v1491
        %v1535 = vpack.c.bf16 %v1494, %v1493
        %v1536 = vpack.c.bf16 %v1496, %v1495
        %v1537 = vpack.c.bf16 %v1498, %v1497
        %v1538 = vpack.c.bf16 %v1500, %v1499
        %v1539 = vpack.c.bf16 %v1502, %v1501
        %v1540 = vpack.c.bf16 %v1504, %v1503
        %v1541 = vpack.c.bf16 %v1506, %v1505
        %v1542 = vpack.c.bf16 %v1508, %v1507
        %v1543 = vpack.c.bf16 %v1510, %v1509
        %v1544 = vpack.c.bf16 %v1512, %v1511
        %v1545 = vld [vmem:[%s5] sm:$0xff]
        %v1546 = vld [vmem:[%s5 + $0x8] sm:$0xff]
        %v1547 = vld [vmem:[%s5 + $0x10] sm:$0xff]
        %v1548 = vld [vmem:[%s5 + $0x18] sm:$0xff]
        %v1549 = vld [vmem:[%s5 + $0x20] sm:$0xff]
        %v1550 = vld [vmem:[%s5 + $0x28] sm:$0xff]
        %v1551 = vld [vmem:[%s5 + $0x30] sm:$0xff]
        %v1552 = vld [vmem:[%s5 + $0x38] sm:$0xff]
        %v1553 = vld [vmem:[%s5 + $0x40] sm:$0xff]
        %v1554 = vld [vmem:[%s5 + $0x48] sm:$0xff]
        %v1555 = vld [vmem:[%s5 + $0x50] sm:$0xff]
        %v1556 = vld [vmem:[%s5 + $0x58] sm:$0xff]
        %v1557 = vld [vmem:[%s5 + $0x60] sm:$0xff]
        %v1558 = vld [vmem:[%s5 + $0x68] sm:$0xff]
        %v1559 = vld [vmem:[%s5 + $0x70] sm:$0xff]
        %v1560 = vld [vmem:[%s5 + $0x78] sm:$0xff]
        %v1561 = vld [vmem:[%s5 + $0x80] sm:$0xff]
        %v1562 = vld [vmem:[%s5 + $0x88] sm:$0xff]
        %v1563 = vld [vmem:[%s5 + $0x90] sm:$0xff]
        %v1564 = vld [vmem:[%s5 + $0x98] sm:$0xff]
        %v1565 = vld [vmem:[%s5 + $0xa0] sm:$0xff]
        %v1566 = vld [vmem:[%s5 + $0xa8] sm:$0xff]
        %v1567 = vld [vmem:[%s5 + $0xb0] sm:$0xff]
        %v1568 = vld [vmem:[%s5 + $0xb8] sm:$0xff]
        %v1569 = vld [vmem:[%s5 + $0xc0] sm:$0xff]
        %v1570 = vld [vmem:[%s5 + $0xc8] sm:$0xff]
        %v1571 = vld [vmem:[%s5 + $0xd0] sm:$0xff]
        %v1572 = vld [vmem:[%s5 + $0xd8] sm:$0xff]
        %v1573 = vld [vmem:[%s5 + $0xe0] sm:$0xff]
        %v1574 = vld [vmem:[%s5 + $0xe8] sm:$0xff]
        %v1575 = vld [vmem:[%s5 + $0xf0] sm:$0xff]
        %v1576 = vld [vmem:[%s5 + $0xf8] sm:$0xff]
        %v1577 = vld [vmem:[%s5 + $0x100] sm:$0xff]
        %v1578 = vld [vmem:[%s5 + $0x108] sm:$0xff]
        %v1579 = vld [vmem:[%s5 + $0x110] sm:$0xff]
        %v1580 = vld [vmem:[%s5 + $0x118] sm:$0xff]
        %v1581 = vld [vmem:[%s5 + $0x120] sm:$0xff]
        %v1582 = vld [vmem:[%s5 + $0x128] sm:$0xff]
        %v1583 = vld [vmem:[%s5 + $0x130] sm:$0xff]
        %v1584 = vld [vmem:[%s5 + $0x138] sm:$0xff]
        %v1585 = vld [vmem:[%s5 + $0x140] sm:$0xff]
        %v1586 = vld [vmem:[%s5 + $0x148] sm:$0xff]
        %v1587 = vld [vmem:[%s5 + $0x150] sm:$0xff]
        %v1588 = vld [vmem:[%s5 + $0x158] sm:$0xff]
        %v1589 = vld [vmem:[%s5 + $0x160] sm:$0xff]
        %v1590 = vld [vmem:[%s5 + $0x168] sm:$0xff]
        %v1591 = vld [vmem:[%s5 + $0x170] sm:$0xff]
        %v1592 = vld [vmem:[%s5 + $0x178] sm:$0xff]
        %v1593 = vld [vmem:[%s5 + $0x180] sm:$0xff]
        %v1594 = vld [vmem:[%s5 + $0x188] sm:$0xff]
        %v1595 = vld [vmem:[%s5 + $0x190] sm:$0xff]
        %v1596 = vld [vmem:[%s5 + $0x198] sm:$0xff]
        %v1597 = vld [vmem:[%s5 + $0x1a0] sm:$0xff]
        %v1598 = vld [vmem:[%s5 + $0x1a8] sm:$0xff]
        %v1599 = vld [vmem:[%s5 + $0x1b0] sm:$0xff]
        %v1600 = vld [vmem:[%s5 + $0x1b8] sm:$0xff]
        %v1601 = vld [vmem:[%s5 + $0x1c0] sm:$0xff]
        %v1602 = vld [vmem:[%s5 + $0x1c8] sm:$0xff]
        %v1603 = vld [vmem:[%s5 + $0x1d0] sm:$0xff]
        %v1604 = vld [vmem:[%s5 + $0x1d8] sm:$0xff]
        %v1605 = vld [vmem:[%s5 + $0x1e0] sm:$0xff]
        %v1606 = vld [vmem:[%s5 + $0x1e8] sm:$0xff]
        %v1607 = vld [vmem:[%s5 + $0x1f0] sm:$0xff]
        %v1608 = vld [vmem:[%s5 + $0x1f8] sm:$0xff]
        %v1609 = vld [vmem:[%s6] sm:$0xff]
        %v1611 = vlaneseq
        %v1612 = vshrl.u32 %v1611, 7
        %v1613 = vsub.s32 0, %v1612
        %v1614 = vrot.slane %v1609, %v1613
        %v1615 = vlaneseq
        %v1616 = vshrl.u32 %v1615, 7
        %v1617 = vsub.s32 1, %v1616
        %v1618 = vrot.slane %v1609, %v1617
        %v1619 = vlaneseq
        %v1620 = vshrl.u32 %v1619, 7
        %v1621 = vsub.s32 2, %v1620
        %v1622 = vrot.slane %v1609, %v1621
        %v1623 = vlaneseq
        %v1624 = vshrl.u32 %v1623, 7
        %v1625 = vsub.s32 3, %v1624
        %v1626 = vrot.slane %v1609, %v1625
        %v1627 = vlaneseq
        %v1628 = vshrl.u32 %v1627, 7
        %v1629 = vsub.s32 4, %v1628
        %v1630 = vrot.slane %v1609, %v1629
        %v1631 = vlaneseq
        %v1632 = vshrl.u32 %v1631, 7
        %v1633 = vsub.s32 5, %v1632
        %v1634 = vrot.slane %v1609, %v1633
        %v1635 = vlaneseq
        %v1636 = vshrl.u32 %v1635, 7
        %v1637 = vsub.s32 6, %v1636
        %v1638 = vrot.slane %v1609, %v1637
        %v1639 = vlaneseq
        %v1640 = vshrl.u32 %v1639, 7
        %v1641 = vsub.s32 7, %v1640
        %v1642 = vrot.slane %v1609, %v1641
        %v1715 = vunpack.c.l.b16 %v1545
        %v1716 = vunpack.c.h.b16 %v1545
        %v1717 = vunpack.c.l.b16 %v1546
        %v1718 = vunpack.c.h.b16 %v1546
        %v1719 = vunpack.c.l.b16 %v1547
        %v1720 = vunpack.c.h.b16 %v1547
        %v1721 = vunpack.c.l.b16 %v1548
        %v1722 = vunpack.c.h.b16 %v1548
        %v1723 = vunpack.c.l.b16 %v1549
        %v1724 = vunpack.c.h.b16 %v1549
        %v1725 = vunpack.c.l.b16 %v1550
        %v1726 = vunpack.c.h.b16 %v1550
        %v1727 = vunpack.c.l.b16 %v1551
        %v1728 = vunpack.c.h.b16 %v1551
        %v1729 = vunpack.c.l.b16 %v1552
        %v1730 = vunpack.c.h.b16 %v1552
        %v1731 = vunpack.c.l.b16 %v1553
        %v1732 = vunpack.c.h.b16 %v1553
        %v1733 = vunpack.c.l.b16 %v1554
        %v1734 = vunpack.c.h.b16 %v1554
        %v1735 = vunpack.c.l.b16 %v1555
        %v1736 = vunpack.c.h.b16 %v1555
        %v1737 = vunpack.c.l.b16 %v1556
        %v1738 = vunpack.c.h.b16 %v1556
        %v1739 = vunpack.c.l.b16 %v1557
        %v1740 = vunpack.c.h.b16 %v1557
        %v1741 = vunpack.c.l.b16 %v1558
        %v1742 = vunpack.c.h.b16 %v1558
        %v1743 = vunpack.c.l.b16 %v1559
        %v1744 = vunpack.c.h.b16 %v1559
        %v1745 = vunpack.c.l.b16 %v1560
        %v1746 = vunpack.c.h.b16 %v1560
        %v1747 = vunpack.c.l.b16 %v1561
        %v1748 = vunpack.c.h.b16 %v1561
        %v1749 = vunpack.c.l.b16 %v1562
        %v1750 = vunpack.c.h.b16 %v1562
        %v1751 = vunpack.c.l.b16 %v1563
        %v1752 = vunpack.c.h.b16 %v1563
        %v1753 = vunpack.c.l.b16 %v1564
        %v1754 = vunpack.c.h.b16 %v1564
        %v1755 = vunpack.c.l.b16 %v1565
        %v1756 = vunpack.c.h.b16 %v1565
        %v1757 = vunpack.c.l.b16 %v1566
        %v1758 = vunpack.c.h.b16 %v1566
        %v1759 = vunpack.c.l.b16 %v1567
        %v1760 = vunpack.c.h.b16 %v1567
        %v1761 = vunpack.c.l.b16 %v1568
        %v1762 = vunpack.c.h.b16 %v1568
        %v1763 = vunpack.c.l.b16 %v1569
        %v1764 = vunpack.c.h.b16 %v1569
        %v1765 = vunpack.c.l.b16 %v1570
        %v1766 = vunpack.c.h.b16 %v1570
        %v1767 = vunpack.c.l.b16 %v1571
        %v1768 = vunpack.c.h.b16 %v1571
        %v1769 = vunpack.c.l.b16 %v1572
        %v1770 = vunpack.c.h.b16 %v1572
        %v1771 = vunpack.c.l.b16 %v1573
        %v1772 = vunpack.c.h.b16 %v1573
        %v1773 = vunpack.c.l.b16 %v1574
        %v1774 = vunpack.c.h.b16 %v1574
        %v1775 = vunpack.c.l.b16 %v1575
        %v1776 = vunpack.c.h.b16 %v1575
        %v1777 = vunpack.c.l.b16 %v1576
        %v1778 = vunpack.c.h.b16 %v1576
        %v1779 = vunpack.c.l.b16 %v1577
        %v1780 = vunpack.c.h.b16 %v1577
        %v1781 = vunpack.c.l.b16 %v1578
        %v1782 = vunpack.c.h.b16 %v1578
        %v1783 = vunpack.c.l.b16 %v1579
        %v1784 = vunpack.c.h.b16 %v1579
        %v1785 = vunpack.c.l.b16 %v1580
        %v1786 = vunpack.c.h.b16 %v1580
        %v1787 = vunpack.c.l.b16 %v1581
        %v1788 = vunpack.c.h.b16 %v1581
        %v1789 = vunpack.c.l.b16 %v1582
        %v1790 = vunpack.c.h.b16 %v1582
        %v1791 = vunpack.c.l.b16 %v1583
        %v1792 = vunpack.c.h.b16 %v1583
        %v1793 = vunpack.c.l.b16 %v1584
        %v1794 = vunpack.c.h.b16 %v1584
        %v1795 = vunpack.c.l.b16 %v1585
        %v1796 = vunpack.c.h.b16 %v1585
        %v1797 = vunpack.c.l.b16 %v1586
        %v1798 = vunpack.c.h.b16 %v1586
        %v1799 = vunpack.c.l.b16 %v1587
        %v1800 = vunpack.c.h.b16 %v1587
        %v1801 = vunpack.c.l.b16 %v1588
        %v1802 = vunpack.c.h.b16 %v1588
        %v1803 = vunpack.c.l.b16 %v1589
        %v1804 = vunpack.c.h.b16 %v1589
        %v1805 = vunpack.c.l.b16 %v1590
        %v1806 = vunpack.c.h.b16 %v1590
        %v1807 = vunpack.c.l.b16 %v1591
        %v1808 = vunpack.c.h.b16 %v1591
        %v1809 = vunpack.c.l.b16 %v1592
        %v1810 = vunpack.c.h.b16 %v1592
        %v1811 = vunpack.c.l.b16 %v1593
        %v1812 = vunpack.c.h.b16 %v1593
        %v1813 = vunpack.c.l.b16 %v1594
        %v1814 = vunpack.c.h.b16 %v1594
        %v1815 = vunpack.c.l.b16 %v1595
        %v1816 = vunpack.c.h.b16 %v1595
        %v1817 = vunpack.c.l.b16 %v1596
        %v1818 = vunpack.c.h.b16 %v1596
        %v1819 = vunpack.c.l.b16 %v1597
        %v1820 = vunpack.c.h.b16 %v1597
        %v1821 = vunpack.c.l.b16 %v1598
        %v1822 = vunpack.c.h.b16 %v1598
        %v1823 = vunpack.c.l.b16 %v1599
        %v1824 = vunpack.c.h.b16 %v1599
        %v1825 = vunpack.c.l.b16 %v1600
        %v1826 = vunpack.c.h.b16 %v1600
        %v1827 = vunpack.c.l.b16 %v1601
        %v1828 = vunpack.c.h.b16 %v1601
        %v1829 = vunpack.c.l.b16 %v1602
        %v1830 = vunpack.c.h.b16 %v1602
        %v1831 = vunpack.c.l.b16 %v1603
        %v1832 = vunpack.c.h.b16 %v1603
        %v1833 = vunpack.c.l.b16 %v1604
        %v1834 = vunpack.c.h.b16 %v1604
        %v1835 = vunpack.c.l.b16 %v1605
        %v1836 = vunpack.c.h.b16 %v1605
        %v1837 = vunpack.c.l.b16 %v1606
        %v1838 = vunpack.c.h.b16 %v1606
        %v1839 = vunpack.c.l.b16 %v1607
        %v1840 = vunpack.c.h.b16 %v1607
        %v1841 = vunpack.c.l.b16 %v1608
        %v1842 = vunpack.c.h.b16 %v1608
        %v1843 = vpack.c.b16 %v1723, %v1715
        %v1844 = vpack.c.b16 %v1724, %v1716
        %v1845 = vpack.c.b16 %v1725, %v1717
        %v1846 = vpack.c.b16 %v1726, %v1718
        %v1847 = vpack.c.b16 %v1727, %v1719
        %v1848 = vpack.c.b16 %v1728, %v1720
        %v1849 = vpack.c.b16 %v1729, %v1721
        %v1850 = vpack.c.b16 %v1730, %v1722
        %v1851 = vpack.c.b16 %v1739, %v1731
        %v1852 = vpack.c.b16 %v1740, %v1732
        %v1853 = vpack.c.b16 %v1741, %v1733
        %v1854 = vpack.c.b16 %v1742, %v1734
        %v1855 = vpack.c.b16 %v1743, %v1735
        %v1856 = vpack.c.b16 %v1744, %v1736
        %v1857 = vpack.c.b16 %v1745, %v1737
        %v1858 = vpack.c.b16 %v1746, %v1738
        %v1859 = vpack.c.b16 %v1755, %v1747
        %v1860 = vpack.c.b16 %v1756, %v1748
        %v1861 = vpack.c.b16 %v1757, %v1749
        %v1862 = vpack.c.b16 %v1758, %v1750
        %v1863 = vpack.c.b16 %v1759, %v1751
        %v1864 = vpack.c.b16 %v1760, %v1752
        %v1865 = vpack.c.b16 %v1761, %v1753
        %v1866 = vpack.c.b16 %v1762, %v1754
        %v1867 = vpack.c.b16 %v1771, %v1763
        %v1868 = vpack.c.b16 %v1772, %v1764
        %v1869 = vpack.c.b16 %v1773, %v1765
        %v1870 = vpack.c.b16 %v1774, %v1766
        %v1871 = vpack.c.b16 %v1775, %v1767
        %v1872 = vpack.c.b16 %v1776, %v1768
        %v1873 = vpack.c.b16 %v1777, %v1769
        %v1874 = vpack.c.b16 %v1778, %v1770
        %v1875 = vpack.c.b16 %v1787, %v1779
        %v1876 = vpack.c.b16 %v1788, %v1780
        %v1877 = vpack.c.b16 %v1789, %v1781
        %v1878 = vpack.c.b16 %v1790, %v1782
        %v1879 = vpack.c.b16 %v1791, %v1783
        %v1880 = vpack.c.b16 %v1792, %v1784
        %v1881 = vpack.c.b16 %v1793, %v1785
        %v1882 = vpack.c.b16 %v1794, %v1786
        %v1883 = vpack.c.b16 %v1803, %v1795
        %v1884 = vpack.c.b16 %v1804, %v1796
        %v1885 = vpack.c.b16 %v1805, %v1797
        %v1886 = vpack.c.b16 %v1806, %v1798
        %v1887 = vpack.c.b16 %v1807, %v1799
        %v1888 = vpack.c.b16 %v1808, %v1800
        %v1889 = vpack.c.b16 %v1809, %v1801
        %v1890 = vpack.c.b16 %v1810, %v1802
        %v1891 = vpack.c.b16 %v1819, %v1811
        %v1892 = vpack.c.b16 %v1820, %v1812
        %v1893 = vpack.c.b16 %v1821, %v1813
        %v1894 = vpack.c.b16 %v1822, %v1814
        %v1895 = vpack.c.b16 %v1823, %v1815
        %v1896 = vpack.c.b16 %v1824, %v1816
        %v1897 = vpack.c.b16 %v1825, %v1817
        %v1898 = vpack.c.b16 %v1826, %v1818
        %v1899 = vpack.c.b16 %v1835, %v1827
        %v1900 = vpack.c.b16 %v1836, %v1828
        %v1901 = vpack.c.b16 %v1837, %v1829
        %v1902 = vpack.c.b16 %v1838, %v1830
        %v1903 = vpack.c.b16 %v1839, %v1831
        %v1904 = vpack.c.b16 %v1840, %v1832
        %v1905 = vpack.c.b16 %v1841, %v1833
        %v1906 = vpack.c.b16 %v1842, %v1834
        %1971 = vmatprep.subr.bf16.mxu0 %v1844
        %1972 = vmatpush1.bf16.msra.mxu0 %v1843
        %1973 = vmatprep.subr.bf16.mxu0 %v1852
        %1974 = vmatpush1.bf16.msra.mxu0 %v1851
        %1975 = vmatprep.subr.bf16.mxu0 %v1860
        %1976 = vmatpush1.bf16.msra.mxu0 %v1859
        %1977 = vmatprep.subr.bf16.mxu0 %v1868
        %1978 = vmatpush1.bf16.msra.mxu0 %v1867
        %1979 = vmatprep.subr.bf16.mxu0 %v1876
        %1980 = vmatpush1.bf16.msra.mxu0 %v1875
        %1981 = vmatprep.subr.bf16.mxu0 %v1884
        %1982 = vmatpush1.bf16.msra.mxu0 %v1883
        %1983 = vmatprep.subr.bf16.mxu0 %v1892
        %1984 = vmatpush1.bf16.msra.mxu0 %v1891
        %1985 = vmatprep.subr.bf16.mxu0 %v1900
        %1986 = vmatpush1.bf16.msra.mxu0 %v1899
        %1987 = vmatprep.subr.bf16.mxu0 0
        %1988 = vmatpush1.bf16.msra.mxu0 0
        %1989 = vmatprep.subr.bf16.mxu0 0
        %1990 = vmatpush1.bf16.msra.mxu0 0
        %1991 = vmatprep.subr.bf16.mxu0 0
        %1992 = vmatpush1.bf16.msra.mxu0 0
        %1993 = vmatprep.subr.bf16.mxu0 0
        %1994 = vmatpush1.bf16.msra.mxu0 0
        %1995 = vmatprep.subr.bf16.mxu0 0
        %1996 = vmatpush1.bf16.msra.mxu0 0
        %1997 = vmatprep.subr.bf16.mxu0 0
        %1998 = vmatpush1.bf16.msra.mxu0 0
        %1999 = vmatprep.subr.bf16.mxu0 0
        %2000 = vmatpush1.bf16.msra.mxu0 0
        %2001 = vmatprep.subr.bf16.mxu0 0
        %2002 = vmatpush1.bf16.msra.mxu0 0
        %2003 = vmatprep.mubr.bf16.mxu0 0
        %2004 = vmatmul.mubr.bf16.gmra.mrb[0].mxu0 %v1513
        %v2005 = vpop.f32.mrb[0].mxu0
        %v2006 = vadd.f32 %v1614, %v2005
        %v2007 = vpop.f32.mrb[0].mxu0
        %v2008 = vadd.f32 %v1618, %v2007
        %v2009 = vpop.f32.mrb[0].mxu0
        %v2010 = vadd.f32 %v1614, %v2009
        %v2011 = vpop.f32.mrb[0].mxu0
        %v2012 = vadd.f32 %v1618, %v2011
        %2013 = vmatprep.mubr.bf16.mxu0 0
        %2014 = vmatmul.mubr.bf16.gmra.mrb[0].mxu0 %v1514
        %v2015 = vpop.f32.mrb[0].mxu0
        %v2016 = vadd.f32 %v1614, %v2015
        %v2017 = vpop.f32.mrb[0].mxu0
        %v2018 = vadd.f32 %v1618, %v2017
        %v2019 = vpop.f32.mrb[0].mxu0
        %v2020 = vadd.f32 %v1614, %v2019
        %v2021 = vpop.f32.mrb[0].mxu0
        %v2022 = vadd.f32 %v1618, %v2021
        %2023 = vmatprep.mubr.bf16.mxu0 0
        %2024 = vmatmul.mubr.bf16.gmra.mrb[0].mxu0 %v1515
        %v2025 = vpop.f32.mrb[0].mxu0
        %v2026 = vadd.f32 %v1614, %v2025
        %v2027 = vpop.f32.mrb[0].mxu0
        %v2028 = vadd.f32 %v1618, %v2027
        %v2029 = vpop.f32.mrb[0].mxu0
        %v2030 = vadd.f32 %v1614, %v2029
        %v2031 = vpop.f32.mrb[0].mxu0
        %v2032 = vadd.f32 %v1618, %v2031
        %2033 = vmatprep.mubr.bf16.mxu0 0
        %2034 = vmatmul.mubr.bf16.gmra.mrb[0].mxu0 %v1516
        %v2035 = vpop.f32.mrb[0].mxu0
        %v2036 = vadd.f32 %v1614, %v2035
        %v2037 = vpop.f32.mrb[0].mxu0
        %v2038 = vadd.f32 %v1618, %v2037
        %v2039 = vpop.f32.mrb[0].mxu0
        %v2040 = vadd.f32 %v1614, %v2039
        %v2041 = vpop.f32.mrb[0].mxu0
        %v2042 = vadd.f32 %v1618, %v2041
        %2043 = vmatprep.mubr.bf16.mxu0 0
        %2044 = vmatmul.mubr.bf16.gmra.mrb[0].mxu0 %v1517
        %v2045 = vpop.f32.mrb[0].mxu0
        %v2046 = vadd.f32 %v1614, %v2045
        %v2047 = vpop.f32.mrb[0].mxu0
        %v2048 = vadd.f32 %v1618, %v2047
        %v2049 = vpop.f32.mrb[0].mxu0
        %v2050 = vadd.f32 %v1614, %v2049
        %v2051 = vpop.f32.mrb[0].mxu0
        %v2052 = vadd.f32 %v1618, %v2051
        %2053 = vmatprep.mubr.bf16.mxu0 0
        %2054 = vmatmul.mubr.bf16.gmra.mrb[0].mxu0 %v1518
        %v2055 = vpop.f32.mrb[0].mxu0
        %v2056 = vadd.f32 %v1614, %v2055
        %v2057 = vpop.f32.mrb[0].mxu0
        %v2058 = vadd.f32 %v1618, %v2057
        %v2059 = vpop.f32.mrb[0].mxu0
        %v2060 = vadd.f32 %v1614, %v2059
        %v2061 = vpop.f32.mrb[0].mxu0
        %v2062 = vadd.f32 %v1618, %v2061
        %2063 = vmatprep.mubr.bf16.mxu0 0
        %2064 = vmatmul.mubr.bf16.gmra.mrb[0].mxu0 %v1519
        %v2065 = vpop.f32.mrb[0].mxu0
        %v2066 = vadd.f32 %v1614, %v2065
        %v2067 = vpop.f32.mrb[0].mxu0
        %v2068 = vadd.f32 %v1618, %v2067
        %v2069 = vpop.f32.mrb[0].mxu0
        %v2070 = vadd.f32 %v1614, %v2069
        %v2071 = vpop.f32.mrb[0].mxu0
        %v2072 = vadd.f32 %v1618, %v2071
        %2073 = vmatprep.mubr.bf16.mxu0 0
        %2074 = vmatmul.mubr.bf16.gmra.mrb[0].mxu0 %v1520
        %v2075 = vpop.f32.mrb[0].mxu0
        %v2076 = vadd.f32 %v1614, %v2075
        %v2077 = vpop.f32.mrb[0].mxu0
        %v2078 = vadd.f32 %v1618, %v2077
        %v2079 = vpop.f32.mrb[0].mxu0
        %v2080 = vadd.f32 %v1614, %v2079
        %v2081 = vpop.f32.mrb[0].mxu0
        %v2082 = vadd.f32 %v1618, %v2081
        %2083 = vmatprep.mubr.bf16.mxu0 0
        %2084 = vmatmul.mubr.bf16.gmra.mrb[0].mxu0 %v1521
        %v2085 = vpop.f32.mrb[0].mxu0
        %v2086 = vadd.f32 %v1614, %v2085
        %v2087 = vpop.f32.mrb[0].mxu0
        %v2088 = vadd.f32 %v1618, %v2087
        %v2089 = vpop.f32.mrb[0].mxu0
        %v2090 = vadd.f32 %v1614, %v2089
        %v2091 = vpop.f32.mrb[0].mxu0
        %v2092 = vadd.f32 %v1618, %v2091
        %2093 = vmatprep.mubr.bf16.mxu0 0
        %2094 = vmatmul.mubr.bf16.gmra.mrb[0].mxu0 %v1522
        %v2095 = vpop.f32.mrb[0].mxu0
        %v2096 = vadd.f32 %v1614, %v2095
        %v2097 = vpop.f32.mrb[0].mxu0
        %v2098 = vadd.f32 %v1618, %v2097
        %v2099 = vpop.f32.mrb[0].mxu0
        %v2100 = vadd.f32 %v1614, %v2099
        %v2101 = vpop.f32.mrb[0].mxu0
        %v2102 = vadd.f32 %v1618, %v2101
        %2103 = vmatprep.mubr.bf16.mxu0 0
        %2104 = vmatmul.mubr.bf16.gmra.mrb[0].mxu0 %v1523
        %v2105 = vpop.f32.mrb[0].mxu0
        %v2106 = vadd.f32 %v1614, %v2105
        %v2107 = vpop.f32.mrb[0].mxu0
        %v2108 = vadd.f32 %v1618, %v2107
        %v2109 = vpop.f32.mrb[0].mxu0
        %v2110 = vadd.f32 %v1614, %v2109
        %v2111 = vpop.f32.mrb[0].mxu0
        %v2112 = vadd.f32 %v1618, %v2111
        %2113 = vmatprep.mubr.bf16.mxu0 0
        %2114 = vmatmul.mubr.bf16.gmra.mrb[0].mxu0 %v1524
        %v2115 = vpop.f32.mrb[0].mxu0
        %v2116 = vadd.f32 %v1614, %v2115
        %v2117 = vpop.f32.mrb[0].mxu0
        %v2118 = vadd.f32 %v1618, %v2117
        %v2119 = vpop.f32.mrb[0].mxu0
        %v2120 = vadd.f32 %v1614, %v2119
        %v2121 = vpop.f32.mrb[0].mxu0
        %v2122 = vadd.f32 %v1618, %v2121
        %2123 = vmatprep.mubr.bf16.mxu0 0
        %2124 = vmatmul.mubr.bf16.gmra.mrb[0].mxu0 %v1525
        %v2125 = vpop.f32.mrb[0].mxu0
        %v2126 = vadd.f32 %v1614, %v2125
        %v2127 = vpop.f32.mrb[0].mxu0
        %v2128 = vadd.f32 %v1618, %v2127
        %v2129 = vpop.f32.mrb[0].mxu0
        %v2130 = vadd.f32 %v1614, %v2129
        %v2131 = vpop.f32.mrb[0].mxu0
        %v2132 = vadd.f32 %v1618, %v2131
        %2133 = vmatprep.mubr.bf16.mxu0 0
        %2134 = vmatmul.mubr.bf16.gmra.mrb[0].mxu0 %v1526
        %v2135 = vpop.f32.mrb[0].mxu0
        %v2136 = vadd.f32 %v1614, %v2135
        %v2137 = vpop.f32.mrb[0].mxu0
        %v2138 = vadd.f32 %v1618, %v2137
        %v2139 = vpop.f32.mrb[0].mxu0
        %v2140 = vadd.f32 %v1614, %v2139
        %v2141 = vpop.f32.mrb[0].mxu0
        %v2142 = vadd.f32 %v1618, %v2141
        %2143 = vmatprep.mubr.bf16.mxu0 0
        %2144 = vmatmul.mubr.bf16.gmra.mrb[0].mxu0 %v1527
        %v2145 = vpop.f32.mrb[0].mxu0
        %v2146 = vadd.f32 %v1614, %v2145
        %v2147 = vpop.f32.mrb[0].mxu0
        %v2148 = vadd.f32 %v1618, %v2147
        %v2149 = vpop.f32.mrb[0].mxu0
        %v2150 = vadd.f32 %v1614, %v2149
        %v2151 = vpop.f32.mrb[0].mxu0
        %v2152 = vadd.f32 %v1618, %v2151
        %2153 = vmatprep.mubr.bf16.mxu0 0
        %2154 = vmatmul.mubr.bf16.gmra.mrb[0].mxu0 %v1528
        %v2155 = vpop.f32.mrb[0].mxu0
        %v2156 = vadd.f32 %v1614, %v2155
        %v2157 = vpop.f32.mrb[0].mxu0
        %v2158 = vadd.f32 %v1618, %v2157
        %v2159 = vpop.f32.mrb[0].mxu0
        %v2160 = vadd.f32 %v1614, %v2159
        %v2161 = vpop.f32.mrb[0].mxu0
        %v2162 = vadd.f32 %v1618, %v2161
        %2163 = vmatprep.mubr.bf16.mxu0 0
        %2164 = vmatmul.mubr.bf16.gmra.mrb[0].mxu0 %v1529
        %v2165 = vpop.f32.mrb[0].mxu0
        %v2166 = vadd.f32 %v1614, %v2165
        %v2167 = vpop.f32.mrb[0].mxu0
        %v2168 = vadd.f32 %v1618, %v2167
        %v2169 = vpop.f32.mrb[0].mxu0
        %v2170 = vadd.f32 %v1614, %v2169
        %v2171 = vpop.f32.mrb[0].mxu0
        %v2172 = vadd.f32 %v1618, %v2171
        %2173 = vmatprep.mubr.bf16.mxu0 0
        %2174 = vmatmul.mubr.bf16.gmra.mrb[0].mxu0 %v1530
        %v2175 = vpop.f32.mrb[0].mxu0
        %v2176 = vadd.f32 %v1614, %v2175
        %v2177 = vpop.f32.mrb[0].mxu0
        %v2178 = vadd.f32 %v1618, %v2177
        %v2179 = vpop.f32.mrb[0].mxu0
        %v2180 = vadd.f32 %v1614, %v2179
        %v2181 = vpop.f32.mrb[0].mxu0
        %v2182 = vadd.f32 %v1618, %v2181
        %2183 = vmatprep.mubr.bf16.mxu0 0
        %2184 = vmatmul.mubr.bf16.gmra.mrb[0].mxu0 %v1531
        %v2185 = vpop.f32.mrb[0].mxu0
        %v2186 = vadd.f32 %v1614, %v2185
        %v2187 = vpop.f32.mrb[0].mxu0
        %v2188 = vadd.f32 %v1618, %v2187
        %v2189 = vpop.f32.mrb[0].mxu0
        %v2190 = vadd.f32 %v1614, %v2189
        %v2191 = vpop.f32.mrb[0].mxu0
        %v2192 = vadd.f32 %v1618, %v2191
        %2193 = vmatprep.mubr.bf16.mxu0 0
        %2194 = vmatmul.mubr.bf16.gmra.mrb[0].mxu0 %v1532
        %v2195 = vpop.f32.mrb[0].mxu0
        %v2196 = vadd.f32 %v1614, %v2195
        %v2197 = vpop.f32.mrb[0].mxu0
        %v2198 = vadd.f32 %v1618, %v2197
        %v2199 = vpop.f32.mrb[0].mxu0
        %v2200 = vadd.f32 %v1614, %v2199
        %v2201 = vpop.f32.mrb[0].mxu0
        %v2202 = vadd.f32 %v1618, %v2201
        %2203 = vmatprep.mubr.bf16.mxu0 0
        %2204 = vmatmul.mubr.bf16.gmra.mrb[0].mxu0 %v1533
        %v2205 = vpop.f32.mrb[0].mxu0
        %v2206 = vadd.f32 %v1614, %v2205
        %v2207 = vpop.f32.mrb[0].mxu0
        %v2208 = vadd.f32 %v1618, %v2207
        %v2209 = vpop.f32.mrb[0].mxu0
        %v2210 = vadd.f32 %v1614, %v2209
        %v2211 = vpop.f32.mrb[0].mxu0
        %v2212 = vadd.f32 %v1618, %v2211
        %2213 = vmatprep.mubr.bf16.mxu0 0
        %2214 = vmatmul.mubr.bf16.gmra.mrb[0].mxu0 %v1534
        %v2215 = vpop.f32.mrb[0].mxu0
        %v2216 = vadd.f32 %v1614, %v2215
        %v2217 = vpop.f32.mrb[0].mxu0
        %v2218 = vadd.f32 %v1618, %v2217
        %v2219 = vpop.f32.mrb[0].mxu0
        %v2220 = vadd.f32 %v1614, %v2219
        %v2221 = vpop.f32.mrb[0].mxu0
        %v2222 = vadd.f32 %v1618, %v2221
        %2223 = vmatprep.mubr.bf16.mxu0 0
        %2224 = vmatmul.mubr.bf16.gmra.mrb[0].mxu0 %v1535
        %v2225 = vpop.f32.mrb[0].mxu0
        %v2226 = vadd.f32 %v1614, %v2225
        %v2227 = vpop.f32.mrb[0].mxu0
        %v2228 = vadd.f32 %v1618, %v2227
        %v2229 = vpop.f32.mrb[0].mxu0
        %v2230 = vadd.f32 %v1614, %v2229
        %v2231 = vpop.f32.mrb[0].mxu0
        %v2232 = vadd.f32 %v1618, %v2231
        %2233 = vmatprep.mubr.bf16.mxu0 0
        %2234 = vmatmul.mubr.bf16.gmra.mrb[0].mxu0 %v1536
        %v2235 = vpop.f32.mrb[0].mxu0
        %v2236 = vadd.f32 %v1614, %v2235
        %v2237 = vpop.f32.mrb[0].mxu0
        %v2238 = vadd.f32 %v1618, %v2237
        %v2239 = vpop.f32.mrb[0].mxu0
        %v2240 = vadd.f32 %v1614, %v2239
        %v2241 = vpop.f32.mrb[0].mxu0
        %v2242 = vadd.f32 %v1618, %v2241
        %2243 = vmatprep.mubr.bf16.mxu0 0
        %2244 = vmatmul.mubr.bf16.gmra.mrb[0].mxu0 %v1537
        %v2245 = vpop.f32.mrb[0].mxu0
        %v2246 = vadd.f32 %v1614, %v2245
        %v2247 = vpop.f32.mrb[0].mxu0
        %v2248 = vadd.f32 %v1618, %v2247
        %v2249 = vpop.f32.mrb[0].mxu0
        %v2250 = vadd.f32 %v1614, %v2249
        %v2251 = vpop.f32.mrb[0].mxu0
        %v2252 = vadd.f32 %v1618, %v2251
        %2253 = vmatprep.mubr.bf16.mxu0 0
        %2254 = vmatmul.mubr.bf16.gmra.mrb[0].mxu0 %v1538
        %v2255 = vpop.f32.mrb[0].mxu0
        %v2256 = vadd.f32 %v1614, %v2255
        %v2257 = vpop.f32.mrb[0].mxu0
        %v2258 = vadd.f32 %v1618, %v2257
        %v2259 = vpop.f32.mrb[0].mxu0
        %v2260 = vadd.f32 %v1614, %v2259
        %v2261 = vpop.f32.mrb[0].mxu0
        %v2262 = vadd.f32 %v1618, %v2261
        %2263 = vmatprep.mubr.bf16.mxu0 0
        %2264 = vmatmul.mubr.bf16.gmra.mrb[0].mxu0 %v1539
        %v2265 = vpop.f32.mrb[0].mxu0
        %v2266 = vadd.f32 %v1614, %v2265
        %v2267 = vpop.f32.mrb[0].mxu0
        %v2268 = vadd.f32 %v1618, %v2267
        %v2269 = vpop.f32.mrb[0].mxu0
        %v2270 = vadd.f32 %v1614, %v2269
        %v2271 = vpop.f32.mrb[0].mxu0
        %v2272 = vadd.f32 %v1618, %v2271
        %2273 = vmatprep.mubr.bf16.mxu0 0
        %2274 = vmatmul.mubr.bf16.gmra.mrb[0].mxu0 %v1540
        %v2275 = vpop.f32.mrb[0].mxu0
        %v2276 = vadd.f32 %v1614, %v2275
        %v2277 = vpop.f32.mrb[0].mxu0
        %v2278 = vadd.f32 %v1618, %v2277
        %v2279 = vpop.f32.mrb[0].mxu0
        %v2280 = vadd.f32 %v1614, %v2279
        %v2281 = vpop.f32.mrb[0].mxu0
        %v2282 = vadd.f32 %v1618, %v2281
        %2283 = vmatprep.mubr.bf16.mxu0 0
        %2284 = vmatmul.mubr.bf16.gmra.mrb[0].mxu0 %v1541
        %v2285 = vpop.f32.mrb[0].mxu0
        %v2286 = vadd.f32 %v1614, %v2285
        %v2287 = vpop.f32.mrb[0].mxu0
        %v2288 = vadd.f32 %v1618, %v2287
        %v2289 = vpop.f32.mrb[0].mxu0
        %v2290 = vadd.f32 %v1614, %v2289
        %v2291 = vpop.f32.mrb[0].mxu0
        %v2292 = vadd.f32 %v1618, %v2291
        %2293 = vmatprep.mubr.bf16.mxu0 0
        %2294 = vmatmul.mubr.bf16.gmra.mrb[0].mxu0 %v1542
        %v2295 = vpop.f32.mrb[0].mxu0
        %v2296 = vadd.f32 %v1614, %v2295
        %v2297 = vpop.f32.mrb[0].mxu0
        %v2298 = vadd.f32 %v1618, %v2297
        %v2299 = vpop.f32.mrb[0].mxu0
        %v2300 = vadd.f32 %v1614, %v2299
        %v2301 = vpop.f32.mrb[0].mxu0
        %v2302 = vadd.f32 %v1618, %v2301
        %2303 = vmatprep.mubr.bf16.mxu0 0
        %2304 = vmatmul.mubr.bf16.gmra.mrb[0].mxu0 %v1543
        %v2305 = vpop.f32.mrb[0].mxu0
        %v2306 = vadd.f32 %v1614, %v2305
        %v2307 = vpop.f32.mrb[0].mxu0
        %v2308 = vadd.f32 %v1618, %v2307
        %v2309 = vpop.f32.mrb[0].mxu0
        %v2310 = vadd.f32 %v1614, %v2309
        %v2311 = vpop.f32.mrb[0].mxu0
        %v2312 = vadd.f32 %v1618, %v2311
        %2313 = vmatprep.mubr.bf16.mxu0 0
        %2314 = vmatmul.mubr.bf16.gmra.mrb[0].mxu0 %v1544
        %v2315 = vpop.f32.mrb[0].mxu0
        %v2316 = vadd.f32 %v1614, %v2315
        %v2317 = vpop.f32.mrb[0].mxu0
        %v2318 = vadd.f32 %v1618, %v2317
        %v2319 = vpop.f32.mrb[0].mxu0
        %v2320 = vadd.f32 %v1614, %v2319
        %v2321 = vpop.f32.mrb[0].mxu0
        %v2322 = vadd.f32 %v1618, %v2321
        %2323 = vdwg.mxu0
        %2324 = vmatprep.subr.bf16.mxu0 %v1846
        %2325 = vmatpush1.bf16.msra.mxu0 %v1845
        %2326 = vmatprep.subr.bf16.mxu0 %v1854
        %2327 = vmatpush1.bf16.msra.mxu0 %v1853
        %2328 = vmatprep.subr.bf16.mxu0 %v1862
        %2329 = vmatpush1.bf16.msra.mxu0 %v1861
        %2330 = vmatprep.subr.bf16.mxu0 %v1870
        %2331 = vmatpush1.bf16.msra.mxu0 %v1869
        %2332 = vmatprep.subr.bf16.mxu0 %v1878
        %2333 = vmatpush1.bf16.msra.mxu0 %v1877
        %2334 = vmatprep.subr.bf16.mxu0 %v1886
        %2335 = vmatpush1.bf16.msra.mxu0 %v1885
        %2336 = vmatprep.subr.bf16.mxu0 %v1894
        %2337 = vmatpush1.bf16.msra.mxu0 %v1893
        %2338 = vmatprep.subr.bf16.mxu0 %v1902
        %2339 = vmatpush1.bf16.msra.mxu0 %v1901
        %2340 = vmatprep.subr.bf16.mxu0 0
        %2341 = vmatpush1.bf16.msra.mxu0 0
        %2342 = vmatprep.subr.bf16.mxu0 0
        %2343 = vmatpush1.bf16.msra.mxu0 0
        %2344 = vmatprep.subr.bf16.mxu0 0
        %2345 = vmatpush1.bf16.msra.mxu0 0
        %2346 = vmatprep.subr.bf16.mxu0 0
        %2347 = vmatpush1.bf16.msra.mxu0 0
        %2348 = vmatprep.subr.bf16.mxu0 0
        %2349 = vmatpush1.bf16.msra.mxu0 0
        %2350 = vmatprep.subr.bf16.mxu0 0
        %2351 = vmatpush1.bf16.msra.mxu0 0
        %2352 = vmatprep.subr.bf16.mxu0 0
        %2353 = vmatpush1.bf16.msra.mxu0 0
        %2354 = vmatprep.subr.bf16.mxu0 0
        %2355 = vmatpush1.bf16.msra.mxu0 0
        %2356 = vmatprep.mubr.bf16.mxu0 0
        %2357 = vmatmul.mubr.bf16.gmra.mrb[0].mxu0 %v1513
        %v2358 = vpop.f32.mrb[0].mxu0
        %v2359 = vadd.f32 %v1622, %v2358
        %v2360 = vpop.f32.mrb[0].mxu0
        %v2361 = vadd.f32 %v1626, %v2360
        %v2362 = vpop.f32.mrb[0].mxu0
        %v2363 = vadd.f32 %v1622, %v2362
        %v2364 = vpop.f32.mrb[0].mxu0
        %v2365 = vadd.f32 %v1626, %v2364
        %2366 = vmatprep.mubr.bf16.mxu0 0
        %2367 = vmatmul.mubr.bf16.gmra.mrb[0].mxu0 %v1514
        %v2368 = vpop.f32.mrb[0].mxu0
        %v2369 = vadd.f32 %v1622, %v2368
        %v2370 = vpop.f32.mrb[0].mxu0
        %v2371 = vadd.f32 %v1626, %v2370
        %v2372 = vpop.f32.mrb[0].mxu0
        %v2373 = vadd.f32 %v1622, %v2372
        %v2374 = vpop.f32.mrb[0].mxu0
        %v2375 = vadd.f32 %v1626, %v2374
        %2376 = vmatprep.mubr.bf16.mxu0 0
        %2377 = vmatmul.mubr.bf16.gmra.mrb[0].mxu0 %v1515
        %v2378 = vpop.f32.mrb[0].mxu0
        %v2379 = vadd.f32 %v1622, %v2378
        %v2380 = vpop.f32.mrb[0].mxu0
        %v2381 = vadd.f32 %v1626, %v2380
        %v2382 = vpop.f32.mrb[0].mxu0
        %v2383 = vadd.f32 %v1622, %v2382
        %v2384 = vpop.f32.mrb[0].mxu0
        %v2385 = vadd.f32 %v1626, %v2384
        %2386 = vmatprep.mubr.bf16.mxu0 0
        %2387 = vmatmul.mubr.bf16.gmra.mrb[0].mxu0 %v1516
        %v2388 = vpop.f32.mrb[0].mxu0
        %v2389 = vadd.f32 %v1622, %v2388
        %v2390 = vpop.f32.mrb[0].mxu0
        %v2391 = vadd.f32 %v1626, %v2390
        %v2392 = vpop.f32.mrb[0].mxu0
        %v2393 = vadd.f32 %v1622, %v2392
        %v2394 = vpop.f32.mrb[0].mxu0
        %v2395 = vadd.f32 %v1626, %v2394
        %2396 = vmatprep.mubr.bf16.mxu0 0
        %2397 = vmatmul.mubr.bf16.gmra.mrb[0].mxu0 %v1517
        %v2398 = vpop.f32.mrb[0].mxu0
        %v2399 = vadd.f32 %v1622, %v2398
        %v2400 = vpop.f32.mrb[0].mxu0
        %v2401 = vadd.f32 %v1626, %v2400
        %v2402 = vpop.f32.mrb[0].mxu0
        %v2403 = vadd.f32 %v1622, %v2402
        %v2404 = vpop.f32.mrb[0].mxu0
        %v2405 = vadd.f32 %v1626, %v2404
        %2406 = vmatprep.mubr.bf16.mxu0 0
        %2407 = vmatmul.mubr.bf16.gmra.mrb[0].mxu0 %v1518
        %v2408 = vpop.f32.mrb[0].mxu0
        %v2409 = vadd.f32 %v1622, %v2408
        %v2410 = vpop.f32.mrb[0].mxu0
        %v2411 = vadd.f32 %v1626, %v2410
        %v2412 = vpop.f32.mrb[0].mxu0
        %v2413 = vadd.f32 %v1622, %v2412
        %v2414 = vpop.f32.mrb[0].mxu0
        %v2415 = vadd.f32 %v1626, %v2414
        %2416 = vmatprep.mubr.bf16.mxu0 0
        %2417 = vmatmul.mubr.bf16.gmra.mrb[0].mxu0 %v1519
        %v2418 = vpop.f32.mrb[0].mxu0
        %v2419 = vadd.f32 %v1622, %v2418
        %v2420 = vpop.f32.mrb[0].mxu0
        %v2421 = vadd.f32 %v1626, %v2420
        %v2422 = vpop.f32.mrb[0].mxu0
        %v2423 = vadd.f32 %v1622, %v2422
        %v2424 = vpop.f32.mrb[0].mxu0
        %v2425 = vadd.f32 %v1626, %v2424
        %2426 = vmatprep.mubr.bf16.mxu0 0
        %2427 = vmatmul.mubr.bf16.gmra.mrb[0].mxu0 %v1520
        %v2428 = vpop.f32.mrb[0].mxu0
        %v2429 = vadd.f32 %v1622, %v2428
        %v2430 = vpop.f32.mrb[0].mxu0
        %v2431 = vadd.f32 %v1626, %v2430
        %v2432 = vpop.f32.mrb[0].mxu0
        %v2433 = vadd.f32 %v1622, %v2432
        %v2434 = vpop.f32.mrb[0].mxu0
        %v2435 = vadd.f32 %v1626, %v2434
        %2436 = vmatprep.mubr.bf16.mxu0 0
        %2437 = vmatmul.mubr.bf16.gmra.mrb[0].mxu0 %v1521
        %v2438 = vpop.f32.mrb[0].mxu0
        %v2439 = vadd.f32 %v1622, %v2438
        %v2440 = vpop.f32.mrb[0].mxu0
        %v2441 = vadd.f32 %v1626, %v2440
        %v2442 = vpop.f32.mrb[0].mxu0
        %v2443 = vadd.f32 %v1622, %v2442
        %v2444 = vpop.f32.mrb[0].mxu0
        %v2445 = vadd.f32 %v1626, %v2444
        %2446 = vmatprep.mubr.bf16.mxu0 0
        %2447 = vmatmul.mubr.bf16.gmra.mrb[0].mxu0 %v1522
        %v2448 = vpop.f32.mrb[0].mxu0
        %v2449 = vadd.f32 %v1622, %v2448
        %v2450 = vpop.f32.mrb[0].mxu0
        %v2451 = vadd.f32 %v1626, %v2450
        %v2452 = vpop.f32.mrb[0].mxu0
        %v2453 = vadd.f32 %v1622, %v2452
        %v2454 = vpop.f32.mrb[0].mxu0
        %v2455 = vadd.f32 %v1626, %v2454
        %2456 = vmatprep.mubr.bf16.mxu0 0
        %2457 = vmatmul.mubr.bf16.gmra.mrb[0].mxu0 %v1523
        %v2458 = vpop.f32.mrb[0].mxu0
        %v2459 = vadd.f32 %v1622, %v2458
        %v2460 = vpop.f32.mrb[0].mxu0
        %v2461 = vadd.f32 %v1626, %v2460
        %v2462 = vpop.f32.mrb[0].mxu0
        %v2463 = vadd.f32 %v1622, %v2462
        %v2464 = vpop.f32.mrb[0].mxu0
        %v2465 = vadd.f32 %v1626, %v2464
        %2466 = vmatprep.mubr.bf16.mxu0 0
        %2467 = vmatmul.mubr.bf16.gmra.mrb[0].mxu0 %v1524
        %v2468 = vpop.f32.mrb[0].mxu0
        %v2469 = vadd.f32 %v1622, %v2468
        %v2470 = vpop.f32.mrb[0].mxu0
        %v2471 = vadd.f32 %v1626, %v2470
        %v2472 = vpop.f32.mrb[0].mxu0
        %v2473 = vadd.f32 %v1622, %v2472
        %v2474 = vpop.f32.mrb[0].mxu0
        %v2475 = vadd.f32 %v1626, %v2474
        %2476 = vmatprep.mubr.bf16.mxu0 0
        %2477 = vmatmul.mubr.bf16.gmra.mrb[0].mxu0 %v1525
        %v2478 = vpop.f32.mrb[0].mxu0
        %v2479 = vadd.f32 %v1622, %v2478
        %v2480 = vpop.f32.mrb[0].mxu0
        %v2481 = vadd.f32 %v1626, %v2480
        %v2482 = vpop.f32.mrb[0].mxu0
        %v2483 = vadd.f32 %v1622, %v2482
        %v2484 = vpop.f32.mrb[0].mxu0
        %v2485 = vadd.f32 %v1626, %v2484
        %2486 = vmatprep.mubr.bf16.mxu0 0
        %2487 = vmatmul.mubr.bf16.gmra.mrb[0].mxu0 %v1526
        %v2488 = vpop.f32.mrb[0].mxu0
        %v2489 = vadd.f32 %v1622, %v2488
        %v2490 = vpop.f32.mrb[0].mxu0
        %v2491 = vadd.f32 %v1626, %v2490
        %v2492 = vpop.f32.mrb[0].mxu0
        %v2493 = vadd.f32 %v1622, %v2492
        %v2494 = vpop.f32.mrb[0].mxu0
        %v2495 = vadd.f32 %v1626, %v2494
        %2496 = vmatprep.mubr.bf16.mxu0 0
        %2497 = vmatmul.mubr.bf16.gmra.mrb[0].mxu0 %v1527
        %v2498 = vpop.f32.mrb[0].mxu0
        %v2499 = vadd.f32 %v1622, %v2498
        %v2500 = vpop.f32.mrb[0].mxu0
        %v2501 = vadd.f32 %v1626, %v2500
        %v2502 = vpop.f32.mrb[0].mxu0
        %v2503 = vadd.f32 %v1622, %v2502
        %v2504 = vpop.f32.mrb[0].mxu0
        %v2505 = vadd.f32 %v1626, %v2504
        %2506 = vmatprep.mubr.bf16.mxu0 0
        %2507 = vmatmul.mubr.bf16.gmra.mrb[0].mxu0 %v1528
        %v2508 = vpop.f32.mrb[0].mxu0
        %v2509 = vadd.f32 %v1622, %v2508
        %v2510 = vpop.f32.mrb[0].mxu0
        %v2511 = vadd.f32 %v1626, %v2510
        %v2512 = vpop.f32.mrb[0].mxu0
        %v2513 = vadd.f32 %v1622, %v2512
        %v2514 = vpop.f32.mrb[0].mxu0
        %v2515 = vadd.f32 %v1626, %v2514
        %2516 = vmatprep.mubr.bf16.mxu0 0
        %2517 = vmatmul.mubr.bf16.gmra.mrb[0].mxu0 %v1529
        %v2518 = vpop.f32.mrb[0].mxu0
        %v2519 = vadd.f32 %v1622, %v2518
        %v2520 = vpop.f32.mrb[0].mxu0
        %v2521 = vadd.f32 %v1626, %v2520
        %v2522 = vpop.f32.mrb[0].mxu0
        %v2523 = vadd.f32 %v1622, %v2522
        %v2524 = vpop.f32.mrb[0].mxu0
        %v2525 = vadd.f32 %v1626, %v2524
        %2526 = vmatprep.mubr.bf16.mxu0 0
        %2527 = vmatmul.mubr.bf16.gmra.mrb[0].mxu0 %v1530
        %v2528 = vpop.f32.mrb[0].mxu0
        %v2529 = vadd.f32 %v1622, %v2528
        %v2530 = vpop.f32.mrb[0].mxu0
        %v2531 = vadd.f32 %v1626, %v2530
        %v2532 = vpop.f32.mrb[0].mxu0
        %v2533 = vadd.f32 %v1622, %v2532
        %v2534 = vpop.f32.mrb[0].mxu0
        %v2535 = vadd.f32 %v1626, %v2534
        %2536 = vmatprep.mubr.bf16.mxu0 0
        %2537 = vmatmul.mubr.bf16.gmra.mrb[0].mxu0 %v1531
        %v2538 = vpop.f32.mrb[0].mxu0
        %v2539 = vadd.f32 %v1622, %v2538
        %v2540 = vpop.f32.mrb[0].mxu0
        %v2541 = vadd.f32 %v1626, %v2540
        %v2542 = vpop.f32.mrb[0].mxu0
        %v2543 = vadd.f32 %v1622, %v2542
        %v2544 = vpop.f32.mrb[0].mxu0
        %v2545 = vadd.f32 %v1626, %v2544
        %2546 = vmatprep.mubr.bf16.mxu0 0
        %2547 = vmatmul.mubr.bf16.gmra.mrb[0].mxu0 %v1532
        %v2548 = vpop.f32.mrb[0].mxu0
        %v2549 = vadd.f32 %v1622, %v2548
        %v2550 = vpop.f32.mrb[0].mxu0
        %v2551 = vadd.f32 %v1626, %v2550
        %v2552 = vpop.f32.mrb[0].mxu0
        %v2553 = vadd.f32 %v1622, %v2552
        %v2554 = vpop.f32.mrb[0].mxu0
        %v2555 = vadd.f32 %v1626, %v2554
        %2556 = vmatprep.mubr.bf16.mxu0 0
        %2557 = vmatmul.mubr.bf16.gmra.mrb[0].mxu0 %v1533
        %v2558 = vpop.f32.mrb[0].mxu0
        %v2559 = vadd.f32 %v1622, %v2558
        %v2560 = vpop.f32.mrb[0].mxu0
        %v2561 = vadd.f32 %v1626, %v2560
        %v2562 = vpop.f32.mrb[0].mxu0
        %v2563 = vadd.f32 %v1622, %v2562
        %v2564 = vpop.f32.mrb[0].mxu0
        %v2565 = vadd.f32 %v1626, %v2564
        %2566 = vmatprep.mubr.bf16.mxu0 0
        %2567 = vmatmul.mubr.bf16.gmra.mrb[0].mxu0 %v1534
        %v2568 = vpop.f32.mrb[0].mxu0
        %v2569 = vadd.f32 %v1622, %v2568
        %v2570 = vpop.f32.mrb[0].mxu0
        %v2571 = vadd.f32 %v1626, %v2570
        %v2572 = vpop.f32.mrb[0].mxu0
        %v2573 = vadd.f32 %v1622, %v2572
        %v2574 = vpop.f32.mrb[0].mxu0
        %v2575 = vadd.f32 %v1626, %v2574
        %2576 = vmatprep.mubr.bf16.mxu0 0
        %2577 = vmatmul.mubr.bf16.gmra.mrb[0].mxu0 %v1535
        %v2578 = vpop.f32.mrb[0].mxu0
        %v2579 = vadd.f32 %v1622, %v2578
        %v2580 = vpop.f32.mrb[0].mxu0
        %v2581 = vadd.f32 %v1626, %v2580
        %v2582 = vpop.f32.mrb[0].mxu0
        %v2583 = vadd.f32 %v1622, %v2582
        %v2584 = vpop.f32.mrb[0].mxu0
        %v2585 = vadd.f32 %v1626, %v2584
        %2586 = vmatprep.mubr.bf16.mxu0 0
        %2587 = vmatmul.mubr.bf16.gmra.mrb[0].mxu0 %v1536
        %v2588 = vpop.f32.mrb[0].mxu0
        %v2589 = vadd.f32 %v1622, %v2588
        %v2590 = vpop.f32.mrb[0].mxu0
        %v2591 = vadd.f32 %v1626, %v2590
        %v2592 = vpop.f32.mrb[0].mxu0
        %v2593 = vadd.f32 %v1622, %v2592
        %v2594 = vpop.f32.mrb[0].mxu0
        %v2595 = vadd.f32 %v1626, %v2594
        %2596 = vmatprep.mubr.bf16.mxu0 0
        %2597 = vmatmul.mubr.bf16.gmra.mrb[0].mxu0 %v1537
        %v2598 = vpop.f32.mrb[0].mxu0
        %v2599 = vadd.f32 %v1622, %v2598
        %v2600 = vpop.f32.mrb[0].mxu0
        %v2601 = vadd.f32 %v1626, %v2600
        %v2602 = vpop.f32.mrb[0].mxu0
        %v2603 = vadd.f32 %v1622, %v2602
        %v2604 = vpop.f32.mrb[0].mxu0
        %v2605 = vadd.f32 %v1626, %v2604
        %2606 = vmatprep.mubr.bf16.mxu0 0
        %2607 = vmatmul.mubr.bf16.gmra.mrb[0].mxu0 %v1538
        %v2608 = vpop.f32.mrb[0].mxu0
        %v2609 = vadd.f32 %v1622, %v2608
        %v2610 = vpop.f32.mrb[0].mxu0
        %v2611 = vadd.f32 %v1626, %v2610
        %v2612 = vpop.f32.mrb[0].mxu0
        %v2613 = vadd.f32 %v1622, %v2612
        %v2614 = vpop.f32.mrb[0].mxu0
        %v2615 = vadd.f32 %v1626, %v2614
        %2616 = vmatprep.mubr.bf16.mxu0 0
        %2617 = vmatmul.mubr.bf16.gmra.mrb[0].mxu0 %v1539
        %v2618 = vpop.f32.mrb[0].mxu0
        %v2619 = vadd.f32 %v1622, %v2618
        %v2620 = vpop.f32.mrb[0].mxu0
        %v2621 = vadd.f32 %v1626, %v2620
        %v2622 = vpop.f32.mrb[0].mxu0
        %v2623 = vadd.f32 %v1622, %v2622
        %v2624 = vpop.f32.mrb[0].mxu0
        %v2625 = vadd.f32 %v1626, %v2624
        %2626 = vmatprep.mubr.bf16.mxu0 0
        %2627 = vmatmul.mubr.bf16.gmra.mrb[0].mxu0 %v1540
        %v2628 = vpop.f32.mrb[0].mxu0
        %v2629 = vadd.f32 %v1622, %v2628
        %v2630 = vpop.f32.mrb[0].mxu0
        %v2631 = vadd.f32 %v1626, %v2630
        %v2632 = vpop.f32.mrb[0].mxu0
        %v2633 = vadd.f32 %v1622, %v2632
        %v2634 = vpop.f32.mrb[0].mxu0
        %v2635 = vadd.f32 %v1626, %v2634
        %2636 = vmatprep.mubr.bf16.mxu0 0
        %2637 = vmatmul.mubr.bf16.gmra.mrb[0].mxu0 %v1541
        %v2638 = vpop.f32.mrb[0].mxu0
        %v2639 = vadd.f32 %v1622, %v2638
        %v2640 = vpop.f32.mrb[0].mxu0
        %v2641 = vadd.f32 %v1626, %v2640
        %v2642 = vpop.f32.mrb[0].mxu0
        %v2643 = vadd.f32 %v1622, %v2642
        %v2644 = vpop.f32.mrb[0].mxu0
        %v2645 = vadd.f32 %v1626, %v2644
        %2646 = vmatprep.mubr.bf16.mxu0 0
        %2647 = vmatmul.mubr.bf16.gmra.mrb[0].mxu0 %v1542
        %v2648 = vpop.f32.mrb[0].mxu0
        %v2649 = vadd.f32 %v1622, %v2648
        %v2650 = vpop.f32.mrb[0].mxu0
        %v2651 = vadd.f32 %v1626, %v2650
        %v2652 = vpop.f32.mrb[0].mxu0
        %v2653 = vadd.f32 %v1622, %v2652
        %v2654 = vpop.f32.mrb[0].mxu0
        %v2655 = vadd.f32 %v1626, %v2654
        %2656 = vmatprep.mubr.bf16.mxu0 0
        %2657 = vmatmul.mubr.bf16.gmra.mrb[0].mxu0 %v1543
        %v2658 = vpop.f32.mrb[0].mxu0
        %v2659 = vadd.f32 %v1622, %v2658
        %v2660 = vpop.f32.mrb[0].mxu0
        %v2661 = vadd.f32 %v1626, %v2660
        %v2662 = vpop.f32.mrb[0].mxu0
        %v2663 = vadd.f32 %v1622, %v2662
        %v2664 = vpop.f32.mrb[0].mxu0
        %v2665 = vadd.f32 %v1626, %v2664
        %2666 = vmatprep.mubr.bf16.mxu0 0
        %2667 = vmatmul.mubr.bf16.gmra.mrb[0].mxu0 %v1544
        %v2668 = vpop.f32.mrb[0].mxu0
        %v2669 = vadd.f32 %v1622, %v2668
        %v2670 = vpop.f32.mrb[0].mxu0
        %v2671 = vadd.f32 %v1626, %v2670
        %v2672 = vpop.f32.mrb[0].mxu0
        %v2673 = vadd.f32 %v1622, %v2672
        %v2674 = vpop.f32.mrb[0].mxu0
        %v2675 = vadd.f32 %v1626, %v2674
        %2676 = vdwg.mxu0
        %2677 = vmatprep.subr.bf16.mxu0 %v1848
        %2678 = vmatpush1.bf16.msra.mxu0 %v1847
        %2679 = vmatprep.subr.bf16.mxu0 %v1856
        %2680 = vmatpush1.bf16.msra.mxu0 %v1855
        %2681 = vmatprep.subr.bf16.mxu0 %v1864
        %2682 = vmatpush1.bf16.msra.mxu0 %v1863
        %2683 = vmatprep.subr.bf16.mxu0 %v1872
        %2684 = vmatpush1.bf16.msra.mxu0 %v1871
        %2685 = vmatprep.subr.bf16.mxu0 %v1880
        %2686 = vmatpush1.bf16.msra.mxu0 %v1879
        %2687 = vmatprep.subr.bf16.mxu0 %v1888
        %2688 = vmatpush1.bf16.msra.mxu0 %v1887
        %2689 = vmatprep.subr.bf16.mxu0 %v1896
        %2690 = vmatpush1.bf16.msra.mxu0 %v1895
        %2691 = vmatprep.subr.bf16.mxu0 %v1904
        %2692 = vmatpush1.bf16.msra.mxu0 %v1903
        %2693 = vmatprep.subr.bf16.mxu0 0
        %2694 = vmatpush1.bf16.msra.mxu0 0
        %2695 = vmatprep.subr.bf16.mxu0 0
        %2696 = vmatpush1.bf16.msra.mxu0 0
        %2697 = vmatprep.subr.bf16.mxu0 0
        %2698 = vmatpush1.bf16.msra.mxu0 0
        %2699 = vmatprep.subr.bf16.mxu0 0
        %2700 = vmatpush1.bf16.msra.mxu0 0
        %2701 = vmatprep.subr.bf16.mxu0 0
        %2702 = vmatpush1.bf16.msra.mxu0 0
        %2703 = vmatprep.subr.bf16.mxu0 0
        %2704 = vmatpush1.bf16.msra.mxu0 0
        %2705 = vmatprep.subr.bf16.mxu0 0
        %2706 = vmatpush1.bf16.msra.mxu0 0
        %2707 = vmatprep.subr.bf16.mxu0 0
        %2708 = vmatpush1.bf16.msra.mxu0 0
        %2709 = vmatprep.mubr.bf16.mxu0 0
        %2710 = vmatmul.mubr.bf16.gmra.mrb[0].mxu0 %v1513
        %v2711 = vpop.f32.mrb[0].mxu0
        %v2712 = vadd.f32 %v1630, %v2711
        %v2713 = vpop.f32.mrb[0].mxu0
        %v2714 = vadd.f32 %v1634, %v2713
        %v2715 = vpop.f32.mrb[0].mxu0
        %v2716 = vadd.f32 %v1630, %v2715
        %v2717 = vpop.f32.mrb[0].mxu0
        %v2718 = vadd.f32 %v1634, %v2717
        %2719 = vmatprep.mubr.bf16.mxu0 0
        %2720 = vmatmul.mubr.bf16.gmra.mrb[0].mxu0 %v1514
        %v2721 = vpop.f32.mrb[0].mxu0
        %v2722 = vadd.f32 %v1630, %v2721
        %v2723 = vpop.f32.mrb[0].mxu0
        %v2724 = vadd.f32 %v1634, %v2723
        %v2725 = vpop.f32.mrb[0].mxu0
        %v2726 = vadd.f32 %v1630, %v2725
        %v2727 = vpop.f32.mrb[0].mxu0
        %v2728 = vadd.f32 %v1634, %v2727
        %2729 = vmatprep.mubr.bf16.mxu0 0
        %2730 = vmatmul.mubr.bf16.gmra.mrb[0].mxu0 %v1515
        %v2731 = vpop.f32.mrb[0].mxu0
        %v2732 = vadd.f32 %v1630, %v2731
        %v2733 = vpop.f32.mrb[0].mxu0
        %v2734 = vadd.f32 %v1634, %v2733
        %v2735 = vpop.f32.mrb[0].mxu0
        %v2736 = vadd.f32 %v1630, %v2735
        %v2737 = vpop.f32.mrb[0].mxu0
        %v2738 = vadd.f32 %v1634, %v2737
        %2739 = vmatprep.mubr.bf16.mxu0 0
        %2740 = vmatmul.mubr.bf16.gmra.mrb[0].mxu0 %v1516
        %v2741 = vpop.f32.mrb[0].mxu0
        %v2742 = vadd.f32 %v1630, %v2741
        %v2743 = vpop.f32.mrb[0].mxu0
        %v2744 = vadd.f32 %v1634, %v2743
        %v2745 = vpop.f32.mrb[0].mxu0
        %v2746 = vadd.f32 %v1630, %v2745
        %v2747 = vpop.f32.mrb[0].mxu0
        %v2748 = vadd.f32 %v1634, %v2747
        %2749 = vmatprep.mubr.bf16.mxu0 0
        %2750 = vmatmul.mubr.bf16.gmra.mrb[0].mxu0 %v1517
        %v2751 = vpop.f32.mrb[0].mxu0
        %v2752 = vadd.f32 %v1630, %v2751
        %v2753 = vpop.f32.mrb[0].mxu0
        %v2754 = vadd.f32 %v1634, %v2753
        %v2755 = vpop.f32.mrb[0].mxu0
        %v2756 = vadd.f32 %v1630, %v2755
        %v2757 = vpop.f32.mrb[0].mxu0
        %v2758 = vadd.f32 %v1634, %v2757
        %2759 = vmatprep.mubr.bf16.mxu0 0
        %2760 = vmatmul.mubr.bf16.gmra.mrb[0].mxu0 %v1518
        %v2761 = vpop.f32.mrb[0].mxu0
        %v2762 = vadd.f32 %v1630, %v2761
        %v2763 = vpop.f32.mrb[0].mxu0
        %v2764 = vadd.f32 %v1634, %v2763
        %v2765 = vpop.f32.mrb[0].mxu0
        %v2766 = vadd.f32 %v1630, %v2765
        %v2767 = vpop.f32.mrb[0].mxu0
        %v2768 = vadd.f32 %v1634, %v2767
        %2769 = vmatprep.mubr.bf16.mxu0 0
        %2770 = vmatmul.mubr.bf16.gmra.mrb[0].mxu0 %v1519
        %v2771 = vpop.f32.mrb[0].mxu0
        %v2772 = vadd.f32 %v1630, %v2771
        %v2773 = vpop.f32.mrb[0].mxu0
        %v2774 = vadd.f32 %v1634, %v2773
        %v2775 = vpop.f32.mrb[0].mxu0
        %v2776 = vadd.f32 %v1630, %v2775
        %v2777 = vpop.f32.mrb[0].mxu0
        %v2778 = vadd.f32 %v1634, %v2777
        %2779 = vmatprep.mubr.bf16.mxu0 0
        %2780 = vmatmul.mubr.bf16.gmra.mrb[0].mxu0 %v1520
        %v2781 = vpop.f32.mrb[0].mxu0
        %v2782 = vadd.f32 %v1630, %v2781
        %v2783 = vpop.f32.mrb[0].mxu0
        %v2784 = vadd.f32 %v1634, %v2783
        %v2785 = vpop.f32.mrb[0].mxu0
        %v2786 = vadd.f32 %v1630, %v2785
        %v2787 = vpop.f32.mrb[0].mxu0
        %v2788 = vadd.f32 %v1634, %v2787
        %2789 = vmatprep.mubr.bf16.mxu0 0
        %2790 = vmatmul.mubr.bf16.gmra.mrb[0].mxu0 %v1521
        %v2791 = vpop.f32.mrb[0].mxu0
        %v2792 = vadd.f32 %v1630, %v2791
        %v2793 = vpop.f32.mrb[0].mxu0
        %v2794 = vadd.f32 %v1634, %v2793
        %v2795 = vpop.f32.mrb[0].mxu0
        %v2796 = vadd.f32 %v1630, %v2795
        %v2797 = vpop.f32.mrb[0].mxu0
        %v2798 = vadd.f32 %v1634, %v2797
        %2799 = vmatprep.mubr.bf16.mxu0 0
        %2800 = vmatmul.mubr.bf16.gmra.mrb[0].mxu0 %v1522
        %v2801 = vpop.f32.mrb[0].mxu0
        %v2802 = vadd.f32 %v1630, %v2801
        %v2803 = vpop.f32.mrb[0].mxu0
        %v2804 = vadd.f32 %v1634, %v2803
        %v2805 = vpop.f32.mrb[0].mxu0
        %v2806 = vadd.f32 %v1630, %v2805
        %v2807 = vpop.f32.mrb[0].mxu0
        %v2808 = vadd.f32 %v1634, %v2807
        %2809 = vmatprep.mubr.bf16.mxu0 0
        %2810 = vmatmul.mubr.bf16.gmra.mrb[0].mxu0 %v1523
        %v2811 = vpop.f32.mrb[0].mxu0
        %v2812 = vadd.f32 %v1630, %v2811
        %v2813 = vpop.f32.mrb[0].mxu0
        %v2814 = vadd.f32 %v1634, %v2813
        %v2815 = vpop.f32.mrb[0].mxu0
        %v2816 = vadd.f32 %v1630, %v2815
        %v2817 = vpop.f32.mrb[0].mxu0
        %v2818 = vadd.f32 %v1634, %v2817
        %2819 = vmatprep.mubr.bf16.mxu0 0
        %2820 = vmatmul.mubr.bf16.gmra.mrb[0].mxu0 %v1524
        %v2821 = vpop.f32.mrb[0].mxu0
        %v2822 = vadd.f32 %v1630, %v2821
        %v2823 = vpop.f32.mrb[0].mxu0
        %v2824 = vadd.f32 %v1634, %v2823
        %v2825 = vpop.f32.mrb[0].mxu0
        %v2826 = vadd.f32 %v1630, %v2825
        %v2827 = vpop.f32.mrb[0].mxu0
        %v2828 = vadd.f32 %v1634, %v2827
        %2829 = vmatprep.mubr.bf16.mxu0 0
        %2830 = vmatmul.mubr.bf16.gmra.mrb[0].mxu0 %v1525
        %v2831 = vpop.f32.mrb[0].mxu0
        %v2832 = vadd.f32 %v1630, %v2831
        %v2833 = vpop.f32.mrb[0].mxu0
        %v2834 = vadd.f32 %v1634, %v2833
        %v2835 = vpop.f32.mrb[0].mxu0
        %v2836 = vadd.f32 %v1630, %v2835
        %v2837 = vpop.f32.mrb[0].mxu0
        %v2838 = vadd.f32 %v1634, %v2837
        %2839 = vmatprep.mubr.bf16.mxu0 0
        %2840 = vmatmul.mubr.bf16.gmra.mrb[0].mxu0 %v1526
        %v2841 = vpop.f32.mrb[0].mxu0
        %v2842 = vadd.f32 %v1630, %v2841
        %v2843 = vpop.f32.mrb[0].mxu0
        %v2844 = vadd.f32 %v1634, %v2843
        %v2845 = vpop.f32.mrb[0].mxu0
        %v2846 = vadd.f32 %v1630, %v2845
        %v2847 = vpop.f32.mrb[0].mxu0
        %v2848 = vadd.f32 %v1634, %v2847
        %2849 = vmatprep.mubr.bf16.mxu0 0
        %2850 = vmatmul.mubr.bf16.gmra.mrb[0].mxu0 %v1527
        %v2851 = vpop.f32.mrb[0].mxu0
        %v2852 = vadd.f32 %v1630, %v2851
        %v2853 = vpop.f32.mrb[0].mxu0
        %v2854 = vadd.f32 %v1634, %v2853
        %v2855 = vpop.f32.mrb[0].mxu0
        %v2856 = vadd.f32 %v1630, %v2855
        %v2857 = vpop.f32.mrb[0].mxu0
        %v2858 = vadd.f32 %v1634, %v2857
        %2859 = vmatprep.mubr.bf16.mxu0 0
        %2860 = vmatmul.mubr.bf16.gmra.mrb[0].mxu0 %v1528
        %v2861 = vpop.f32.mrb[0].mxu0
        %v2862 = vadd.f32 %v1630, %v2861
        %v2863 = vpop.f32.mrb[0].mxu0
        %v2864 = vadd.f32 %v1634, %v2863
        %v2865 = vpop.f32.mrb[0].mxu0
        %v2866 = vadd.f32 %v1630, %v2865
        %v2867 = vpop.f32.mrb[0].mxu0
        %v2868 = vadd.f32 %v1634, %v2867
        %2869 = vmatprep.mubr.bf16.mxu0 0
        %2870 = vmatmul.mubr.bf16.gmra.mrb[0].mxu0 %v1529
        %v2871 = vpop.f32.mrb[0].mxu0
        %v2872 = vadd.f32 %v1630, %v2871
        %v2873 = vpop.f32.mrb[0].mxu0
        %v2874 = vadd.f32 %v1634, %v2873
        %v2875 = vpop.f32.mrb[0].mxu0
        %v2876 = vadd.f32 %v1630, %v2875
        %v2877 = vpop.f32.mrb[0].mxu0
        %v2878 = vadd.f32 %v1634, %v2877
        %2879 = vmatprep.mubr.bf16.mxu0 0
        %2880 = vmatmul.mubr.bf16.gmra.mrb[0].mxu0 %v1530
        %v2881 = vpop.f32.mrb[0].mxu0
        %v2882 = vadd.f32 %v1630, %v2881
        %v2883 = vpop.f32.mrb[0].mxu0
        %v2884 = vadd.f32 %v1634, %v2883
        %v2885 = vpop.f32.mrb[0].mxu0
        %v2886 = vadd.f32 %v1630, %v2885
        %v2887 = vpop.f32.mrb[0].mxu0
        %v2888 = vadd.f32 %v1634, %v2887
        %2889 = vmatprep.mubr.bf16.mxu0 0
        %2890 = vmatmul.mubr.bf16.gmra.mrb[0].mxu0 %v1531
        %v2891 = vpop.f32.mrb[0].mxu0
        %v2892 = vadd.f32 %v1630, %v2891
        %v2893 = vpop.f32.mrb[0].mxu0
        %v2894 = vadd.f32 %v1634, %v2893
        %v2895 = vpop.f32.mrb[0].mxu0
        %v2896 = vadd.f32 %v1630, %v2895
        %v2897 = vpop.f32.mrb[0].mxu0
        %v2898 = vadd.f32 %v1634, %v2897
        %2899 = vmatprep.mubr.bf16.mxu0 0
        %2900 = vmatmul.mubr.bf16.gmra.mrb[0].mxu0 %v1532
        %v2901 = vpop.f32.mrb[0].mxu0
        %v2902 = vadd.f32 %v1630, %v2901
        %v2903 = vpop.f32.mrb[0].mxu0
        %v2904 = vadd.f32 %v1634, %v2903
        %v2905 = vpop.f32.mrb[0].mxu0
        %v2906 = vadd.f32 %v1630, %v2905
        %v2907 = vpop.f32.mrb[0].mxu0
        %v2908 = vadd.f32 %v1634, %v2907
        %2909 = vmatprep.mubr.bf16.mxu0 0
        %2910 = vmatmul.mubr.bf16.gmra.mrb[0].mxu0 %v1533
        %v2911 = vpop.f32.mrb[0].mxu0
        %v2912 = vadd.f32 %v1630, %v2911
        %v2913 = vpop.f32.mrb[0].mxu0
        %v2914 = vadd.f32 %v1634, %v2913
        %v2915 = vpop.f32.mrb[0].mxu0
        %v2916 = vadd.f32 %v1630, %v2915
        %v2917 = vpop.f32.mrb[0].mxu0
        %v2918 = vadd.f32 %v1634, %v2917
        %2919 = vmatprep.mubr.bf16.mxu0 0
        %2920 = vmatmul.mubr.bf16.gmra.mrb[0].mxu0 %v1534
        %v2921 = vpop.f32.mrb[0].mxu0
        %v2922 = vadd.f32 %v1630, %v2921
        %v2923 = vpop.f32.mrb[0].mxu0
        %v2924 = vadd.f32 %v1634, %v2923
        %v2925 = vpop.f32.mrb[0].mxu0
        %v2926 = vadd.f32 %v1630, %v2925
        %v2927 = vpop.f32.mrb[0].mxu0
        %v2928 = vadd.f32 %v1634, %v2927
        %2929 = vmatprep.mubr.bf16.mxu0 0
        %2930 = vmatmul.mubr.bf16.gmra.mrb[0].mxu0 %v1535
        %v2931 = vpop.f32.mrb[0].mxu0
        %v2932 = vadd.f32 %v1630, %v2931
        %v2933 = vpop.f32.mrb[0].mxu0
        %v2934 = vadd.f32 %v1634, %v2933
        %v2935 = vpop.f32.mrb[0].mxu0
        %v2936 = vadd.f32 %v1630, %v2935
        %v2937 = vpop.f32.mrb[0].mxu0
        %v2938 = vadd.f32 %v1634, %v2937
        %2939 = vmatprep.mubr.bf16.mxu0 0
        %2940 = vmatmul.mubr.bf16.gmra.mrb[0].mxu0 %v1536
        %v2941 = vpop.f32.mrb[0].mxu0
        %v2942 = vadd.f32 %v1630, %v2941
        %v2943 = vpop.f32.mrb[0].mxu0
        %v2944 = vadd.f32 %v1634, %v2943
        %v2945 = vpop.f32.mrb[0].mxu0
        %v2946 = vadd.f32 %v1630, %v2945
        %v2947 = vpop.f32.mrb[0].mxu0
        %v2948 = vadd.f32 %v1634, %v2947
        %2949 = vmatprep.mubr.bf16.mxu0 0
        %2950 = vmatmul.mubr.bf16.gmra.mrb[0].mxu0 %v1537
        %v2951 = vpop.f32.mrb[0].mxu0
        %v2952 = vadd.f32 %v1630, %v2951
        %v2953 = vpop.f32.mrb[0].mxu0
        %v2954 = vadd.f32 %v1634, %v2953
        %v2955 = vpop.f32.mrb[0].mxu0
        %v2956 = vadd.f32 %v1630, %v2955
        %v2957 = vpop.f32.mrb[0].mxu0
        %v2958 = vadd.f32 %v1634, %v2957
        %2959 = vmatprep.mubr.bf16.mxu0 0
        %2960 = vmatmul.mubr.bf16.gmra.mrb[0].mxu0 %v1538
        %v2961 = vpop.f32.mrb[0].mxu0
        %v2962 = vadd.f32 %v1630, %v2961
        %v2963 = vpop.f32.mrb[0].mxu0
        %v2964 = vadd.f32 %v1634, %v2963
        %v2965 = vpop.f32.mrb[0].mxu0
        %v2966 = vadd.f32 %v1630, %v2965
        %v2967 = vpop.f32.mrb[0].mxu0
        %v2968 = vadd.f32 %v1634, %v2967
        %2969 = vmatprep.mubr.bf16.mxu0 0
        %2970 = vmatmul.mubr.bf16.gmra.mrb[0].mxu0 %v1539
        %v2971 = vpop.f32.mrb[0].mxu0
        %v2972 = vadd.f32 %v1630, %v2971
        %v2973 = vpop.f32.mrb[0].mxu0
        %v2974 = vadd.f32 %v1634, %v2973
        %v2975 = vpop.f32.mrb[0].mxu0
        %v2976 = vadd.f32 %v1630, %v2975
        %v2977 = vpop.f32.mrb[0].mxu0
        %v2978 = vadd.f32 %v1634, %v2977
        %2979 = vmatprep.mubr.bf16.mxu0 0
        %2980 = vmatmul.mubr.bf16.gmra.mrb[0].mxu0 %v1540
        %v2981 = vpop.f32.mrb[0].mxu0
        %v2982 = vadd.f32 %v1630, %v2981
        %v2983 = vpop.f32.mrb[0].mxu0
        %v2984 = vadd.f32 %v1634, %v2983
        %v2985 = vpop.f32.mrb[0].mxu0
        %v2986 = vadd.f32 %v1630, %v2985
        %v2987 = vpop.f32.mrb[0].mxu0
        %v2988 = vadd.f32 %v1634, %v2987
        %2989 = vmatprep.mubr.bf16.mxu0 0
        %2990 = vmatmul.mubr.bf16.gmra.mrb[0].mxu0 %v1541
        %v2991 = vpop.f32.mrb[0].mxu0
        %v2992 = vadd.f32 %v1630, %v2991
        %v2993 = vpop.f32.mrb[0].mxu0
        %v2994 = vadd.f32 %v1634, %v2993
        %v2995 = vpop.f32.mrb[0].mxu0
        %v2996 = vadd.f32 %v1630, %v2995
        %v2997 = vpop.f32.mrb[0].mxu0
        %v2998 = vadd.f32 %v1634, %v2997
        %2999 = vmatprep.mubr.bf16.mxu0 0
        %3000 = vmatmul.mubr.bf16.gmra.mrb[0].mxu0 %v1542
        %v3001 = vpop.f32.mrb[0].mxu0
        %v3002 = vadd.f32 %v1630, %v3001
        %v3003 = vpop.f32.mrb[0].mxu0
        %v3004 = vadd.f32 %v1634, %v3003
        %v3005 = vpop.f32.mrb[0].mxu0
        %v3006 = vadd.f32 %v1630, %v3005
        %v3007 = vpop.f32.mrb[0].mxu0
        %v3008 = vadd.f32 %v1634, %v3007
        %3009 = vmatprep.mubr.bf16.mxu0 0
        %3010 = vmatmul.mubr.bf16.gmra.mrb[0].mxu0 %v1543
        %v3011 = vpop.f32.mrb[0].mxu0
        %v3012 = vadd.f32 %v1630, %v3011
        %v3013 = vpop.f32.mrb[0].mxu0
        %v3014 = vadd.f32 %v1634, %v3013
        %v3015 = vpop.f32.mrb[0].mxu0
        %v3016 = vadd.f32 %v1630, %v3015
        %v3017 = vpop.f32.mrb[0].mxu0
        %v3018 = vadd.f32 %v1634, %v3017
        %3019 = vmatprep.mubr.bf16.mxu0 0
        %3020 = vmatmul.mubr.bf16.gmra.mrb[0].mxu0 %v1544
        %v3021 = vpop.f32.mrb[0].mxu0
        %v3022 = vadd.f32 %v1630, %v3021
        %v3023 = vpop.f32.mrb[0].mxu0
        %v3024 = vadd.f32 %v1634, %v3023
        %v3025 = vpop.f32.mrb[0].mxu0
        %v3026 = vadd.f32 %v1630, %v3025
        %v3027 = vpop.f32.mrb[0].mxu0
        %v3028 = vadd.f32 %v1634, %v3027
        %3029 = vdwg.mxu0
        %3030 = vmatprep.subr.bf16.mxu0 %v1850
        %3031 = vmatpush1.bf16.msra.mxu0 %v1849
        %3032 = vmatprep.subr.bf16.mxu0 %v1858
        %3033 = vmatpush1.bf16.msra.mxu0 %v1857
        %3034 = vmatprep.subr.bf16.mxu0 %v1866
        %3035 = vmatpush1.bf16.msra.mxu0 %v1865
        %3036 = vmatprep.subr.bf16.mxu0 %v1874
        %3037 = vmatpush1.bf16.msra.mxu0 %v1873
        %3038 = vmatprep.subr.bf16.mxu0 %v1882
        %3039 = vmatpush1.bf16.msra.mxu0 %v1881
        %3040 = vmatprep.subr.bf16.mxu0 %v1890
        %3041 = vmatpush1.bf16.msra.mxu0 %v1889
        %3042 = vmatprep.subr.bf16.mxu0 %v1898
        %3043 = vmatpush1.bf16.msra.mxu0 %v1897
        %3044 = vmatprep.subr.bf16.mxu0 %v1906
        %3045 = vmatpush1.bf16.msra.mxu0 %v1905
        %3046 = vmatprep.subr.bf16.mxu0 0
        %3047 = vmatpush1.bf16.msra.mxu0 0
        %3048 = vmatprep.subr.bf16.mxu0 0
        %3049 = vmatpush1.bf16.msra.mxu0 0
        %3050 = vmatprep.subr.bf16.mxu0 0
        %3051 = vmatpush1.bf16.msra.mxu0 0
        %3052 = vmatprep.subr.bf16.mxu0 0
        %3053 = vmatpush1.bf16.msra.mxu0 0
        %3054 = vmatprep.subr.bf16.mxu0 0
        %3055 = vmatpush1.bf16.msra.mxu0 0
        %3056 = vmatprep.subr.bf16.mxu0 0
        %3057 = vmatpush1.bf16.msra.mxu0 0
        %3058 = vmatprep.subr.bf16.mxu0 0
        %3059 = vmatpush1.bf16.msra.mxu0 0
        %3060 = vmatprep.subr.bf16.mxu0 0
        %3061 = vmatpush1.bf16.msra.mxu0 0
        %3062 = vmatprep.mubr.bf16.mxu0 0
        %3063 = vmatmul.mubr.bf16.gmra.mrb[0].mxu0 %v1513
        %v3064 = vpop.f32.mrb[0].mxu0
        %v3065 = vadd.f32 %v1638, %v3064
        %v3066 = vpop.f32.mrb[0].mxu0
        %v3067 = vadd.f32 %v1642, %v3066
        %v3068 = vpop.f32.mrb[0].mxu0
        %v3069 = vadd.f32 %v1638, %v3068
        %v3070 = vpop.f32.mrb[0].mxu0
        %v3071 = vadd.f32 %v1642, %v3070
        %3072 = vmatprep.mubr.bf16.mxu0 0
        %3073 = vmatmul.mubr.bf16.gmra.mrb[0].mxu0 %v1514
        %v3074 = vpop.f32.mrb[0].mxu0
        %v3075 = vadd.f32 %v1638, %v3074
        %v3076 = vpop.f32.mrb[0].mxu0
        %v3077 = vadd.f32 %v1642, %v3076
        %v3078 = vpop.f32.mrb[0].mxu0
        %v3079 = vadd.f32 %v1638, %v3078
        %v3080 = vpop.f32.mrb[0].mxu0
        %v3081 = vadd.f32 %v1642, %v3080
        %3082 = vmatprep.mubr.bf16.mxu0 0
        %3083 = vmatmul.mubr.bf16.gmra.mrb[0].mxu0 %v1515
        %v3084 = vpop.f32.mrb[0].mxu0
        %v3085 = vadd.f32 %v1638, %v3084
        %v3086 = vpop.f32.mrb[0].mxu0
        %v3087 = vadd.f32 %v1642, %v3086
        %v3088 = vpop.f32.mrb[0].mxu0
        %v3089 = vadd.f32 %v1638, %v3088
        %v3090 = vpop.f32.mrb[0].mxu0
        %v3091 = vadd.f32 %v1642, %v3090
        %3092 = vmatprep.mubr.bf16.mxu0 0
        %3093 = vmatmul.mubr.bf16.gmra.mrb[0].mxu0 %v1516
        %v3094 = vpop.f32.mrb[0].mxu0
        %v3095 = vadd.f32 %v1638, %v3094
        %v3096 = vpop.f32.mrb[0].mxu0
        %v3097 = vadd.f32 %v1642, %v3096
        %v3098 = vpop.f32.mrb[0].mxu0
        %v3099 = vadd.f32 %v1638, %v3098
        %v3100 = vpop.f32.mrb[0].mxu0
        %v3101 = vadd.f32 %v1642, %v3100
        %3102 = vmatprep.mubr.bf16.mxu0 0
        %3103 = vmatmul.mubr.bf16.gmra.mrb[0].mxu0 %v1517
        %v3104 = vpop.f32.mrb[0].mxu0
        %v3105 = vadd.f32 %v1638, %v3104
        %v3106 = vpop.f32.mrb[0].mxu0
        %v3107 = vadd.f32 %v1642, %v3106
        %v3108 = vpop.f32.mrb[0].mxu0
        %v3109 = vadd.f32 %v1638, %v3108
        %v3110 = vpop.f32.mrb[0].mxu0
        %v3111 = vadd.f32 %v1642, %v3110
        %3112 = vmatprep.mubr.bf16.mxu0 0
        %3113 = vmatmul.mubr.bf16.gmra.mrb[0].mxu0 %v1518
        %v3114 = vpop.f32.mrb[0].mxu0
        %v3115 = vadd.f32 %v1638, %v3114
        %v3116 = vpop.f32.mrb[0].mxu0
        %v3117 = vadd.f32 %v1642, %v3116
        %v3118 = vpop.f32.mrb[0].mxu0
        %v3119 = vadd.f32 %v1638, %v3118
        %v3120 = vpop.f32.mrb[0].mxu0
        %v3121 = vadd.f32 %v1642, %v3120
        %3122 = vmatprep.mubr.bf16.mxu0 0
        %3123 = vmatmul.mubr.bf16.gmra.mrb[0].mxu0 %v1519
        %v3124 = vpop.f32.mrb[0].mxu0
        %v3125 = vadd.f32 %v1638, %v3124
        %v3126 = vpop.f32.mrb[0].mxu0
        %v3127 = vadd.f32 %v1642, %v3126
        %v3128 = vpop.f32.mrb[0].mxu0
        %v3129 = vadd.f32 %v1638, %v3128
        %v3130 = vpop.f32.mrb[0].mxu0
        %v3131 = vadd.f32 %v1642, %v3130
        %3132 = vmatprep.mubr.bf16.mxu0 0
        %3133 = vmatmul.mubr.bf16.gmra.mrb[0].mxu0 %v1520
        %v3134 = vpop.f32.mrb[0].mxu0
        %v3135 = vadd.f32 %v1638, %v3134
        %v3136 = vpop.f32.mrb[0].mxu0
        %v3137 = vadd.f32 %v1642, %v3136
        %v3138 = vpop.f32.mrb[0].mxu0
        %v3139 = vadd.f32 %v1638, %v3138
        %v3140 = vpop.f32.mrb[0].mxu0
        %v3141 = vadd.f32 %v1642, %v3140
        %3142 = vmatprep.mubr.bf16.mxu0 0
        %3143 = vmatmul.mubr.bf16.gmra.mrb[0].mxu0 %v1521
        %v3144 = vpop.f32.mrb[0].mxu0
        %v3145 = vadd.f32 %v1638, %v3144
        %v3146 = vpop.f32.mrb[0].mxu0
        %v3147 = vadd.f32 %v1642, %v3146
        %v3148 = vpop.f32.mrb[0].mxu0
        %v3149 = vadd.f32 %v1638, %v3148
        %v3150 = vpop.f32.mrb[0].mxu0
        %v3151 = vadd.f32 %v1642, %v3150
        %3152 = vmatprep.mubr.bf16.mxu0 0
        %3153 = vmatmul.mubr.bf16.gmra.mrb[0].mxu0 %v1522
        %v3154 = vpop.f32.mrb[0].mxu0
        %v3155 = vadd.f32 %v1638, %v3154
        %v3156 = vpop.f32.mrb[0].mxu0
        %v3157 = vadd.f32 %v1642, %v3156
        %v3158 = vpop.f32.mrb[0].mxu0
        %v3159 = vadd.f32 %v1638, %v3158
        %v3160 = vpop.f32.mrb[0].mxu0
        %v3161 = vadd.f32 %v1642, %v3160
        %3162 = vmatprep.mubr.bf16.mxu0 0
        %3163 = vmatmul.mubr.bf16.gmra.mrb[0].mxu0 %v1523
        %v3164 = vpop.f32.mrb[0].mxu0
        %v3165 = vadd.f32 %v1638, %v3164
        %v3166 = vpop.f32.mrb[0].mxu0
        %v3167 = vadd.f32 %v1642, %v3166
        %v3168 = vpop.f32.mrb[0].mxu0
        %v3169 = vadd.f32 %v1638, %v3168
        %v3170 = vpop.f32.mrb[0].mxu0
        %v3171 = vadd.f32 %v1642, %v3170
        %3172 = vmatprep.mubr.bf16.mxu0 0
        %3173 = vmatmul.mubr.bf16.gmra.mrb[0].mxu0 %v1524
        %v3174 = vpop.f32.mrb[0].mxu0
        %v3175 = vadd.f32 %v1638, %v3174
        %v3176 = vpop.f32.mrb[0].mxu0
        %v3177 = vadd.f32 %v1642, %v3176
        %v3178 = vpop.f32.mrb[0].mxu0
        %v3179 = vadd.f32 %v1638, %v3178
        %v3180 = vpop.f32.mrb[0].mxu0
        %v3181 = vadd.f32 %v1642, %v3180
        %3182 = vmatprep.mubr.bf16.mxu0 0
        %3183 = vmatmul.mubr.bf16.gmra.mrb[0].mxu0 %v1525
        %v3184 = vpop.f32.mrb[0].mxu0
        %v3185 = vadd.f32 %v1638, %v3184
        %v3186 = vpop.f32.mrb[0].mxu0
        %v3187 = vadd.f32 %v1642, %v3186
        %v3188 = vpop.f32.mrb[0].mxu0
        %v3189 = vadd.f32 %v1638, %v3188
        %v3190 = vpop.f32.mrb[0].mxu0
        %v3191 = vadd.f32 %v1642, %v3190
        %3192 = vmatprep.mubr.bf16.mxu0 0
        %3193 = vmatmul.mubr.bf16.gmra.mrb[0].mxu0 %v1526
        %v3194 = vpop.f32.mrb[0].mxu0
        %v3195 = vadd.f32 %v1638, %v3194
        %v3196 = vpop.f32.mrb[0].mxu0
        %v3197 = vadd.f32 %v1642, %v3196
        %v3198 = vpop.f32.mrb[0].mxu0
        %v3199 = vadd.f32 %v1638, %v3198
        %v3200 = vpop.f32.mrb[0].mxu0
        %v3201 = vadd.f32 %v1642, %v3200
        %3202 = vmatprep.mubr.bf16.mxu0 0
        %3203 = vmatmul.mubr.bf16.gmra.mrb[0].mxu0 %v1527
        %v3204 = vpop.f32.mrb[0].mxu0
        %v3205 = vadd.f32 %v1638, %v3204
        %v3206 = vpop.f32.mrb[0].mxu0
        %v3207 = vadd.f32 %v1642, %v3206
        %v3208 = vpop.f32.mrb[0].mxu0
        %v3209 = vadd.f32 %v1638, %v3208
        %v3210 = vpop.f32.mrb[0].mxu0
        %v3211 = vadd.f32 %v1642, %v3210
        %3212 = vmatprep.mubr.bf16.mxu0 0
        %3213 = vmatmul.mubr.bf16.gmra.mrb[0].mxu0 %v1528
        %v3214 = vpop.f32.mrb[0].mxu0
        %v3215 = vadd.f32 %v1638, %v3214
        %v3216 = vpop.f32.mrb[0].mxu0
        %v3217 = vadd.f32 %v1642, %v3216
        %v3218 = vpop.f32.mrb[0].mxu0
        %v3219 = vadd.f32 %v1638, %v3218
        %v3220 = vpop.f32.mrb[0].mxu0
        %v3221 = vadd.f32 %v1642, %v3220
        %3222 = vmatprep.mubr.bf16.mxu0 0
        %3223 = vmatmul.mubr.bf16.gmra.mrb[0].mxu0 %v1529
        %v3224 = vpop.f32.mrb[0].mxu0
        %v3225 = vadd.f32 %v1638, %v3224
        %v3226 = vpop.f32.mrb[0].mxu0
        %v3227 = vadd.f32 %v1642, %v3226
        %v3228 = vpop.f32.mrb[0].mxu0
        %v3229 = vadd.f32 %v1638, %v3228
        %v3230 = vpop.f32.mrb[0].mxu0
        %v3231 = vadd.f32 %v1642, %v3230
        %3232 = vmatprep.mubr.bf16.mxu0 0
        %3233 = vmatmul.mubr.bf16.gmra.mrb[0].mxu0 %v1530
        %v3234 = vpop.f32.mrb[0].mxu0
        %v3235 = vadd.f32 %v1638, %v3234
        %v3236 = vpop.f32.mrb[0].mxu0
        %v3237 = vadd.f32 %v1642, %v3236
        %v3238 = vpop.f32.mrb[0].mxu0
        %v3239 = vadd.f32 %v1638, %v3238
        %v3240 = vpop.f32.mrb[0].mxu0
        %v3241 = vadd.f32 %v1642, %v3240
        %3242 = vmatprep.mubr.bf16.mxu0 0
        %3243 = vmatmul.mubr.bf16.gmra.mrb[0].mxu0 %v1531
        %v3244 = vpop.f32.mrb[0].mxu0
        %v3245 = vadd.f32 %v1638, %v3244
        %v3246 = vpop.f32.mrb[0].mxu0
        %v3247 = vadd.f32 %v1642, %v3246
        %v3248 = vpop.f32.mrb[0].mxu0
        %v3249 = vadd.f32 %v1638, %v3248
        %v3250 = vpop.f32.mrb[0].mxu0
        %v3251 = vadd.f32 %v1642, %v3250
        %3252 = vmatprep.mubr.bf16.mxu0 0
        %3253 = vmatmul.mubr.bf16.gmra.mrb[0].mxu0 %v1532
        %v3254 = vpop.f32.mrb[0].mxu0
        %v3255 = vadd.f32 %v1638, %v3254
        %v3256 = vpop.f32.mrb[0].mxu0
        %v3257 = vadd.f32 %v1642, %v3256
        %v3258 = vpop.f32.mrb[0].mxu0
        %v3259 = vadd.f32 %v1638, %v3258
        %v3260 = vpop.f32.mrb[0].mxu0
        %v3261 = vadd.f32 %v1642, %v3260
        %3262 = vmatprep.mubr.bf16.mxu0 0
        %3263 = vmatmul.mubr.bf16.gmra.mrb[0].mxu0 %v1533
        %v3264 = vpop.f32.mrb[0].mxu0
        %v3265 = vadd.f32 %v1638, %v3264
        %v3266 = vpop.f32.mrb[0].mxu0
        %v3267 = vadd.f32 %v1642, %v3266
        %v3268 = vpop.f32.mrb[0].mxu0
        %v3269 = vadd.f32 %v1638, %v3268
        %v3270 = vpop.f32.mrb[0].mxu0
        %v3271 = vadd.f32 %v1642, %v3270
        %3272 = vmatprep.mubr.bf16.mxu0 0
        %3273 = vmatmul.mubr.bf16.gmra.mrb[0].mxu0 %v1534
        %v3274 = vpop.f32.mrb[0].mxu0
        %v3275 = vadd.f32 %v1638, %v3274
        %v3276 = vpop.f32.mrb[0].mxu0
        %v3277 = vadd.f32 %v1642, %v3276
        %v3278 = vpop.f32.mrb[0].mxu0
        %v3279 = vadd.f32 %v1638, %v3278
        %v3280 = vpop.f32.mrb[0].mxu0
        %v3281 = vadd.f32 %v1642, %v3280
        %3282 = vmatprep.mubr.bf16.mxu0 0
        %3283 = vmatmul.mubr.bf16.gmra.mrb[0].mxu0 %v1535
        %v3284 = vpop.f32.mrb[0].mxu0
        %v3285 = vadd.f32 %v1638, %v3284
        %v3286 = vpop.f32.mrb[0].mxu0
        %v3287 = vadd.f32 %v1642, %v3286
        %v3288 = vpop.f32.mrb[0].mxu0
        %v3289 = vadd.f32 %v1638, %v3288
        %v3290 = vpop.f32.mrb[0].mxu0
        %v3291 = vadd.f32 %v1642, %v3290
        %3292 = vmatprep.mubr.bf16.mxu0 0
        %3293 = vmatmul.mubr.bf16.gmra.mrb[0].mxu0 %v1536
        %v3294 = vpop.f32.mrb[0].mxu0
        %v3295 = vadd.f32 %v1638, %v3294
        %v3296 = vpop.f32.mrb[0].mxu0
        %v3297 = vadd.f32 %v1642, %v3296
        %v3298 = vpop.f32.mrb[0].mxu0
        %v3299 = vadd.f32 %v1638, %v3298
        %v3300 = vpop.f32.mrb[0].mxu0
        %v3301 = vadd.f32 %v1642, %v3300
        %3302 = vmatprep.mubr.bf16.mxu0 0
        %3303 = vmatmul.mubr.bf16.gmra.mrb[0].mxu0 %v1537
        %v3304 = vpop.f32.mrb[0].mxu0
        %v3305 = vadd.f32 %v1638, %v3304
        %v3306 = vpop.f32.mrb[0].mxu0
        %v3307 = vadd.f32 %v1642, %v3306
        %v3308 = vpop.f32.mrb[0].mxu0
        %v3309 = vadd.f32 %v1638, %v3308
        %v3310 = vpop.f32.mrb[0].mxu0
        %v3311 = vadd.f32 %v1642, %v3310
        %3312 = vmatprep.mubr.bf16.mxu0 0
        %3313 = vmatmul.mubr.bf16.gmra.mrb[0].mxu0 %v1538
        %v3314 = vpop.f32.mrb[0].mxu0
        %v3315 = vadd.f32 %v1638, %v3314
        %v3316 = vpop.f32.mrb[0].mxu0
        %v3317 = vadd.f32 %v1642, %v3316
        %v3318 = vpop.f32.mrb[0].mxu0
        %v3319 = vadd.f32 %v1638, %v3318
        %v3320 = vpop.f32.mrb[0].mxu0
        %v3321 = vadd.f32 %v1642, %v3320
        %3322 = vmatprep.mubr.bf16.mxu0 0
        %3323 = vmatmul.mubr.bf16.gmra.mrb[0].mxu0 %v1539
        %v3324 = vpop.f32.mrb[0].mxu0
        %v3325 = vadd.f32 %v1638, %v3324
        %v3326 = vpop.f32.mrb[0].mxu0
        %v3327 = vadd.f32 %v1642, %v3326
        %v3328 = vpop.f32.mrb[0].mxu0
        %v3329 = vadd.f32 %v1638, %v3328
        %v3330 = vpop.f32.mrb[0].mxu0
        %v3331 = vadd.f32 %v1642, %v3330
        %3332 = vmatprep.mubr.bf16.mxu0 0
        %3333 = vmatmul.mubr.bf16.gmra.mrb[0].mxu0 %v1540
        %v3334 = vpop.f32.mrb[0].mxu0
        %v3335 = vadd.f32 %v1638, %v3334
        %v3336 = vpop.f32.mrb[0].mxu0
        %v3337 = vadd.f32 %v1642, %v3336
        %v3338 = vpop.f32.mrb[0].mxu0
        %v3339 = vadd.f32 %v1638, %v3338
        %v3340 = vpop.f32.mrb[0].mxu0
        %v3341 = vadd.f32 %v1642, %v3340
        %3342 = vmatprep.mubr.bf16.mxu0 0
        %3343 = vmatmul.mubr.bf16.gmra.mrb[0].mxu0 %v1541
        %v3344 = vpop.f32.mrb[0].mxu0
        %v3345 = vadd.f32 %v1638, %v3344
        %v3346 = vpop.f32.mrb[0].mxu0
        %v3347 = vadd.f32 %v1642, %v3346
        %v3348 = vpop.f32.mrb[0].mxu0
        %v3349 = vadd.f32 %v1638, %v3348
        %v3350 = vpop.f32.mrb[0].mxu0
        %v3351 = vadd.f32 %v1642, %v3350
        %3352 = vmatprep.mubr.bf16.mxu0 0
        %3353 = vmatmul.mubr.bf16.gmra.mrb[0].mxu0 %v1542
        %v3354 = vpop.f32.mrb[0].mxu0
        %v3355 = vadd.f32 %v1638, %v3354
        %v3356 = vpop.f32.mrb[0].mxu0
        %v3357 = vadd.f32 %v1642, %v3356
        %v3358 = vpop.f32.mrb[0].mxu0
        %v3359 = vadd.f32 %v1638, %v3358
        %v3360 = vpop.f32.mrb[0].mxu0
        %v3361 = vadd.f32 %v1642, %v3360
        %3362 = vmatprep.mubr.bf16.mxu0 0
        %3363 = vmatmul.mubr.bf16.gmra.mrb[0].mxu0 %v1543
        %v3364 = vpop.f32.mrb[0].mxu0
        %v3365 = vadd.f32 %v1638, %v3364
        %v3366 = vpop.f32.mrb[0].mxu0
        %v3367 = vadd.f32 %v1642, %v3366
        %v3368 = vpop.f32.mrb[0].mxu0
        %v3369 = vadd.f32 %v1638, %v3368
        %v3370 = vpop.f32.mrb[0].mxu0
        %v3371 = vadd.f32 %v1642, %v3370
        %3372 = vmatprep.mubr.bf16.mxu0 0
        %3373 = vmatmul.mubr.bf16.gmra.mrb[0].mxu0 %v1544
        %v3374 = vpop.f32.mrb[0].mxu0
        %v3375 = vadd.f32 %v1638, %v3374
        %v3376 = vpop.f32.mrb[0].mxu0
        %v3377 = vadd.f32 %v1642, %v3376
        %v3378 = vpop.f32.mrb[0].mxu0
        %v3379 = vadd.f32 %v1638, %v3378
        %v3380 = vpop.f32.mrb[0].mxu0
        %v3381 = vadd.f32 %v1642, %v3380
        %3382 = vdwg.mxu0
        %v3383 = vmax.f32 %v2006, %v2010
        %v3384 = vmax.f32 %v3383, %v2016
        %v3385 = vmax.f32 %v3384, %v2020
        %v3386 = vmax.f32 %v3385, %v2026
        %v3387 = vmax.f32 %v3386, %v2030
        %v3388 = vmax.f32 %v3387, %v2036
        %v3389 = vmax.f32 %v3388, %v2040
        %v3390 = vmax.f32 %v3389, %v2046
        %v3391 = vmax.f32 %v3390, %v2050
        %v3392 = vmax.f32 %v3391, %v2056
        %v3393 = vmax.f32 %v3392, %v2060
        %v3394 = vmax.f32 %v3393, %v2066
        %v3395 = vmax.f32 %v3394, %v2070
        %v3396 = vmax.f32 %v3395, %v2076
        %v3397 = vmax.f32 %v3396, %v2080
        %v3398 = vmax.f32 %v3397, %v2086
        %v3399 = vmax.f32 %v3398, %v2090
        %v3400 = vmax.f32 %v3399, %v2096
        %v3401 = vmax.f32 %v3400, %v2100
        %v3402 = vmax.f32 %v3401, %v2106
        %v3403 = vmax.f32 %v3402, %v2110
        %v3404 = vmax.f32 %v3403, %v2116
        %v3405 = vmax.f32 %v3404, %v2120
        %v3406 = vmax.f32 %v3405, %v2126
        %v3407 = vmax.f32 %v3406, %v2130
        %v3408 = vmax.f32 %v3407, %v2136
        %v3409 = vmax.f32 %v3408, %v2140
        %v3410 = vmax.f32 %v3409, %v2146
        %v3411 = vmax.f32 %v3410, %v2150
        %v3412 = vmax.f32 %v3411, %v2156
        %v3413 = vmax.f32 %v3412, %v2160
        %v3414 = vmax.f32 %v3413, %v2166
        %v3415 = vmax.f32 %v3414, %v2170
        %v3416 = vmax.f32 %v3415, %v2176
        %v3417 = vmax.f32 %v3416, %v2180
        %v3418 = vmax.f32 %v3417, %v2186
        %v3419 = vmax.f32 %v3418, %v2190
        %v3420 = vmax.f32 %v3419, %v2196
        %v3421 = vmax.f32 %v3420, %v2200
        %v3422 = vmax.f32 %v3421, %v2206
        %v3423 = vmax.f32 %v3422, %v2210
        %v3424 = vmax.f32 %v3423, %v2216
        %v3425 = vmax.f32 %v3424, %v2220
        %v3426 = vmax.f32 %v3425, %v2226
        %v3427 = vmax.f32 %v3426, %v2230
        %v3428 = vmax.f32 %v3427, %v2236
        %v3429 = vmax.f32 %v3428, %v2240
        %v3430 = vmax.f32 %v3429, %v2246
        %v3431 = vmax.f32 %v3430, %v2250
        %v3432 = vmax.f32 %v3431, %v2256
        %v3433 = vmax.f32 %v3432, %v2260
        %v3434 = vmax.f32 %v3433, %v2266
        %v3435 = vmax.f32 %v3434, %v2270
        %v3436 = vmax.f32 %v3435, %v2276
        %v3437 = vmax.f32 %v3436, %v2280
        %v3438 = vmax.f32 %v3437, %v2286
        %v3439 = vmax.f32 %v3438, %v2290
        %v3440 = vmax.f32 %v3439, %v2296
        %v3441 = vmax.f32 %v3440, %v2300
        %v3442 = vmax.f32 %v3441, %v2306
        %v3443 = vmax.f32 %v3442, %v2310
        %v3444 = vmax.f32 %v3443, %v2316
        %v3445 = vmax.f32 %v3444, %v2320
        %v3446 = vmax.f32 %v2008, %v2012
        %v3447 = vmax.f32 %v3446, %v2018
        %v3448 = vmax.f32 %v3447, %v2022
        %v3449 = vmax.f32 %v3448, %v2028
        %v3450 = vmax.f32 %v3449, %v2032
        %v3451 = vmax.f32 %v3450, %v2038
        %v3452 = vmax.f32 %v3451, %v2042
        %v3453 = vmax.f32 %v3452, %v2048
        %v3454 = vmax.f32 %v3453, %v2052
        %v3455 = vmax.f32 %v3454, %v2058
        %v3456 = vmax.f32 %v3455, %v2062
        %v3457 = vmax.f32 %v3456, %v2068
        %v3458 = vmax.f32 %v3457, %v2072
        %v3459 = vmax.f32 %v3458, %v2078
        %v3460 = vmax.f32 %v3459, %v2082
        %v3461 = vmax.f32 %v3460, %v2088
        %v3462 = vmax.f32 %v3461, %v2092
        %v3463 = vmax.f32 %v3462, %v2098
        %v3464 = vmax.f32 %v3463, %v2102
        %v3465 = vmax.f32 %v3464, %v2108
        %v3466 = vmax.f32 %v3465, %v2112
        %v3467 = vmax.f32 %v3466, %v2118
        %v3468 = vmax.f32 %v3467, %v2122
        %v3469 = vmax.f32 %v3468, %v2128
        %v3470 = vmax.f32 %v3469, %v2132
        %v3471 = vmax.f32 %v3470, %v2138
        %v3472 = vmax.f32 %v3471, %v2142
        %v3473 = vmax.f32 %v3472, %v2148
        %v3474 = vmax.f32 %v3473, %v2152
        %v3475 = vmax.f32 %v3474, %v2158
        %v3476 = vmax.f32 %v3475, %v2162
        %v3477 = vmax.f32 %v3476, %v2168
        %v3478 = vmax.f32 %v3477, %v2172
        %v3479 = vmax.f32 %v3478, %v2178
        %v3480 = vmax.f32 %v3479, %v2182
        %v3481 = vmax.f32 %v3480, %v2188
        %v3482 = vmax.f32 %v3481, %v2192
        %v3483 = vmax.f32 %v3482, %v2198
        %v3484 = vmax.f32 %v3483, %v2202
        %v3485 = vmax.f32 %v3484, %v2208
        %v3486 = vmax.f32 %v3485, %v2212
        %v3487 = vmax.f32 %v3486, %v2218
        %v3488 = vmax.f32 %v3487, %v2222
        %v3489 = vmax.f32 %v3488, %v2228
        %v3490 = vmax.f32 %v3489, %v2232
        %v3491 = vmax.f32 %v3490, %v2238
        %v3492 = vmax.f32 %v3491, %v2242
        %v3493 = vmax.f32 %v3492, %v2248
        %v3494 = vmax.f32 %v3493, %v2252
        %v3495 = vmax.f32 %v3494, %v2258
        %v3496 = vmax.f32 %v3495, %v2262
        %v3497 = vmax.f32 %v3496, %v2268
        %v3498 = vmax.f32 %v3497, %v2272
        %v3499 = vmax.f32 %v3498, %v2278
        %v3500 = vmax.f32 %v3499, %v2282
        %v3501 = vmax.f32 %v3500, %v2288
        %v3502 = vmax.f32 %v3501, %v2292
        %v3503 = vmax.f32 %v3502, %v2298
        %v3504 = vmax.f32 %v3503, %v2302
        %v3505 = vmax.f32 %v3504, %v2308
        %v3506 = vmax.f32 %v3505, %v2312
        %v3507 = vmax.f32 %v3506, %v2318
        %v3508 = vmax.f32 %v3507, %v2322
        %v3509 = vmax.f32 %v2359, %v2363
        %v3510 = vmax.f32 %v3509, %v2369
        %v3511 = vmax.f32 %v3510, %v2373
        %v3512 = vmax.f32 %v3511, %v2379
        %v3513 = vmax.f32 %v3512, %v2383
        %v3514 = vmax.f32 %v3513, %v2389
        %v3515 = vmax.f32 %v3514, %v2393
        %v3516 = vmax.f32 %v3515, %v2399
        %v3517 = vmax.f32 %v3516, %v2403
        %v3518 = vmax.f32 %v3517, %v2409
        %v3519 = vmax.f32 %v3518, %v2413
        %v3520 = vmax.f32 %v3519, %v2419
        %v3521 = vmax.f32 %v3520, %v2423
        %v3522 = vmax.f32 %v3521, %v2429
        %v3523 = vmax.f32 %v3522, %v2433
        %v3524 = vmax.f32 %v3523, %v2439
        %v3525 = vmax.f32 %v3524, %v2443
        %v3526 = vmax.f32 %v3525, %v2449
        %v3527 = vmax.f32 %v3526, %v2453
        %v3528 = vmax.f32 %v3527, %v2459
        %v3529 = vmax.f32 %v3528, %v2463
        %v3530 = vmax.f32 %v3529, %v2469
        %v3531 = vmax.f32 %v3530, %v2473
        %v3532 = vmax.f32 %v3531, %v2479
        %v3533 = vmax.f32 %v3532, %v2483
        %v3534 = vmax.f32 %v3533, %v2489
        %v3535 = vmax.f32 %v3534, %v2493
        %v3536 = vmax.f32 %v3535, %v2499
        %v3537 = vmax.f32 %v3536, %v2503
        %v3538 = vmax.f32 %v3537, %v2509
        %v3539 = vmax.f32 %v3538, %v2513
        %v3540 = vmax.f32 %v3539, %v2519
        %v3541 = vmax.f32 %v3540, %v2523
        %v3542 = vmax.f32 %v3541, %v2529
        %v3543 = vmax.f32 %v3542, %v2533
        %v3544 = vmax.f32 %v3543, %v2539
        %v3545 = vmax.f32 %v3544, %v2543
        %v3546 = vmax.f32 %v3545, %v2549
        %v3547 = vmax.f32 %v3546, %v2553
        %v3548 = vmax.f32 %v3547, %v2559
        %v3549 = vmax.f32 %v3548, %v2563
        %v3550 = vmax.f32 %v3549, %v2569
        %v3551 = vmax.f32 %v3550, %v2573
        %v3552 = vmax.f32 %v3551, %v2579
        %v3553 = vmax.f32 %v3552, %v2583
        %v3554 = vmax.f32 %v3553, %v2589
        %v3555 = vmax.f32 %v3554, %v2593
        %v3556 = vmax.f32 %v3555, %v2599
        %v3557 = vmax.f32 %v3556, %v2603
        %v3558 = vmax.f32 %v3557, %v2609
        %v3559 = vmax.f32 %v3558, %v2613
        %v3560 = vmax.f32 %v3559, %v2619
        %v3561 = vmax.f32 %v3560, %v2623
        %v3562 = vmax.f32 %v3561, %v2629
        %v3563 = vmax.f32 %v3562, %v2633
        %v3564 = vmax.f32 %v3563, %v2639
        %v3565 = vmax.f32 %v3564, %v2643
        %v3566 = vmax.f32 %v3565, %v2649
        %v3567 = vmax.f32 %v3566, %v2653
        %v3568 = vmax.f32 %v3567, %v2659
        %v3569 = vmax.f32 %v3568, %v2663
        %v3570 = vmax.f32 %v3569, %v2669
        %v3571 = vmax.f32 %v3570, %v2673
        %v3572 = vmax.f32 %v2361, %v2365
        %v3573 = vmax.f32 %v3572, %v2371
        %v3574 = vmax.f32 %v3573, %v2375
        %v3575 = vmax.f32 %v3574, %v2381
        %v3576 = vmax.f32 %v3575, %v2385
        %v3577 = vmax.f32 %v3576, %v2391
        %v3578 = vmax.f32 %v3577, %v2395
        %v3579 = vmax.f32 %v3578, %v2401
        %v3580 = vmax.f32 %v3579, %v2405
        %v3581 = vmax.f32 %v3580, %v2411
        %v3582 = vmax.f32 %v3581, %v2415
        %v3583 = vmax.f32 %v3582, %v2421
        %v3584 = vmax.f32 %v3583, %v2425
        %v3585 = vmax.f32 %v3584, %v2431
        %v3586 = vmax.f32 %v3585, %v2435
        %v3587 = vmax.f32 %v3586, %v2441
        %v3588 = vmax.f32 %v3587, %v2445
        %v3589 = vmax.f32 %v3588, %v2451
        %v3590 = vmax.f32 %v3589, %v2455
        %v3591 = vmax.f32 %v3590, %v2461
        %v3592 = vmax.f32 %v3591, %v2465
        %v3593 = vmax.f32 %v3592, %v2471
        %v3594 = vmax.f32 %v3593, %v2475
        %v3595 = vmax.f32 %v3594, %v2481
        %v3596 = vmax.f32 %v3595, %v2485
        %v3597 = vmax.f32 %v3596, %v2491
        %v3598 = vmax.f32 %v3597, %v2495
        %v3599 = vmax.f32 %v3598, %v2501
        %v3600 = vmax.f32 %v3599, %v2505
        %v3601 = vmax.f32 %v3600, %v2511
        %v3602 = vmax.f32 %v3601, %v2515
        %v3603 = vmax.f32 %v3602, %v2521
        %v3604 = vmax.f32 %v3603, %v2525
        %v3605 = vmax.f32 %v3604, %v2531
        %v3606 = vmax.f32 %v3605, %v2535
        %v3607 = vmax.f32 %v3606, %v2541
        %v3608 = vmax.f32 %v3607, %v2545
        %v3609 = vmax.f32 %v3608, %v2551
        %v3610 = vmax.f32 %v3609, %v2555
        %v3611 = vmax.f32 %v3610, %v2561
        %v3612 = vmax.f32 %v3611, %v2565
        %v3613 = vmax.f32 %v3612, %v2571
        %v3614 = vmax.f32 %v3613, %v2575
        %v3615 = vmax.f32 %v3614, %v2581
        %v3616 = vmax.f32 %v3615, %v2585
        %v3617 = vmax.f32 %v3616, %v2591
        %v3618 = vmax.f32 %v3617, %v2595
        %v3619 = vmax.f32 %v3618, %v2601
        %v3620 = vmax.f32 %v3619, %v2605
        %v3621 = vmax.f32 %v3620, %v2611
        %v3622 = vmax.f32 %v3621, %v2615
        %v3623 = vmax.f32 %v3622, %v2621
        %v3624 = vmax.f32 %v3623, %v2625
        %v3625 = vmax.f32 %v3624, %v2631
        %v3626 = vmax.f32 %v3625, %v2635
        %v3627 = vmax.f32 %v3626, %v2641
        %v3628 = vmax.f32 %v3627, %v2645
        %v3629 = vmax.f32 %v3628, %v2651
        %v3630 = vmax.f32 %v3629, %v2655
        %v3631 = vmax.f32 %v3630, %v2661
        %v3632 = vmax.f32 %v3631, %v2665
        %v3633 = vmax.f32 %v3632, %v2671
        %v3634 = vmax.f32 %v3633, %v2675
        %v3635 = vmax.f32 %v2712, %v2716
        %v3636 = vmax.f32 %v3635, %v2722
        %v3637 = vmax.f32 %v3636, %v2726
        %v3638 = vmax.f32 %v3637, %v2732
        %v3639 = vmax.f32 %v3638, %v2736
        %v3640 = vmax.f32 %v3639, %v2742
        %v3641 = vmax.f32 %v3640, %v2746
        %v3642 = vmax.f32 %v3641, %v2752
        %v3643 = vmax.f32 %v3642, %v2756
        %v3644 = vmax.f32 %v3643, %v2762
        %v3645 = vmax.f32 %v3644, %v2766
        %v3646 = vmax.f32 %v3645, %v2772
        %v3647 = vmax.f32 %v3646, %v2776
        %v3648 = vmax.f32 %v3647, %v2782
        %v3649 = vmax.f32 %v3648, %v2786
        %v3650 = vmax.f32 %v3649, %v2792
        %v3651 = vmax.f32 %v3650, %v2796
        %v3652 = vmax.f32 %v3651, %v2802
        %v3653 = vmax.f32 %v3652, %v2806
        %v3654 = vmax.f32 %v3653, %v2812
        %v3655 = vmax.f32 %v3654, %v2816
        %v3656 = vmax.f32 %v3655, %v2822
        %v3657 = vmax.f32 %v3656, %v2826
        %v3658 = vmax.f32 %v3657, %v2832
        %v3659 = vmax.f32 %v3658, %v2836
        %v3660 = vmax.f32 %v3659, %v2842
        %v3661 = vmax.f32 %v3660, %v2846
        %v3662 = vmax.f32 %v3661, %v2852
        %v3663 = vmax.f32 %v3662, %v2856
        %v3664 = vmax.f32 %v3663, %v2862
        %v3665 = vmax.f32 %v3664, %v2866
        %v3666 = vmax.f32 %v3665, %v2872
        %v3667 = vmax.f32 %v3666, %v2876
        %v3668 = vmax.f32 %v3667, %v2882
        %v3669 = vmax.f32 %v3668, %v2886
        %v3670 = vmax.f32 %v3669, %v2892
        %v3671 = vmax.f32 %v3670, %v2896
        %v3672 = vmax.f32 %v3671, %v2902
        %v3673 = vmax.f32 %v3672, %v2906
        %v3674 = vmax.f32 %v3673, %v2912
        %v3675 = vmax.f32 %v3674, %v2916
        %v3676 = vmax.f32 %v3675, %v2922
        %v3677 = vmax.f32 %v3676, %v2926
        %v3678 = vmax.f32 %v3677, %v2932
        %v3679 = vmax.f32 %v3678, %v2936
        %v3680 = vmax.f32 %v3679, %v2942
        %v3681 = vmax.f32 %v3680, %v2946
        %v3682 = vmax.f32 %v3681, %v2952
        %v3683 = vmax.f32 %v3682, %v2956
        %v3684 = vmax.f32 %v3683, %v2962
        %v3685 = vmax.f32 %v3684, %v2966
        %v3686 = vmax.f32 %v3685, %v2972
        %v3687 = vmax.f32 %v3686, %v2976
        %v3688 = vmax.f32 %v3687, %v2982
        %v3689 = vmax.f32 %v3688, %v2986
        %v3690 = vmax.f32 %v3689, %v2992
        %v3691 = vmax.f32 %v3690, %v2996
        %v3692 = vmax.f32 %v3691, %v3002
        %v3693 = vmax.f32 %v3692, %v3006
        %v3694 = vmax.f32 %v3693, %v3012
        %v3695 = vmax.f32 %v3694, %v3016
        %v3696 = vmax.f32 %v3695, %v3022
        %v3697 = vmax.f32 %v3696, %v3026
        %v3698 = vmax.f32 %v2714, %v2718
        %v3699 = vmax.f32 %v3698, %v2724
        %v3700 = vmax.f32 %v3699, %v2728
        %v3701 = vmax.f32 %v3700, %v2734
        %v3702 = vmax.f32 %v3701, %v2738
        %v3703 = vmax.f32 %v3702, %v2744
        %v3704 = vmax.f32 %v3703, %v2748
        %v3705 = vmax.f32 %v3704, %v2754
        %v3706 = vmax.f32 %v3705, %v2758
        %v3707 = vmax.f32 %v3706, %v2764
        %v3708 = vmax.f32 %v3707, %v2768
        %v3709 = vmax.f32 %v3708, %v2774
        %v3710 = vmax.f32 %v3709, %v2778
        %v3711 = vmax.f32 %v3710, %v2784
        %v3712 = vmax.f32 %v3711, %v2788
        %v3713 = vmax.f32 %v3712, %v2794
        %v3714 = vmax.f32 %v3713, %v2798
        %v3715 = vmax.f32 %v3714, %v2804
        %v3716 = vmax.f32 %v3715, %v2808
        %v3717 = vmax.f32 %v3716, %v2814
        %v3718 = vmax.f32 %v3717, %v2818
        %v3719 = vmax.f32 %v3718, %v2824
        %v3720 = vmax.f32 %v3719, %v2828
        %v3721 = vmax.f32 %v3720, %v2834
        %v3722 = vmax.f32 %v3721, %v2838
        %v3723 = vmax.f32 %v3722, %v2844
        %v3724 = vmax.f32 %v3723, %v2848
        %v3725 = vmax.f32 %v3724, %v2854
        %v3726 = vmax.f32 %v3725, %v2858
        %v3727 = vmax.f32 %v3726, %v2864
        %v3728 = vmax.f32 %v3727, %v2868
        %v3729 = vmax.f32 %v3728, %v2874
        %v3730 = vmax.f32 %v3729, %v2878
        %v3731 = vmax.f32 %v3730, %v2884
        %v3732 = vmax.f32 %v3731, %v2888
        %v3733 = vmax.f32 %v3732, %v2894
        %v3734 = vmax.f32 %v3733, %v2898
        %v3735 = vmax.f32 %v3734, %v2904
        %v3736 = vmax.f32 %v3735, %v2908
        %v3737 = vmax.f32 %v3736, %v2914
        %v3738 = vmax.f32 %v3737, %v2918
        %v3739 = vmax.f32 %v3738, %v2924
        %v3740 = vmax.f32 %v3739, %v2928
        %v3741 = vmax.f32 %v3740, %v2934
        %v3742 = vmax.f32 %v3741, %v2938
        %v3743 = vmax.f32 %v3742, %v2944
        %v3744 = vmax.f32 %v3743, %v2948
        %v3745 = vmax.f32 %v3744, %v2954
        %v3746 = vmax.f32 %v3745, %v2958
        %v3747 = vmax.f32 %v3746, %v2964
        %v3748 = vmax.f32 %v3747, %v2968
        %v3749 = vmax.f32 %v3748, %v2974
        %v3750 = vmax.f32 %v3749, %v2978
        %v3751 = vmax.f32 %v3750, %v2984
        %v3752 = vmax.f32 %v3751, %v2988
        %v3753 = vmax.f32 %v3752, %v2994
        %v3754 = vmax.f32 %v3753, %v2998
        %v3755 = vmax.f32 %v3754, %v3004
        %v3756 = vmax.f32 %v3755, %v3008
        %v3757 = vmax.f32 %v3756, %v3014
        %v3758 = vmax.f32 %v3757, %v3018
        %v3759 = vmax.f32 %v3758, %v3024
        %v3760 = vmax.f32 %v3759, %v3028
        %v3761 = vmax.f32 %v3065, %v3069
        %v3762 = vmax.f32 %v3761, %v3075
        %v3763 = vmax.f32 %v3762, %v3079
        %v3764 = vmax.f32 %v3763, %v3085
        %v3765 = vmax.f32 %v3764, %v3089
        %v3766 = vmax.f32 %v3765, %v3095
        %v3767 = vmax.f32 %v3766, %v3099
        %v3768 = vmax.f32 %v3767, %v3105
        %v3769 = vmax.f32 %v3768, %v3109
        %v3770 = vmax.f32 %v3769, %v3115
        %v3771 = vmax.f32 %v3770, %v3119
        %v3772 = vmax.f32 %v3771, %v3125
        %v3773 = vmax.f32 %v3772, %v3129
        %v3774 = vmax.f32 %v3773, %v3135
        %v3775 = vmax.f32 %v3774, %v3139
        %v3776 = vmax.f32 %v3775, %v3145
        %v3777 = vmax.f32 %v3776, %v3149
        %v3778 = vmax.f32 %v3777, %v3155
        %v3779 = vmax.f32 %v3778, %v3159
        %v3780 = vmax.f32 %v3779, %v3165
        %v3781 = vmax.f32 %v3780, %v3169
        %v3782 = vmax.f32 %v3781, %v3175
        %v3783 = vmax.f32 %v3782, %v3179
        %v3784 = vmax.f32 %v3783, %v3185
        %v3785 = vmax.f32 %v3784, %v3189
        %v3786 = vmax.f32 %v3785, %v3195
        %v3787 = vmax.f32 %v3786, %v3199
        %v3788 = vmax.f32 %v3787, %v3205
        %v3789 = vmax.f32 %v3788, %v3209
        %v3790 = vmax.f32 %v3789, %v3215
        %v3791 = vmax.f32 %v3790, %v3219
        %v3792 = vmax.f32 %v3791, %v3225
        %v3793 = vmax.f32 %v3792, %v3229
        %v3794 = vmax.f32 %v3793, %v3235
        %v3795 = vmax.f32 %v3794, %v3239
        %v3796 = vmax.f32 %v3795, %v3245
        %v3797 = vmax.f32 %v3796, %v3249
        %v3798 = vmax.f32 %v3797, %v3255
        %v3799 = vmax.f32 %v3798, %v3259
        %v3800 = vmax.f32 %v3799, %v3265
        %v3801 = vmax.f32 %v3800, %v3269
        %v3802 = vmax.f32 %v3801, %v3275
        %v3803 = vmax.f32 %v3802, %v3279
        %v3804 = vmax.f32 %v3803, %v3285
        %v3805 = vmax.f32 %v3804, %v3289
        %v3806 = vmax.f32 %v3805, %v3295
        %v3807 = vmax.f32 %v3806, %v3299
        %v3808 = vmax.f32 %v3807, %v3305
        %v3809 = vmax.f32 %v3808, %v3309
        %v3810 = vmax.f32 %v3809, %v3315
        %v3811 = vmax.f32 %v3810, %v3319
        %v3812 = vmax.f32 %v3811, %v3325
        %v3813 = vmax.f32 %v3812, %v3329
        %v3814 = vmax.f32 %v3813, %v3335
        %v3815 = vmax.f32 %v3814, %v3339
        %v3816 = vmax.f32 %v3815, %v3345
        %v3817 = vmax.f32 %v3816, %v3349
        %v3818 = vmax.f32 %v3817, %v3355
        %v3819 = vmax.f32 %v3818, %v3359
        %v3820 = vmax.f32 %v3819, %v3365
        %v3821 = vmax.f32 %v3820, %v3369
        %v3822 = vmax.f32 %v3821, %v3375
        %v3823 = vmax.f32 %v3822, %v3379
        %v3824 = vmax.f32 %v3067, %v3071
        %v3825 = vmax.f32 %v3824, %v3077
        %v3826 = vmax.f32 %v3825, %v3081
        %v3827 = vmax.f32 %v3826, %v3087
        %v3828 = vmax.f32 %v3827, %v3091
        %v3829 = vmax.f32 %v3828, %v3097
        %v3830 = vmax.f32 %v3829, %v3101
        %v3831 = vmax.f32 %v3830, %v3107
        %v3832 = vmax.f32 %v3831, %v3111
        %v3833 = vmax.f32 %v3832, %v3117
        %v3834 = vmax.f32 %v3833, %v3121
        %v3835 = vmax.f32 %v3834, %v3127
        %v3836 = vmax.f32 %v3835, %v3131
        %v3837 = vmax.f32 %v3836, %v3137
        %v3838 = vmax.f32 %v3837, %v3141
        %v3839 = vmax.f32 %v3838, %v3147
        %v3840 = vmax.f32 %v3839, %v3151
        %v3841 = vmax.f32 %v3840, %v3157
        %v3842 = vmax.f32 %v3841, %v3161
        %v3843 = vmax.f32 %v3842, %v3167
        %v3844 = vmax.f32 %v3843, %v3171
        %v3845 = vmax.f32 %v3844, %v3177
        %v3846 = vmax.f32 %v3845, %v3181
        %v3847 = vmax.f32 %v3846, %v3187
        %v3848 = vmax.f32 %v3847, %v3191
        %v3849 = vmax.f32 %v3848, %v3197
        %v3850 = vmax.f32 %v3849, %v3201
        %v3851 = vmax.f32 %v3850, %v3207
        %v3852 = vmax.f32 %v3851, %v3211
        %v3853 = vmax.f32 %v3852, %v3217
        %v3854 = vmax.f32 %v3853, %v3221
        %v3855 = vmax.f32 %v3854, %v3227
        %v3856 = vmax.f32 %v3855, %v3231
        %v3857 = vmax.f32 %v3856, %v3237
        %v3858 = vmax.f32 %v3857, %v3241
        %v3859 = vmax.f32 %v3858, %v3247
        %v3860 = vmax.f32 %v3859, %v3251
        %v3861 = vmax.f32 %v3860, %v3257
        %v3862 = vmax.f32 %v3861, %v3261
        %v3863 = vmax.f32 %v3862, %v3267
        %v3864 = vmax.f32 %v3863, %v3271
        %v3865 = vmax.f32 %v3864, %v3277
        %v3866 = vmax.f32 %v3865, %v3281
        %v3867 = vmax.f32 %v3866, %v3287
        %v3868 = vmax.f32 %v3867, %v3291
        %v3869 = vmax.f32 %v3868, %v3297
        %v3870 = vmax.f32 %v3869, %v3301
        %v3871 = vmax.f32 %v3870, %v3307
        %v3872 = vmax.f32 %v3871, %v3311
        %v3873 = vmax.f32 %v3872, %v3317
        %v3874 = vmax.f32 %v3873, %v3321
        %v3875 = vmax.f32 %v3874, %v3327
        %v3876 = vmax.f32 %v3875, %v3331
        %v3877 = vmax.f32 %v3876, %v3337
        %v3878 = vmax.f32 %v3877, %v3341
        %v3879 = vmax.f32 %v3878, %v3347
        %v3880 = vmax.f32 %v3879, %v3351
        %v3881 = vmax.f32 %v3880, %v3357
        %v3882 = vmax.f32 %v3881, %v3361
        %v3883 = vmax.f32 %v3882, %v3367
        %v3884 = vmax.f32 %v3883, %v3371
        %v3885 = vmax.f32 %v3884, %v3377
        %v3886 = vmax.f32 %v3885, %v3381
        %p3887 = scmp.eq.s32.totalorder %s26, 0
        // Predicated region
        $region49: #{tpu_custom_call.1} parent=47 // pred_check
          %p3888 = pneg %p3887
        $region50: #{tpu_custom_call.1} parent=47 // pred_check_branch
          %3890 = sbr.rel (%p3888) target = $region52
        $region51: #{tpu_custom_call.1} parent=47 // pred_region
          %3891 = vst [vmem:[#allocation2] sm:$0xff] -inf
          %3892 = vst [vmem:[#allocation2 + $0x8] sm:$0xff] -inf
          %3893 = vst [vmem:[#allocation2 + $0x10] sm:$0xff] -inf
          %3894 = vst [vmem:[#allocation2 + $0x18] sm:$0xff] -inf
          %3895 = vst [vmem:[#allocation2 + $0x20] sm:$0xff] -inf
          %3896 = vst [vmem:[#allocation2 + $0x28] sm:$0xff] -inf
          %3897 = vst [vmem:[#allocation2 + $0x30] sm:$0xff] -inf
          %3898 = vst [vmem:[#allocation2 + $0x38] sm:$0xff] -inf
        $region52: #{tpu_custom_call.1} parent=47 // pred_fallthru
          _
        %v3899 = vld [vmem:[#allocation2] sm:$0xff]
        %v3900 = vld [vmem:[#allocation2 + $0x8] sm:$0xff]
        %v3901 = vld [vmem:[#allocation2 + $0x10] sm:$0xff]
        %v3902 = vld [vmem:[#allocation2 + $0x18] sm:$0xff]
        %v3903 = vld [vmem:[#allocation2 + $0x20] sm:$0xff]
        %v3904 = vld [vmem:[#allocation2 + $0x28] sm:$0xff]
        %v3905 = vld [vmem:[#allocation2 + $0x30] sm:$0xff]
        %v3906 = vld [vmem:[#allocation2 + $0x38] sm:$0xff]
        %v3907 = vmax.f32 %v3899, %v3445
        %v3908 = vmax.f32 %v3900, %v3508
        %v3909 = vmax.f32 %v3901, %v3571
        %v3910 = vmax.f32 %v3902, %v3634
        %v3911 = vmax.f32 %v3903, %v3697
        %v3912 = vmax.f32 %v3904, %v3760
        %v3913 = vmax.f32 %v3905, %v3823
        %v3914 = vmax.f32 %v3906, %v3886
        %3915 = vst [vmem:[#allocation2] sm:$0xff] %v3907
        %3916 = vst [vmem:[#allocation2 + $0x8] sm:$0xff] %v3908
        %3917 = vst [vmem:[#allocation2 + $0x10] sm:$0xff] %v3909
        %3918 = vst [vmem:[#allocation2 + $0x18] sm:$0xff] %v3910
        %3919 = vst [vmem:[#allocation2 + $0x20] sm:$0xff] %v3911
        %3920 = vst [vmem:[#allocation2 + $0x28] sm:$0xff] %v3912
        %3921 = vst [vmem:[#allocation2 + $0x30] sm:$0xff] %v3913
        %3922 = vst [vmem:[#allocation2 + $0x38] sm:$0xff] %v3914
        // Predicated region
        $region53: #{tpu_custom_call.1} parent=47 // pred_check
          %p3923 = pneg %p3887
        $region54: #{tpu_custom_call.1} parent=47 // pred_check_branch
          %3925 = sbr.rel (%p3923) target = $region56
        $region55: #{tpu_custom_call.1} parent=47 // pred_region
          %v3926 = vld [vmem:[#allocation2] sm:$0xff]
          %v3927 = vld [vmem:[#allocation2 + $0x8] sm:$0xff]
          %v3928 = vld [vmem:[#allocation2 + $0x10] sm:$0xff]
          %v3929 = vld [vmem:[#allocation2 + $0x18] sm:$0xff]
          %v3930 = vld [vmem:[#allocation2 + $0x20] sm:$0xff]
          %v3931 = vld [vmem:[#allocation2 + $0x28] sm:$0xff]
          %v3932 = vld [vmem:[#allocation2 + $0x30] sm:$0xff]
          %v3933 = vld [vmem:[#allocation2 + $0x38] sm:$0xff]
          %v3934 = vrot.slane %v3926, 4
          %v3935 = vmax.f32 %v3926, %v3934
          %v3936 = vrot.slane %v3935, 2
          %v3937 = vmax.f32 %v3935, %v3936
          %v3938 = vrot.slane %v3937, 1
          %v3939 = vmax.f32 %v3937, %v3938
          %v3940 = vrot.slane %v3927, 4
          %v3941 = vmax.f32 %v3927, %v3940
          %v3942 = vrot.slane %v3941, 2
          %v3943 = vmax.f32 %v3941, %v3942
          %v3944 = vrot.slane %v3943, 1
          %v3945 = vmax.f32 %v3943, %v3944
          %v3946 = vrot.slane %v3928, 4
          %v3947 = vmax.f32 %v3928, %v3946
          %v3948 = vrot.slane %v3947, 2
          %v3949 = vmax.f32 %v3947, %v3948
          %v3950 = vrot.slane %v3949, 1
          %v3951 = vmax.f32 %v3949, %v3950
          %v3952 = vrot.slane %v3929, 4
          %v3953 = vmax.f32 %v3929, %v3952
          %v3954 = vrot.slane %v3953, 2
          %v3955 = vmax.f32 %v3953, %v3954
          %v3956 = vrot.slane %v3955, 1
          %v3957 = vmax.f32 %v3955, %v3956
          %v3958 = vrot.slane %v3930, 4
          %v3959 = vmax.f32 %v3930, %v3958
          %v3960 = vrot.slane %v3959, 2
          %v3961 = vmax.f32 %v3959, %v3960
          %v3962 = vrot.slane %v3961, 1
          %v3963 = vmax.f32 %v3961, %v3962
          %v3964 = vrot.slane %v3931, 4
          %v3965 = vmax.f32 %v3931, %v3964
          %v3966 = vrot.slane %v3965, 2
          %v3967 = vmax.f32 %v3965, %v3966
          %v3968 = vrot.slane %v3967, 1
          %v3969 = vmax.f32 %v3967, %v3968
          %v3970 = vrot.slane %v3932, 4
          %v3971 = vmax.f32 %v3932, %v3970
          %v3972 = vrot.slane %v3971, 2
          %v3973 = vmax.f32 %v3971, %v3972
          %v3974 = vrot.slane %v3973, 1
          %v3975 = vmax.f32 %v3973, %v3974
          %v3976 = vrot.slane %v3933, 4
          %v3977 = vmax.f32 %v3933, %v3976
          %v3978 = vrot.slane %v3977, 2
          %v3979 = vmax.f32 %v3977, %v3978
          %v3980 = vrot.slane %v3979, 1
          %v3981 = vmax.f32 %v3979, %v3980
          %v3990 = vcombine.low %v3939, %v3945
          %v3991 = vcombine.low %v3951, %v3957
          %v3992 = vcombine.low %v3963, %v3969
          %v3993 = vcombine.low %v3975, %v3981
          %v3995 = vunpack.c.l.s4 1966171168
          %v3996 = vunpack.c.0.s8 %v3995
          %v3997 = vlaneseq
          %v3998 = vshrl.u32 %v3997, 7
          %v3999 = vsub.s32 %v3996, %v3998
          %v4000 = vrot.slane %v3990, %v3999
          %v4002 = vunpack.c.l.s4 1966171168
          %v4003 = vunpack.c.0.s8 %v4002
          %v4004 = vlaneseq
          %v4005 = vshrl.u32 %v4004, 7
          %v4006 = vsub.s32 %v4003, %v4005
          %v4007 = vrot.slane %v3991, %v4006
          %v4009 = vunpack.c.l.s4 1966171168
          %v4010 = vunpack.c.0.s8 %v4009
          %v4011 = vlaneseq
          %v4012 = vshrl.u32 %v4011, 7
          %v4013 = vsub.s32 %v4010, %v4012
          %v4014 = vrot.slane %v3992, %v4013
          %v4016 = vunpack.c.l.s4 1966171168
          %v4017 = vunpack.c.0.s8 %v4016
          %v4018 = vlaneseq
          %v4019 = vshrl.u32 %v4018, 7
          %v4020 = vsub.s32 %v4017, %v4019
          %v4021 = vrot.slane %v3993, %v4020
          %v4022 = vcombine.low %v4000, %v4007
          %v4023 = vcombine.low %v4014, %v4021
          %v4025 = vunpack.c.l.s4 1966171168
          %v4026 = vunpack.c.0.s8 %v4025
          %v4027 = vlaneseq
          %v4028 = vshrl.u32 %v4027, 7
          %v4029 = vsub.s32 %v4026, %v4028
          %v4030 = vrot.slane %v4022, %v4029
          %v4032 = vunpack.c.l.s4 1966171168
          %v4033 = vunpack.c.0.s8 %v4032
          %v4034 = vlaneseq
          %v4035 = vshrl.u32 %v4034, 7
          %v4036 = vsub.s32 %v4033, %v4035
          %v4037 = vrot.slane %v4023, %v4036
          %v4038 = vcombine.low %v4030, %v4037
          %4040 = vst [vmem:[%s294] sm:$0xff] %v4038
        $region56: #{tpu_custom_call.1} parent=47 // pred_fallthru
          _
        %s4041 = sand.u32 %s195, 1
        %s4042 = scalar_lea.sflag [#allocation4], %s4041
        %s4043 = sand.u32 %s195, 1
        %s4044 = smul.addr %s4043, 8
        %s4045 = scalar_lea.vmem [#allocation3], %s4044
        // Predicated region
        $region57: #{tpu_custom_call.1} parent=47 // pred_check
          %p4046 = pneg %p205
        $region58: #{tpu_custom_call.1} parent=47 // pred_check_branch
          %4048 = sbr.rel (%p4046) target = $region60
        $region59: #{tpu_custom_call.1} parent=47 // pred_region
          %s4050 = ssub.s32 128, 128
          %4051 = vsyncadd %s4042, %s4050
          %s4052 = smul.addr %s25, 8
          %s4053 = smul.addr %s4052, 16
          %s4054 = scalar_lea.hbm %s7, %s4053
          %s4056 = sshll.u32 %s4045, 4
          %s4057 = int_to_ptr.vmem [resolvable:$true] %s4056
          %4059 = dma.vmem_to_hbm [thread:$0]  %s4057, 128, %s4054, %s4042
        $region60: #{tpu_custom_call.1} parent=47 // pred_fallthru
          _
      $region48: #{tpu_custom_call.1} parent=5 // pred_fallthru
        _
      %p4060 = scmp.le.s32.totalorder 2, %s16
      // Predicated region
      $region61: #{tpu_custom_call.1} parent=5 // pred_check
        %p4061 = pneg %p4060
      $region62: #{tpu_custom_call.1} parent=5 // pred_check_branch
        %4063 = sbr.rel (%p4061) target = $region64
      $region63: #{tpu_custom_call.1} parent=5 // pred_region
        %s4064 = ssub.s32 %s16, 2
        // Predicated region
        $region65: #{tpu_custom_call.1} parent=63 // pred_check
          %p4065 = pneg %p211
        $region66: #{tpu_custom_call.1} parent=63 // pred_check_branch
          %4067 = sbr.rel (%p4065) target = $region68
        $region67: #{tpu_custom_call.1} parent=63 // pred_region
          %s4068 = sand.u32 %s196, 1
          %s4069 = scalar_lea.sflag [#allocation4], %s4068
          %s4070 = sand.u32 %s196, 1
          %s4071 = smul.addr %s4070, 8
          %s4072 = scalar_lea.vmem [#allocation3], %s4071
          %4073 = dma.done %s4069, 128
        $region68: #{tpu_custom_call.1} parent=63 // pred_fallthru
          _
      $region64: #{tpu_custom_call.1} parent=5 // pred_fallthru
        _
    $region6: #{tpu_custom_call.1} parent=1 // loop_footer
      %s20 = sadd.s32 1, %s16
    $region7: #{tpu_custom_call.1} parent=1 // loop_footer_branch
      %15 = sbr.rel target = $region3
    $region8: #{tpu_custom_call.1} parent=1 // loop_exit
      _
    %4074 = vsyncpa [#allocation4], 1
    %s4075 = scalar_lea.sflag [#allocation4], 1
    %4076 = vsyncpa %s4075, 1

</llo_original>
